<compile_context>
chip_gen: v6e
topology: v6e:2x2x1
jax: 0.10.0
libtpu: 0.0.40
codegen_flags: <defaults>
</compile_context>

<pallas_src>
import jax
import jax.numpy as jnp
from jax import lax
from jax.experimental import pallas as pl
from jax.experimental.pallas import tpu as pltpu

BN_EPS = 1e-5
TILE_M_MAX = 512                    # safe on v5e/v6e/v7x VMEM budgets
VMEM_LIMIT_BYTES = 32 * 1024 * 1024  # explicit scoped-VMEM limit


def _round_up(x, m):
    return (x + m - 1) // m * m


# ----------------------------- Pallas kernels ----------------------------- #

def matmul_stats_kernel(p_ref, w_ref, acc_ref, stats_ref):
    """Conv-as-matmul (bf16 MXU, f32 accum) + per-tile BN partial stats.

    p_ref:     (TM, Kp)  bf16 im2col patch tile (zero-padded rows/cols)
    w_ref:     (Kp, C)   bf16 reshaped conv weight (zero-padded rows)
    acc_ref:   (TM, C)   f32 conv output tile
    stats_ref: (1, 2, C) f32 per-tile [sum, sum_of_squares] over tile rows
    """
    acc = jnp.dot(p_ref[...], w_ref[...], preferred_element_type=jnp.float32)
    acc_ref[...] = acc
    stats_ref[0, 0:1, :] = jnp.sum(acc, axis=0, keepdims=True)
    stats_ref[0, 1:2, :] = jnp.sum(acc * acc, axis=0, keepdims=True)


def norm_relu_kernel(acc_ref, scale_ref, shift_ref, o_ref):
    """y = acc*scale + shift (precomputed per-channel BN affine), then ReLU."""
    y = acc_ref[...] * scale_ref[...] + shift_ref[...]
    o_ref[...] = jnp.maximum(y, 0.0).astype(o_ref.dtype)


# ------------------------------ JAX glue ----------------------------------- #

def _im2col(x, ks, stride, padding):
    """x: (N, H, W, C) -> (N*Ho*Wo, ks*ks*C) patches.  Plain-JAX glue.

    # TODO(synk): for the 3x3 layers, replace the materialized im2col with an
    # in-kernel 9-shifted-matmul over halo'd NHWC tiles to kill the ks^2 HBM
    # blow-up (perf-only; semantics identical).
    """
    N, H, W, C = x.shape
    xp = jnp.pad(x, ((0, 0), (padding, padding), (padding, padding), (0, 0)))
    Ho = (H + 2 * padding - ks) // stride + 1
    Wo = (W + 2 * padding - ks) // stride + 1
    cols = []
    for kh in range(ks):
        for kw in range(ks):
            cols.append(xp[:, kh:kh + stride * Ho:stride,
                           kw:kw + stride * Wo:stride, :])
    patches = jnp.stack(cols, axis=3)            # (N, Ho, Wo, ks*ks, C)
    return patches.reshape(N * Ho * Wo, ks * ks * C), Ho, Wo


def conv_bn_relu(x_nhwc, w_hwio, gamma, beta, *, ks, stride, padding,
                 out_dtype=jnp.float32):
    N = x_nhwc.shape[0]
    Cout = w_hwio.shape[-1]

    # bf16 patches halve the (expanded) im2col HBM traffic; MXU is bf16-native.
    patches, Ho, Wo = _im2col(x_nhwc.astype(jnp.bfloat16), ks, stride, padding)
    M, K = patches.shape

    tm = min(TILE_M_MAX, _round_up(M, 16))
    m_pad = _round_up(M, tm)
    k_pad = _round_up(K, 128)     # lane-aligned contraction dim
    num_tiles = m_pad // tm

    # Zero padding: padded K columns hit zero weight rows; padded M rows are
    # all-zero patches -> zero conv rows -> contribute nothing to sum/sumsq.
    patches_p = jnp.pad(patches, ((0, m_pad - M), (0, k_pad - K)))
    w2d = jnp.pad(w_hwio.astype(jnp.bfloat16).reshape(K, Cout),
                  ((0, k_pad - K), (0, 0)))

    mm_cost = pl.CostEstimate(
        flops=2 * m_pad * k_pad * Cout,
        transcendentals=0,
        bytes_accessed=(m_pad * k_pad * 2 + k_pad * Cout * 2
                        + m_pad * Cout * 4 + num_tiles * 2 * Cout * 4),
    )
    acc, stats = pl.pallas_call(
        matmul_stats_kernel,
        grid=(num_tiles,),
        in_specs=[
            pl.BlockSpec((tm, k_pad), lambda i: (i, 0)),
            pl.BlockSpec((k_pad, Cout), lambda i: (0, 0)),   # grid-invariant
        ],
        out_specs=[
            pl.BlockSpec((tm, Cout), lambda i: (i, 0)),
            pl.BlockSpec((1, 2, Cout), lambda i: (i, 0, 0)),  # per-tile slot
        ],
        out_shape=[
            jax.ShapeDtypeStruct((m_pad, Cout), jnp.float32),
            jax.ShapeDtypeStruct((num_tiles, 2, Cout), jnp.float32),
        ],
        compiler_params=pltpu.CompilerParams(
            dimension_semantics=("parallel",),
            vmem_limit_bytes=VMEM_LIMIT_BYTES),
        cost_estimate=mm_cost,
    )(patches_p, w2d)

    # Global training-mode BatchNorm stats (biased variance) in f32, then fold
    # gamma/beta/mean/var into a single per-channel scale/shift (2 VPU ops/elt).
    totals = jnp.sum(stats, axis=0)                       # (2, Cout)
    mean = totals[0] / M
    var = jnp.maximum(totals[1] / M - mean * mean, 0.0)
    scale = gamma * lax.rsqrt(var + BN_EPS)
    shift = beta - mean * scale

    out_itemsize = jnp.dtype(out_dtype).itemsize
    nr_cost = pl.CostEstimate(
        flops=2 * m_pad * Cout,
        transcendentals=0,
        bytes_accessed=(m_pad * Cout * 4 + 2 * Cout * 4
                        + m_pad * Cout * out_itemsize),
    )
    out = pl.pallas_call(
        norm_relu_kernel,
        grid=(num_tiles,),
        in_specs=[
            pl.BlockSpec((tm, Cout), lambda i: (i, 0)),
            pl.BlockSpec((1, Cout), lambda i: (0, 0)),
            pl.BlockSpec((1, Cout), lambda i: (0, 0)),
        ],
        out_specs=pl.BlockSpec((tm, Cout), lambda i: (i, 0)),
        out_shape=jax.ShapeDtypeStruct((m_pad, Cout), out_dtype),
        compiler_params=pltpu.CompilerParams(
            dimension_semantics=("parallel",),
            vmem_limit_bytes=VMEM_LIMIT_BYTES),
        cost_estimate=nr_cost,
    )(acc, scale.reshape(1, Cout), shift.reshape(1, Cout))

    return out[:M].reshape(N, Ho, Wo, Cout)


# ----------------------------- SpatialPath --------------------------------- #

_LAYER_CFG = [
    dict(cin=3,  cout=64,  ks=7, stride=2, padding=3),   # conv1
    dict(cin=64, cout=64,  ks=3, stride=2, padding=1),   # conv2
    dict(cin=64, cout=64,  ks=3, stride=2, padding=1),   # conv3
    dict(cin=64, cout=128, ks=1, stride=1, padding=0),   # conv_out
]


def init_spatial_path_params(key):
    """Deterministic kaiming_normal_(a=1) conv weights (HWIO); BN gamma=1, beta=0."""
    params = []
    keys = jax.random.split(key, len(_LAYER_CFG))
    for k, cfg in zip(keys, _LAYER_CFG):
        fan_in = cfg["cin"] * cfg["ks"] * cfg["ks"]
        std = (2.0 / ((1.0 + 1.0 ** 2) * fan_in)) ** 0.5   # kaiming_normal_, a=1
        w = jax.random.normal(
            k, (cfg["ks"], cfg["ks"], cfg["cin"], cfg["cout"]), jnp.float32) * std
        params.append(dict(w=w,
                           gamma=jnp.ones((cfg["cout"],), jnp.float32),
                           beta=jnp.zeros((cfg["cout"],), jnp.float32)))
    return params


@jax.jit
def spatial_path(x_nchw, params):
    x = jnp.transpose(x_nchw, (0, 2, 3, 1))            # NCHW -> NHWC
    last = len(_LAYER_CFG) - 1
    for idx, (p, cfg) in enumerate(zip(params, _LAYER_CFG)):
        # Intermediate activations in bf16 (halves HBM writeback + next-layer
        # im2col read); final layer output stays f32.
        out_dtype = jnp.float32 if idx == last else jnp.bfloat16
        x = conv_bn_relu(x, p["w"], p["gamma"], p["beta"],
                         ks=cfg["ks"], stride=cfg["stride"],
                         padding=cfg["padding"], out_dtype=out_dtype)
    return jnp.transpose(x, (0, 3, 1, 2))              # NHWC -> NCHW


if __name__ == "__main__":
    key = jax.random.PRNGKey(0)
    k_x, k_p = jax.random.split(key)
    # Small input consistent with the module: N=2, C=3 (conv1 expects 3), 32x32.
    x = jax.random.normal(k_x, (2, 3, 32, 32), jnp.float32)
    params = init_spatial_path_params(k_p)

    out = spatial_path(x, params)
    out = jax.block_until_ready(out)

    assert out.shape == (2, 128, 4, 4), out.shape  # three stride-2 convs: 32 -> 4
    assert bool(jnp.all(out >= 0.0))               # ReLU output
    print("KERNEL_OK")
</pallas_src>

<mosaic_0001>
module attributes {stable_mosaic.version = 11 : i64} {
  func.func @matmul_stats_kernel(%arg0: i32, %arg1: memref<512x256xbf16, #tpu.memory_space<vmem>>, %arg2: memref<256x64xbf16, #tpu.memory_space<vmem>>, %arg3: memref<512x64xf32, #tpu.memory_space<vmem>>, %arg4: memref<1x2x64xf32, #tpu.memory_space<vmem>>) attributes {dimension_semantics = [#tpu.dimension_semantics<parallel>], iteration_bounds = array<i64: 1>, scalar_prefetch = 0 : i64, scratch_operands = 0 : i64, tpu.core_type = #tpu.core_type<tc>, window_params = [{transform_indices = @transform_0, window_bounds = array<i64: 512, 256>}, {pipeline_mode = #tpu.pipeline_mode<synchronous>, transform_indices = @transform_1, window_bounds = array<i64: 256, 64>}, {transform_indices = @transform_2, window_bounds = array<i64: 512, 64>}, {transform_indices = @transform_3, window_bounds = array<i64: 1, 2, 64>}]} {
    %c0 = arith.constant 0 : index
    %c0_0 = arith.constant 0 : index
    %0 = vector.load %arg1[%c0, %c0_0] : memref<512x256xbf16, #tpu.memory_space<vmem>>, vector<512x256xbf16>
    %c0_1 = arith.constant 0 : index
    %c0_2 = arith.constant 0 : index
    %1 = vector.load %arg2[%c0_1, %c0_2] : memref<256x64xbf16, #tpu.memory_space<vmem>>, vector<256x64xbf16>
    %cst = arith.constant dense<0.000000e+00> : vector<512x64xf32>
    %2 = tpu.matmul %0, %1, %cst {dimension_numbers = #tpu.dot_dimension_numbers<[1], [0], [0], [1], [0, 0, 1, 1], [], []>} : vector<512x256xbf16>, vector<256x64xbf16>, vector<512x64xf32> -> vector<512x64xf32>
    %c0_3 = arith.constant 0 : index
    %c0_4 = arith.constant 0 : index
    %3 = vector.load %arg3[%c0_3, %c0_4] : memref<512x64xf32, #tpu.memory_space<vmem>>, vector<512x64xf32>
    tpu.vector_store %arg3[%c0_3, %c0_4], %2 {strides = array<i32>} : memref<512x64xf32, #tpu.memory_space<vmem>>, vector<512x64xf32>,
    %cst_5 = arith.constant dense<0.000000e+00> : vector<64xf32>
    %4 = vector.multi_reduction <add>, %2, %cst_5 [0] : vector<512x64xf32> to vector<64xf32>
    %5 = vector.shape_cast %4 : vector<64xf32> to vector<1x64xf32>
    %c0_6 = arith.constant 0 : index
    %c0_7 = arith.constant 0 : index
    %c0_8 = arith.constant 0 : index
    %6 = vector.load %arg4[%c0_6, %c0_7, %c0_8] : memref<1x2x64xf32, #tpu.memory_space<vmem>>, vector<1x1x64xf32>
    %7 = vector.shape_cast %6 : vector<1x1x64xf32> to vector<1x64xf32>
    %8 = vector.shape_cast %5 : vector<1x64xf32> to vector<1x1x64xf32>
    tpu.vector_store %arg4[%c0_6, %c0_7, %c0_8], %8 {strides = array<i32>} : memref<1x2x64xf32, #tpu.memory_space<vmem>>, vector<1x1x64xf32>,
    %9 = arith.mulf %2, %2 : vector<512x64xf32>
    %cst_9 = arith.constant dense<0.000000e+00> : vector<64xf32>
    %10 = vector.multi_reduction <add>, %9, %cst_9 [0] : vector<512x64xf32> to vector<64xf32>
    %11 = vector.shape_cast %10 : vector<64xf32> to vector<1x64xf32>
    %c0_10 = arith.constant 0 : index
    %c1 = arith.constant 1 : index
    %c0_11 = arith.constant 0 : index
    %12 = vector.load %arg4[%c0_10, %c1, %c0_11] : memref<1x2x64xf32, #tpu.memory_space<vmem>>, vector<1x1x64xf32>
    %13 = vector.shape_cast %12 : vector<1x1x64xf32> to vector<1x64xf32>
    %14 = vector.shape_cast %11 : vector<1x64xf32> to vector<1x1x64xf32>
    tpu.vector_store %arg4[%c0_10, %c1, %c0_11], %14 {strides = array<i32>} : memref<1x2x64xf32, #tpu.memory_space<vmem>>, vector<1x1x64xf32>,
    return
  }
  func.func @transform_0(%arg0: i32) -> (i32, i32) {
    %c0_i32 = arith.constant 0 : i32
    %c0_i32_0 = arith.constant 0 : i32
    return %arg0, %c0_i32 : i32, i32
  }
  func.func @transform_1(%arg0: i32) -> (i32, i32) {
    %c0_i32 = arith.constant 0 : i32
    %c0_i32_0 = arith.constant 0 : i32
    %c0_i32_1 = arith.constant 0 : i32
    return %c0_i32, %c0_i32_0 : i32, i32
  }
  func.func @transform_2(%arg0: i32) -> (i32, i32) {
    %c0_i32 = arith.constant 0 : i32
    %c0_i32_0 = arith.constant 0 : i32
    return %arg0, %c0_i32 : i32, i32
  }
  func.func @transform_3(%arg0: i32) -> (i32, i32, i32) {
    %c0_i32 = arith.constant 0 : i32
    %c0_i32_0 = arith.constant 0 : i32
    %c0_i32_1 = arith.constant 0 : i32
    return %arg0, %c0_i32, %c0_i32_0 : i32, i32, i32
  }
}

module attributes {stable_mosaic.version = 11 : i64} {
  func.func @norm_relu_kernel(%arg0: i32, %arg1: memref<512x64xf32, #tpu.memory_space<vmem>>, %arg2: memref<1x64xf32, #tpu.memory_space<vmem>>, %arg3: memref<1x64xf32, #tpu.memory_space<vmem>>, %arg4: memref<512x64xbf16, #tpu.memory_space<vmem>>) attributes {dimension_semantics = [#tpu.dimension_semantics<parallel>], iteration_bounds = array<i64: 1>, scalar_prefetch = 0 : i64, scratch_operands = 0 : i64, tpu.core_type = #tpu.core_type<tc>, window_params = [{transform_indices = @transform_0, window_bounds = array<i64: 512, 64>}, {pipeline_mode = #tpu.pipeline_mode<synchronous>, transform_indices = @transform_1, window_bounds = array<i64: 1, 64>}, {pipeline_mode = #tpu.pipeline_mode<synchronous>, transform_indices = @transform_2, window_bounds = array<i64: 1, 64>}, {transform_indices = @transform_3, window_bounds = array<i64: 512, 64>}]} {
    %c0 = arith.constant 0 : index
    %c0_0 = arith.constant 0 : index
    %0 = vector.load %arg1[%c0, %c0_0] : memref<512x64xf32, #tpu.memory_space<vmem>>, vector<512x64xf32>
    %c0_1 = arith.constant 0 : index
    %c0_2 = arith.constant 0 : index
    %1 = vector.load %arg2[%c0_1, %c0_2] : memref<1x64xf32, #tpu.memory_space<vmem>>, vector<1x64xf32>
    %2 = vector.broadcast %1 : vector<1x64xf32> to vector<512x64xf32>
    %3 = arith.mulf %0, %2 : vector<512x64xf32>
    %c0_3 = arith.constant 0 : index
    %c0_4 = arith.constant 0 : index
    %4 = vector.load %arg3[%c0_3, %c0_4] : memref<1x64xf32, #tpu.memory_space<vmem>>, vector<1x64xf32>
    %5 = vector.broadcast %4 : vector<1x64xf32> to vector<512x64xf32>
    %6 = arith.addf %3, %5 : vector<512x64xf32>
    %cst = arith.constant 0.000000e+00 : f32
    %7 = vector.broadcast %cst : f32 to vector<512x64xf32>
    %8 = arith.maximumf %6, %7 : vector<512x64xf32>
    %9 = arith.truncf %8 : vector<512x64xf32> to vector<512x64xbf16>
    %c0_5 = arith.constant 0 : index
    %c0_6 = arith.constant 0 : index
    %10 = vector.load %arg4[%c0_5, %c0_6] : memref<512x64xbf16, #tpu.memory_space<vmem>>, vector<512x64xbf16>
    tpu.vector_store %arg4[%c0_5, %c0_6], %9 {strides = array<i32>} : memref<512x64xbf16, #tpu.memory_space<vmem>>, vector<512x64xbf16>,
    return
  }
  func.func @transform_0(%arg0: i32) -> (i32, i32) {
    %c0_i32 = arith.constant 0 : i32
    %c0_i32_0 = arith.constant 0 : i32
    return %arg0, %c0_i32 : i32, i32
  }
  func.func @transform_1(%arg0: i32) -> (i32, i32) {
    %c0_i32 = arith.constant 0 : i32
    %c0_i32_0 = arith.constant 0 : i32
    %c0_i32_1 = arith.constant 0 : i32
    return %c0_i32, %c0_i32_0 : i32, i32
  }
  func.func @transform_2(%arg0: i32) -> (i32, i32) {
    %c0_i32 = arith.constant 0 : i32
    %c0_i32_0 = arith.constant 0 : i32
    %c0_i32_1 = arith.constant 0 : i32
    return %c0_i32, %c0_i32_0 : i32, i32
  }
  func.func @transform_3(%arg0: i32) -> (i32, i32) {
    %c0_i32 = arith.constant 0 : i32
    %c0_i32_0 = arith.constant 0 : i32
    return %arg0, %c0_i32 : i32, i32
  }
}

module attributes {stable_mosaic.version = 11 : i64} {
  func.func @matmul_stats_kernel(%arg0: i32, %arg1: memref<128x640xbf16, #tpu.memory_space<vmem>>, %arg2: memref<640x64xbf16, #tpu.memory_space<vmem>>, %arg3: memref<128x64xf32, #tpu.memory_space<vmem>>, %arg4: memref<1x2x64xf32, #tpu.memory_space<vmem>>) attributes {dimension_semantics = [#tpu.dimension_semantics<parallel>], iteration_bounds = array<i64: 1>, scalar_prefetch = 0 : i64, scratch_operands = 0 : i64, tpu.core_type = #tpu.core_type<tc>, window_params = [{transform_indices = @transform_0, window_bounds = array<i64: 128, 640>}, {pipeline_mode = #tpu.pipeline_mode<synchronous>, transform_indices = @transform_1, window_bounds = array<i64: 640, 64>}, {transform_indices = @transform_2, window_bounds = array<i64: 128, 64>}, {transform_indices = @transform_3, window_bounds = array<i64: 1, 2, 64>}]} {
    %c0 = arith.constant 0 : index
    %c0_0 = arith.constant 0 : index
    %0 = vector.load %arg1[%c0, %c0_0] : memref<128x640xbf16, #tpu.memory_space<vmem>>, vector<128x640xbf16>
    %c0_1 = arith.constant 0 : index
    %c0_2 = arith.constant 0 : index
    %1 = vector.load %arg2[%c0_1, %c0_2] : memref<640x64xbf16, #tpu.memory_space<vmem>>, vector<640x64xbf16>
    %cst = arith.constant dense<0.000000e+00> : vector<128x64xf32>
    %2 = tpu.matmul %0, %1, %cst {dimension_numbers = #tpu.dot_dimension_numbers<[1], [0], [0], [1], [0, 0, 1, 1], [], []>} : vector<128x640xbf16>, vector<640x64xbf16>, vector<128x64xf32> -> vector<128x64xf32>
    %c0_3 = arith.constant 0 : index
    %c0_4 = arith.constant 0 : index
    %3 = vector.load %arg3[%c0_3, %c0_4] : memref<128x64xf32, #tpu.memory_space<vmem>>, vector<128x64xf32>
    tpu.vector_store %arg3[%c0_3, %c0_4], %2 {strides = array<i32>} : memref<128x64xf32, #tpu.memory_space<vmem>>, vector<128x64xf32>,
    %cst_5 = arith.constant dense<0.000000e+00> : vector<64xf32>
    %4 = vector.multi_reduction <add>, %2, %cst_5 [0] : vector<128x64xf32> to vector<64xf32>
    %5 = vector.shape_cast %4 : vector<64xf32> to vector<1x64xf32>
    %c0_6 = arith.constant 0 : index
    %c0_7 = arith.constant 0 : index
    %c0_8 = arith.constant 0 : index
    %6 = vector.load %arg4[%c0_6, %c0_7, %c0_8] : memref<1x2x64xf32, #tpu.memory_space<vmem>>, vector<1x1x64xf32>
    %7 = vector.shape_cast %6 : vector<1x1x64xf32> to vector<1x64xf32>
    %8 = vector.shape_cast %5 : vector<1x64xf32> to vector<1x1x64xf32>
    tpu.vector_store %arg4[%c0_6, %c0_7, %c0_8], %8 {strides = array<i32>} : memref<1x2x64xf32, #tpu.memory_space<vmem>>, vector<1x1x64xf32>,
    %9 = arith.mulf %2, %2 : vector<128x64xf32>
    %cst_9 = arith.constant dense<0.000000e+00> : vector<64xf32>
    %10 = vector.multi_reduction <add>, %9, %cst_9 [0] : vector<128x64xf32> to vector<64xf32>
    %11 = vector.shape_cast %10 : vector<64xf32> to vector<1x64xf32>
    %c0_10 = arith.constant 0 : index
    %c1 = arith.constant 1 : index
    %c0_11 = arith.constant 0 : index
    %12 = vector.load %arg4[%c0_10, %c1, %c0_11] : memref<1x2x64xf32, #tpu.memory_space<vmem>>, vector<1x1x64xf32>
    %13 = vector.shape_cast %12 : vector<1x1x64xf32> to vector<1x64xf32>
    %14 = vector.shape_cast %11 : vector<1x64xf32> to vector<1x1x64xf32>
    tpu.vector_store %arg4[%c0_10, %c1, %c0_11], %14 {strides = array<i32>} : memref<1x2x64xf32, #tpu.memory_space<vmem>>, vector<1x1x64xf32>,
    return
  }
  func.func @transform_0(%arg0: i32) -> (i32, i32) {
    %c0_i32 = arith.constant 0 : i32
    %c0_i32_0 = arith.constant 0 : i32
    return %arg0, %c0_i32 : i32, i32
  }
  func.func @transform_1(%arg0: i32) -> (i32, i32) {
    %c0_i32 = arith.constant 0 : i32
    %c0_i32_0 = arith.constant 0 : i32
    %c0_i32_1 = arith.constant 0 : i32
    return %c0_i32, %c0_i32_0 : i32, i32
  }
  func.func @transform_2(%arg0: i32) -> (i32, i32) {
    %c0_i32 = arith.constant 0 : i32
    %c0_i32_0 = arith.constant 0 : i32
    return %arg0, %c0_i32 : i32, i32
  }
  func.func @transform_3(%arg0: i32) -> (i32, i32, i32) {
    %c0_i32 = arith.constant 0 : i32
    %c0_i32_0 = arith.constant 0 : i32
    %c0_i32_1 = arith.constant 0 : i32
    return %arg0, %c0_i32, %c0_i32_0 : i32, i32, i32
  }
}

module attributes {stable_mosaic.version = 11 : i64} {
  func.func @norm_relu_kernel(%arg0: i32, %arg1: memref<128x64xf32, #tpu.memory_space<vmem>>, %arg2: memref<1x64xf32, #tpu.memory_space<vmem>>, %arg3: memref<1x64xf32, #tpu.memory_space<vmem>>, %arg4: memref<128x64xbf16, #tpu.memory_space<vmem>>) attributes {dimension_semantics = [#tpu.dimension_semantics<parallel>], iteration_bounds = array<i64: 1>, scalar_prefetch = 0 : i64, scratch_operands = 0 : i64, tpu.core_type = #tpu.core_type<tc>, window_params = [{transform_indices = @transform_0, window_bounds = array<i64: 128, 64>}, {pipeline_mode = #tpu.pipeline_mode<synchronous>, transform_indices = @transform_1, window_bounds = array<i64: 1, 64>}, {pipeline_mode = #tpu.pipeline_mode<synchronous>, transform_indices = @transform_2, window_bounds = array<i64: 1, 64>}, {transform_indices = @transform_3, window_bounds = array<i64: 128, 64>}]} {
    %c0 = arith.constant 0 : index
    %c0_0 = arith.constant 0 : index
    %0 = vector.load %arg1[%c0, %c0_0] : memref<128x64xf32, #tpu.memory_space<vmem>>, vector<128x64xf32>
    %c0_1 = arith.constant 0 : index
    %c0_2 = arith.constant 0 : index
    %1 = vector.load %arg2[%c0_1, %c0_2] : memref<1x64xf32, #tpu.memory_space<vmem>>, vector<1x64xf32>
    %2 = vector.broadcast %1 : vector<1x64xf32> to vector<128x64xf32>
    %3 = arith.mulf %0, %2 : vector<128x64xf32>
    %c0_3 = arith.constant 0 : index
    %c0_4 = arith.constant 0 : index
    %4 = vector.load %arg3[%c0_3, %c0_4] : memref<1x64xf32, #tpu.memory_space<vmem>>, vector<1x64xf32>
    %5 = vector.broadcast %4 : vector<1x64xf32> to vector<128x64xf32>
    %6 = arith.addf %3, %5 : vector<128x64xf32>
    %cst = arith.constant 0.000000e+00 : f32
    %7 = vector.broadcast %cst : f32 to vector<128x64xf32>
    %8 = arith.maximumf %6, %7 : vector<128x64xf32>
    %9 = arith.truncf %8 : vector<128x64xf32> to vector<128x64xbf16>
    %c0_5 = arith.constant 0 : index
    %c0_6 = arith.constant 0 : index
    %10 = vector.load %arg4[%c0_5, %c0_6] : memref<128x64xbf16, #tpu.memory_space<vmem>>, vector<128x64xbf16>
    tpu.vector_store %arg4[%c0_5, %c0_6], %9 {strides = array<i32>} : memref<128x64xbf16, #tpu.memory_space<vmem>>, vector<128x64xbf16>,
    return
  }
  func.func @transform_0(%arg0: i32) -> (i32, i32) {
    %c0_i32 = arith.constant 0 : i32
    %c0_i32_0 = arith.constant 0 : i32
    return %arg0, %c0_i32 : i32, i32
  }
  func.func @transform_1(%arg0: i32) -> (i32, i32) {
    %c0_i32 = arith.constant 0 : i32
    %c0_i32_0 = arith.constant 0 : i32
    %c0_i32_1 = arith.constant 0 : i32
    return %c0_i32, %c0_i32_0 : i32, i32
  }
  func.func @transform_2(%arg0: i32) -> (i32, i32) {
    %c0_i32 = arith.constant 0 : i32
    %c0_i32_0 = arith.constant 0 : i32
    %c0_i32_1 = arith.constant 0 : i32
    return %c0_i32, %c0_i32_0 : i32, i32
  }
  func.func @transform_3(%arg0: i32) -> (i32, i32) {
    %c0_i32 = arith.constant 0 : i32
    %c0_i32_0 = arith.constant 0 : i32
    return %arg0, %c0_i32 : i32, i32
  }
}

module attributes {stable_mosaic.version = 11 : i64} {
  func.func @matmul_stats_kernel(%arg0: i32, %arg1: memref<32x640xbf16, #tpu.memory_space<vmem>>, %arg2: memref<640x64xbf16, #tpu.memory_space<vmem>>, %arg3: memref<32x64xf32, #tpu.memory_space<vmem>>, %arg4: memref<1x2x64xf32, #tpu.memory_space<vmem>>) attributes {dimension_semantics = [#tpu.dimension_semantics<parallel>], iteration_bounds = array<i64: 1>, scalar_prefetch = 0 : i64, scratch_operands = 0 : i64, tpu.core_type = #tpu.core_type<tc>, window_params = [{transform_indices = @transform_0, window_bounds = array<i64: 32, 640>}, {pipeline_mode = #tpu.pipeline_mode<synchronous>, transform_indices = @transform_1, window_bounds = array<i64: 640, 64>}, {transform_indices = @transform_2, window_bounds = array<i64: 32, 64>}, {transform_indices = @transform_3, window_bounds = array<i64: 1, 2, 64>}]} {
    %c0 = arith.constant 0 : index
    %c0_0 = arith.constant 0 : index
    %0 = vector.load %arg1[%c0, %c0_0] : memref<32x640xbf16, #tpu.memory_space<vmem>>, vector<32x640xbf16>
    %c0_1 = arith.constant 0 : index
    %c0_2 = arith.constant 0 : index
    %1 = vector.load %arg2[%c0_1, %c0_2] : memref<640x64xbf16, #tpu.memory_space<vmem>>, vector<640x64xbf16>
    %cst = arith.constant dense<0.000000e+00> : vector<32x64xf32>
    %2 = tpu.matmul %0, %1, %cst {dimension_numbers = #tpu.dot_dimension_numbers<[1], [0], [0], [1], [0, 0, 1, 1], [], []>} : vector<32x640xbf16>, vector<640x64xbf16>, vector<32x64xf32> -> vector<32x64xf32>
    %c0_3 = arith.constant 0 : index
    %c0_4 = arith.constant 0 : index
    %3 = vector.load %arg3[%c0_3, %c0_4] : memref<32x64xf32, #tpu.memory_space<vmem>>, vector<32x64xf32>
    tpu.vector_store %arg3[%c0_3, %c0_4], %2 {strides = array<i32>} : memref<32x64xf32, #tpu.memory_space<vmem>>, vector<32x64xf32>,
    %cst_5 = arith.constant dense<0.000000e+00> : vector<64xf32>
    %4 = vector.multi_reduction <add>, %2, %cst_5 [0] : vector<32x64xf32> to vector<64xf32>
    %5 = vector.shape_cast %4 : vector<64xf32> to vector<1x64xf32>
    %c0_6 = arith.constant 0 : index
    %c0_7 = arith.constant 0 : index
    %c0_8 = arith.constant 0 : index
    %6 = vector.load %arg4[%c0_6, %c0_7, %c0_8] : memref<1x2x64xf32, #tpu.memory_space<vmem>>, vector<1x1x64xf32>
    %7 = vector.shape_cast %6 : vector<1x1x64xf32> to vector<1x64xf32>
    %8 = vector.shape_cast %5 : vector<1x64xf32> to vector<1x1x64xf32>
    tpu.vector_store %arg4[%c0_6, %c0_7, %c0_8], %8 {strides = array<i32>} : memref<1x2x64xf32, #tpu.memory_space<vmem>>, vector<1x1x64xf32>,
    %9 = arith.mulf %2, %2 : vector<32x64xf32>
    %cst_9 = arith.constant dense<0.000000e+00> : vector<64xf32>
    %10 = vector.multi_reduction <add>, %9, %cst_9 [0] : vector<32x64xf32> to vector<64xf32>
    %11 = vector.shape_cast %10 : vector<64xf32> to vector<1x64xf32>
    %c0_10 = arith.constant 0 : index
    %c1 = arith.constant 1 : index
    %c0_11 = arith.constant 0 : index
    %12 = vector.load %arg4[%c0_10, %c1, %c0_11] : memref<1x2x64xf32, #tpu.memory_space<vmem>>, vector<1x1x64xf32>
    %13 = vector.shape_cast %12 : vector<1x1x64xf32> to vector<1x64xf32>
    %14 = vector.shape_cast %11 : vector<1x64xf32> to vector<1x1x64xf32>
    tpu.vector_store %arg4[%c0_10, %c1, %c0_11], %14 {strides = array<i32>} : memref<1x2x64xf32, #tpu.memory_space<vmem>>, vector<1x1x64xf32>,
    return
  }
  func.func @transform_0(%arg0: i32) -> (i32, i32) {
    %c0_i32 = arith.constant 0 : i32
    %c0_i32_0 = arith.constant 0 : i32
    return %arg0, %c0_i32 : i32, i32
  }
  func.func @transform_1(%arg0: i32) -> (i32, i32) {
    %c0_i32 = arith.constant 0 : i32
    %c0_i32_0 = arith.constant 0 : i32
    %c0_i32_1 = arith.constant 0 : i32
    return %c0_i32, %c0_i32_0 : i32, i32
  }
  func.func @transform_2(%arg0: i32) -> (i32, i32) {
    %c0_i32 = arith.constant 0 : i32
    %c0_i32_0 = arith.constant 0 : i32
    return %arg0, %c0_i32 : i32, i32
  }
  func.func @transform_3(%arg0: i32) -> (i32, i32, i32) {
    %c0_i32 = arith.constant 0 : i32
    %c0_i32_0 = arith.constant 0 : i32
    %c0_i32_1 = arith.constant 0 : i32
    return %arg0, %c0_i32, %c0_i32_0 : i32, i32, i32
  }
}

module attributes {stable_mosaic.version = 11 : i64} {
  func.func @norm_relu_kernel(%arg0: i32, %arg1: memref<32x64xf32, #tpu.memory_space<vmem>>, %arg2: memref<1x64xf32, #tpu.memory_space<vmem>>, %arg3: memref<1x64xf32, #tpu.memory_space<vmem>>, %arg4: memref<32x64xbf16, #tpu.memory_space<vmem>>) attributes {dimension_semantics = [#tpu.dimension_semantics<parallel>], iteration_bounds = array<i64: 1>, scalar_prefetch = 0 : i64, scratch_operands = 0 : i64, tpu.core_type = #tpu.core_type<tc>, window_params = [{transform_indices = @transform_0, window_bounds = array<i64: 32, 64>}, {pipeline_mode = #tpu.pipeline_mode<synchronous>, transform_indices = @transform_1, window_bounds = array<i64: 1, 64>}, {pipeline_mode = #tpu.pipeline_mode<synchronous>, transform_indices = @transform_2, window_bounds = array<i64: 1, 64>}, {transform_indices = @transform_3, window_bounds = array<i64: 32, 64>}]} {
    %c0 = arith.constant 0 : index
    %c0_0 = arith.constant 0 : index
    %0 = vector.load %arg1[%c0, %c0_0] : memref<32x64xf32, #tpu.memory_space<vmem>>, vector<32x64xf32>
    %c0_1 = arith.constant 0 : index
    %c0_2 = arith.constant 0 : index
    %1 = vector.load %arg2[%c0_1, %c0_2] : memref<1x64xf32, #tpu.memory_space<vmem>>, vector<1x64xf32>
    %2 = vector.broadcast %1 : vector<1x64xf32> to vector<32x64xf32>
    %3 = arith.mulf %0, %2 : vector<32x64xf32>
    %c0_3 = arith.constant 0 : index
    %c0_4 = arith.constant 0 : index
    %4 = vector.load %arg3[%c0_3, %c0_4] : memref<1x64xf32, #tpu.memory_space<vmem>>, vector<1x64xf32>
    %5 = vector.broadcast %4 : vector<1x64xf32> to vector<32x64xf32>
    %6 = arith.addf %3, %5 : vector<32x64xf32>
    %cst = arith.constant 0.000000e+00 : f32
    %7 = vector.broadcast %cst : f32 to vector<32x64xf32>
    %8 = arith.maximumf %6, %7 : vector<32x64xf32>
    %9 = arith.truncf %8 : vector<32x64xf32> to vector<32x64xbf16>
    %c0_5 = arith.constant 0 : index
    %c0_6 = arith.constant 0 : index
    %10 = vector.load %arg4[%c0_5, %c0_6] : memref<32x64xbf16, #tpu.memory_space<vmem>>, vector<32x64xbf16>
    tpu.vector_store %arg4[%c0_5, %c0_6], %9 {strides = array<i32>} : memref<32x64xbf16, #tpu.memory_space<vmem>>, vector<32x64xbf16>,
    return
  }
  func.func @transform_0(%arg0: i32) -> (i32, i32) {
    %c0_i32 = arith.constant 0 : i32
    %c0_i32_0 = arith.constant 0 : i32
    return %arg0, %c0_i32 : i32, i32
  }
  func.func @transform_1(%arg0: i32) -> (i32, i32) {
    %c0_i32 = arith.constant 0 : i32
    %c0_i32_0 = arith.constant 0 : i32
    %c0_i32_1 = arith.constant 0 : i32
    return %c0_i32, %c0_i32_0 : i32, i32
  }
  func.func @transform_2(%arg0: i32) -> (i32, i32) {
    %c0_i32 = arith.constant 0 : i32
    %c0_i32_0 = arith.constant 0 : i32
    %c0_i32_1 = arith.constant 0 : i32
    return %c0_i32, %c0_i32_0 : i32, i32
  }
  func.func @transform_3(%arg0: i32) -> (i32, i32) {
    %c0_i32 = arith.constant 0 : i32
    %c0_i32_0 = arith.constant 0 : i32
    return %arg0, %c0_i32 : i32, i32
  }
}

module attributes {stable_mosaic.version = 11 : i64} {
  func.func @matmul_stats_kernel(%arg0: i32, %arg1: memref<32x128xbf16, #tpu.memory_space<vmem>>, %arg2: memref<128x128xbf16, #tpu.memory_space<vmem>>, %arg3: memref<32x128xf32, #tpu.memory_space<vmem>>, %arg4: memref<1x2x128xf32, #tpu.memory_space<vmem>>) attributes {dimension_semantics = [#tpu.dimension_semantics<parallel>], iteration_bounds = array<i64: 1>, scalar_prefetch = 0 : i64, scratch_operands = 0 : i64, tpu.core_type = #tpu.core_type<tc>, window_params = [{transform_indices = @transform_0, window_bounds = array<i64: 32, 128>}, {pipeline_mode = #tpu.pipeline_mode<synchronous>, transform_indices = @transform_1, window_bounds = array<i64: 128, 128>}, {transform_indices = @transform_2, window_bounds = array<i64: 32, 128>}, {transform_indices = @transform_3, window_bounds = array<i64: 1, 2, 128>}]} {
    %c0 = arith.constant 0 : index
    %c0_0 = arith.constant 0 : index
    %0 = vector.load %arg1[%c0, %c0_0] : memref<32x128xbf16, #tpu.memory_space<vmem>>, vector<32x128xbf16>
    %c0_1 = arith.constant 0 : index
    %c0_2 = arith.constant 0 : index
    %1 = vector.load %arg2[%c0_1, %c0_2] : memref<128x128xbf16, #tpu.memory_space<vmem>>, vector<128x128xbf16>
    %cst = arith.constant dense<0.000000e+00> : vector<32x128xf32>
    %2 = tpu.matmul %0, %1, %cst {dimension_numbers = #tpu.dot_dimension_numbers<[1], [0], [0], [1], [0, 0, 1, 1], [], []>} : vector<32x128xbf16>, vector<128x128xbf16>, vector<32x128xf32> -> vector<32x128xf32>
    %c0_3 = arith.constant 0 : index
    %c0_4 = arith.constant 0 : index
    %3 = vector.load %arg3[%c0_3, %c0_4] : memref<32x128xf32, #tpu.memory_space<vmem>>, vector<32x128xf32>
    tpu.vector_store %arg3[%c0_3, %c0_4], %2 {strides = array<i32>} : memref<32x128xf32, #tpu.memory_space<vmem>>, vector<32x128xf32>,
    %cst_5 = arith.constant dense<0.000000e+00> : vector<128xf32>
    %4 = vector.multi_reduction <add>, %2, %cst_5 [0] : vector<32x128xf32> to vector<128xf32>
    %5 = vector.shape_cast %4 : vector<128xf32> to vector<1x128xf32>
    %c0_6 = arith.constant 0 : index
    %c0_7 = arith.constant 0 : index
    %c0_8 = arith.constant 0 : index
    %6 = vector.load %arg4[%c0_6, %c0_7, %c0_8] : memref<1x2x128xf32, #tpu.memory_space<vmem>>, vector<1x1x128xf32>
    %7 = vector.shape_cast %6 : vector<1x1x128xf32> to vector<1x128xf32>
    %8 = vector.shape_cast %5 : vector<1x128xf32> to vector<1x1x128xf32>
    tpu.vector_store %arg4[%c0_6, %c0_7, %c0_8], %8 {strides = array<i32>} : memref<1x2x128xf32, #tpu.memory_space<vmem>>, vector<1x1x128xf32>,
    %9 = arith.mulf %2, %2 : vector<32x128xf32>
    %cst_9 = arith.constant dense<0.000000e+00> : vector<128xf32>
    %10 = vector.multi_reduction <add>, %9, %cst_9 [0] : vector<32x128xf32> to vector<128xf32>
    %11 = vector.shape_cast %10 : vector<128xf32> to vector<1x128xf32>
    %c0_10 = arith.constant 0 : index
    %c1 = arith.constant 1 : index
    %c0_11 = arith.constant 0 : index
    %12 = vector.load %arg4[%c0_10, %c1, %c0_11] : memref<1x2x128xf32, #tpu.memory_space<vmem>>, vector<1x1x128xf32>
    %13 = vector.shape_cast %12 : vector<1x1x128xf32> to vector<1x128xf32>
    %14 = vector.shape_cast %11 : vector<1x128xf32> to vector<1x1x128xf32>
    tpu.vector_store %arg4[%c0_10, %c1, %c0_11], %14 {strides = array<i32>} : memref<1x2x128xf32, #tpu.memory_space<vmem>>, vector<1x1x128xf32>,
    return
  }
  func.func @transform_0(%arg0: i32) -> (i32, i32) {
    %c0_i32 = arith.constant 0 : i32
    %c0_i32_0 = arith.constant 0 : i32
    return %arg0, %c0_i32 : i32, i32
  }
  func.func @transform_1(%arg0: i32) -> (i32, i32) {
    %c0_i32 = arith.constant 0 : i32
    %c0_i32_0 = arith.constant 0 : i32
    %c0_i32_1 = arith.constant 0 : i32
    return %c0_i32, %c0_i32_0 : i32, i32
  }
  func.func @transform_2(%arg0: i32) -> (i32, i32) {
    %c0_i32 = arith.constant 0 : i32
    %c0_i32_0 = arith.constant 0 : i32
    return %arg0, %c0_i32 : i32, i32
  }
  func.func @transform_3(%arg0: i32) -> (i32, i32, i32) {
    %c0_i32 = arith.constant 0 : i32
    %c0_i32_0 = arith.constant 0 : i32
    %c0_i32_1 = arith.constant 0 : i32
    return %arg0, %c0_i32, %c0_i32_0 : i32, i32, i32
  }
}

module attributes {stable_mosaic.version = 11 : i64} {
  func.func @norm_relu_kernel(%arg0: i32, %arg1: memref<32x128xf32, #tpu.memory_space<vmem>>, %arg2: memref<1x128xf32, #tpu.memory_space<vmem>>, %arg3: memref<1x128xf32, #tpu.memory_space<vmem>>, %arg4: memref<32x128xf32, #tpu.memory_space<vmem>>) attributes {dimension_semantics = [#tpu.dimension_semantics<parallel>], iteration_bounds = array<i64: 1>, scalar_prefetch = 0 : i64, scratch_operands = 0 : i64, tpu.core_type = #tpu.core_type<tc>, window_params = [{transform_indices = @transform_0, window_bounds = array<i64: 32, 128>}, {pipeline_mode = #tpu.pipeline_mode<synchronous>, transform_indices = @transform_1, window_bounds = array<i64: 1, 128>}, {pipeline_mode = #tpu.pipeline_mode<synchronous>, transform_indices = @transform_2, window_bounds = array<i64: 1, 128>}, {transform_indices = @transform_3, window_bounds = array<i64: 32, 128>}]} {
    %c0 = arith.constant 0 : index
    %c0_0 = arith.constant 0 : index
    %0 = vector.load %arg1[%c0, %c0_0] : memref<32x128xf32, #tpu.memory_space<vmem>>, vector<32x128xf32>
    %c0_1 = arith.constant 0 : index
    %c0_2 = arith.constant 0 : index
    %1 = vector.load %arg2[%c0_1, %c0_2] : memref<1x128xf32, #tpu.memory_space<vmem>>, vector<1x128xf32>
    %2 = vector.broadcast %1 : vector<1x128xf32> to vector<32x128xf32>
    %3 = arith.mulf %0, %2 : vector<32x128xf32>
    %c0_3 = arith.constant 0 : index
    %c0_4 = arith.constant 0 : index
    %4 = vector.load %arg3[%c0_3, %c0_4] : memref<1x128xf32, #tpu.memory_space<vmem>>, vector<1x128xf32>
    %5 = vector.broadcast %4 : vector<1x128xf32> to vector<32x128xf32>
    %6 = arith.addf %3, %5 : vector<32x128xf32>
    %cst = arith.constant 0.000000e+00 : f32
    %7 = vector.broadcast %cst : f32 to vector<32x128xf32>
    %8 = arith.maximumf %6, %7 : vector<32x128xf32>
    %c0_5 = arith.constant 0 : index
    %c0_6 = arith.constant 0 : index
    %9 = vector.load %arg4[%c0_5, %c0_6] : memref<32x128xf32, #tpu.memory_space<vmem>>, vector<32x128xf32>
    tpu.vector_store %arg4[%c0_5, %c0_6], %8 {strides = array<i32>} : memref<32x128xf32, #tpu.memory_space<vmem>>, vector<32x128xf32>,
    return
  }
  func.func @transform_0(%arg0: i32) -> (i32, i32) {
    %c0_i32 = arith.constant 0 : i32
    %c0_i32_0 = arith.constant 0 : i32
    return %arg0, %c0_i32 : i32, i32
  }
  func.func @transform_1(%arg0: i32) -> (i32, i32) {
    %c0_i32 = arith.constant 0 : i32
    %c0_i32_0 = arith.constant 0 : i32
    %c0_i32_1 = arith.constant 0 : i32
    return %c0_i32, %c0_i32_0 : i32, i32
  }
  func.func @transform_2(%arg0: i32) -> (i32, i32) {
    %c0_i32 = arith.constant 0 : i32
    %c0_i32_0 = arith.constant 0 : i32
    %c0_i32_1 = arith.constant 0 : i32
    return %c0_i32, %c0_i32_0 : i32, i32
  }
  func.func @transform_3(%arg0: i32) -> (i32, i32) {
    %c0_i32 = arith.constant 0 : i32
    %c0_i32_0 = arith.constant 0 : i32
    return %arg0, %c0_i32 : i32, i32
  }
}

</mosaic_0001>

<llo_original>
// kernel: spatial_path.9
$region0: #{spatial_path.9}
  #allocation0 [shape = 'u32[]', space=smem, size = 0x4, offset = 0x4, fixed_abs, tag = 'smem constant byte address 0x4 - core index']
  #allocation1 [shape = 'u32[144,128]{1,0:T(1,128)}', space=vmem, size = 0x12000, scoped, tag = 'internal scratch']
  %s0 = inlined_call_operand.vmem [shape: f32[512,64], index: 0, kind: input, shape index: {}]
  %s1 = inlined_call_operand.vmem [shape: f32[1,64], index: 1, kind: input, shape index: {}]
  %s2 = inlined_call_operand.vmem [shape: f32[1,64], index: 2, kind: input, shape index: {}]
  %s3 = inlined_call_operand.vmem [shape: bf16[512,64], index: 3, kind: output, shape index: {}]
  %s4 = sld [smem:[#allocation0]]
  $region22: #{spatial_path.9} parent=0
    _
  %s6 = ssub.s32 1, %s4
  %s7 = scalar_select 0, %s6, %s4
  // Predicated region
  $region2: #{spatial_path.9} parent=0 // pred_check
    _
  $region3: #{spatial_path.9} parent=0 // pred_check_branch
    %9 = sbr.rel (0) target = $region5
  $region4: #{spatial_path.9} parent=0 // pred_region
    _
  $region5: #{spatial_path.9} parent=0 // pred_fallthru
    _
  // Predicated region
  $region6: #{spatial_path.9} parent=0 // pred_check
    _
  $region7: #{spatial_path.9} parent=0 // pred_check_branch
    %11 = sbr.rel (0) target = $region9
  $region8: #{spatial_path.9} parent=0 // pred_region
    _
  $region9: #{spatial_path.9} parent=0 // pred_fallthru
    _
  // Predicated region
  $region10: #{spatial_path.9} parent=0 // pred_check
    _
  $region11: #{spatial_path.9} parent=0 // pred_check_branch
    %13 = sbr.rel (0) target = $region13
  $region12: #{spatial_path.9} parent=0 // pred_region
    _
  $region13: #{spatial_path.9} parent=0 // pred_fallthru
    _
  %v14 = vld [vmem:[%s0] sm:$0xff]
  %v15 = vld [vmem:[%s0 + $0x8] sm:$0xff]
  %v16 = vld [vmem:[%s0 + $0x10] sm:$0xff]
  %v17 = vld [vmem:[%s0 + $0x18] sm:$0xff]
  %v18 = vld [vmem:[%s0 + $0x20] sm:$0xff]
  %v19 = vld [vmem:[%s0 + $0x28] sm:$0xff]
  %v20 = vld [vmem:[%s0 + $0x30] sm:$0xff]
  %v21 = vld [vmem:[%s0 + $0x38] sm:$0xff]
  %v22 = vld [vmem:[%s0 + $0x40] sm:$0xff]
  %v23 = vld [vmem:[%s0 + $0x48] sm:$0xff]
  %v24 = vld [vmem:[%s0 + $0x50] sm:$0xff]
  %v25 = vld [vmem:[%s0 + $0x58] sm:$0xff]
  %v26 = vld [vmem:[%s0 + $0x60] sm:$0xff]
  %v27 = vld [vmem:[%s0 + $0x68] sm:$0xff]
  %v28 = vld [vmem:[%s0 + $0x70] sm:$0xff]
  %v29 = vld [vmem:[%s0 + $0x78] sm:$0xff]
  %v30 = vld [vmem:[%s0 + $0x80] sm:$0xff]
  %v31 = vld [vmem:[%s0 + $0x88] sm:$0xff]
  %v32 = vld [vmem:[%s0 + $0x90] sm:$0xff]
  %v33 = vld [vmem:[%s0 + $0x98] sm:$0xff]
  %v34 = vld [vmem:[%s0 + $0xa0] sm:$0xff]
  %v35 = vld [vmem:[%s0 + $0xa8] sm:$0xff]
  %v36 = vld [vmem:[%s0 + $0xb0] sm:$0xff]
  %v37 = vld [vmem:[%s0 + $0xb8] sm:$0xff]
  %v38 = vld [vmem:[%s0 + $0xc0] sm:$0xff]
  %v39 = vld [vmem:[%s0 + $0xc8] sm:$0xff]
  %v40 = vld [vmem:[%s0 + $0xd0] sm:$0xff]
  %v41 = vld [vmem:[%s0 + $0xd8] sm:$0xff]
  %v42 = vld [vmem:[%s0 + $0xe0] sm:$0xff]
  %v43 = vld [vmem:[%s0 + $0xe8] sm:$0xff]
  %v44 = vld [vmem:[%s0 + $0xf0] sm:$0xff]
  %v45 = vld [vmem:[%s0 + $0xf8] sm:$0xff]
  %v46 = vld [vmem:[%s0 + $0x100] sm:$0xff]
  %v47 = vld [vmem:[%s0 + $0x108] sm:$0xff]
  %v48 = vld [vmem:[%s0 + $0x110] sm:$0xff]
  %v49 = vld [vmem:[%s0 + $0x118] sm:$0xff]
  %v50 = vld [vmem:[%s0 + $0x120] sm:$0xff]
  %v51 = vld [vmem:[%s0 + $0x128] sm:$0xff]
  %v52 = vld [vmem:[%s0 + $0x130] sm:$0xff]
  %v53 = vld [vmem:[%s0 + $0x138] sm:$0xff]
  %v54 = vld [vmem:[%s0 + $0x140] sm:$0xff]
  %v55 = vld [vmem:[%s0 + $0x148] sm:$0xff]
  %v56 = vld [vmem:[%s0 + $0x150] sm:$0xff]
  %v57 = vld [vmem:[%s0 + $0x158] sm:$0xff]
  %v58 = vld [vmem:[%s0 + $0x160] sm:$0xff]
  %v59 = vld [vmem:[%s0 + $0x168] sm:$0xff]
  %v60 = vld [vmem:[%s0 + $0x170] sm:$0xff]
  %v61 = vld [vmem:[%s0 + $0x178] sm:$0xff]
  %v62 = vld [vmem:[%s0 + $0x180] sm:$0xff]
  %v63 = vld [vmem:[%s0 + $0x188] sm:$0xff]
  %v64 = vld [vmem:[%s0 + $0x190] sm:$0xff]
  %v65 = vld [vmem:[%s0 + $0x198] sm:$0xff]
  %v66 = vld [vmem:[%s0 + $0x1a0] sm:$0xff]
  %v67 = vld [vmem:[%s0 + $0x1a8] sm:$0xff]
  %v68 = vld [vmem:[%s0 + $0x1b0] sm:$0xff]
  %v69 = vld [vmem:[%s0 + $0x1b8] sm:$0xff]
  %v70 = vld [vmem:[%s0 + $0x1c0] sm:$0xff]
  %v71 = vld [vmem:[%s0 + $0x1c8] sm:$0xff]
  %v72 = vld [vmem:[%s0 + $0x1d0] sm:$0xff]
  %v73 = vld [vmem:[%s0 + $0x1d8] sm:$0xff]
  %v74 = vld [vmem:[%s0 + $0x1e0] sm:$0xff]
  %v75 = vld [vmem:[%s0 + $0x1e8] sm:$0xff]
  %v76 = vld [vmem:[%s0 + $0x1f0] sm:$0xff]
  %v77 = vld [vmem:[%s0 + $0x1f8] sm:$0xff]
  %v78 = vld [vmem:[%s1] sm:$0x1]
  %v80 = vlaneseq
  %v81 = vshrl.u32 %v80, 7
  %v82 = vsub.s32 0, %v81
  %v83 = vrot.slane %v78, %v82
  %v85 = vmul.f32 %v14, %v83
  %v86 = vmul.f32 %v15, %v83
  %v87 = vmul.f32 %v16, %v83
  %v88 = vmul.f32 %v17, %v83
  %v89 = vmul.f32 %v18, %v83
  %v90 = vmul.f32 %v19, %v83
  %v91 = vmul.f32 %v20, %v83
  %v92 = vmul.f32 %v21, %v83
  %v93 = vmul.f32 %v22, %v83
  %v94 = vmul.f32 %v23, %v83
  %v95 = vmul.f32 %v24, %v83
  %v96 = vmul.f32 %v25, %v83
  %v97 = vmul.f32 %v26, %v83
  %v98 = vmul.f32 %v27, %v83
  %v99 = vmul.f32 %v28, %v83
  %v100 = vmul.f32 %v29, %v83
  %v101 = vmul.f32 %v30, %v83
  %v102 = vmul.f32 %v31, %v83
  %v103 = vmul.f32 %v32, %v83
  %v104 = vmul.f32 %v33, %v83
  %v105 = vmul.f32 %v34, %v83
  %v106 = vmul.f32 %v35, %v83
  %v107 = vmul.f32 %v36, %v83
  %v108 = vmul.f32 %v37, %v83
  %v109 = vmul.f32 %v38, %v83
  %v110 = vmul.f32 %v39, %v83
  %v111 = vmul.f32 %v40, %v83
  %v112 = vmul.f32 %v41, %v83
  %v113 = vmul.f32 %v42, %v83
  %v114 = vmul.f32 %v43, %v83
  %v115 = vmul.f32 %v44, %v83
  %v116 = vmul.f32 %v45, %v83
  %v117 = vmul.f32 %v46, %v83
  %v118 = vmul.f32 %v47, %v83
  %v119 = vmul.f32 %v48, %v83
  %v120 = vmul.f32 %v49, %v83
  %v121 = vmul.f32 %v50, %v83
  %v122 = vmul.f32 %v51, %v83
  %v123 = vmul.f32 %v52, %v83
  %v124 = vmul.f32 %v53, %v83
  %v125 = vmul.f32 %v54, %v83
  %v126 = vmul.f32 %v55, %v83
  %v127 = vmul.f32 %v56, %v83
  %v128 = vmul.f32 %v57, %v83
  %v129 = vmul.f32 %v58, %v83
  %v130 = vmul.f32 %v59, %v83
  %v131 = vmul.f32 %v60, %v83
  %v132 = vmul.f32 %v61, %v83
  %v133 = vmul.f32 %v62, %v83
  %v134 = vmul.f32 %v63, %v83
  %v135 = vmul.f32 %v64, %v83
  %v136 = vmul.f32 %v65, %v83
  %v137 = vmul.f32 %v66, %v83
  %v138 = vmul.f32 %v67, %v83
  %v139 = vmul.f32 %v68, %v83
  %v140 = vmul.f32 %v69, %v83
  %v141 = vmul.f32 %v70, %v83
  %v142 = vmul.f32 %v71, %v83
  %v143 = vmul.f32 %v72, %v83
  %v144 = vmul.f32 %v73, %v83
  %v145 = vmul.f32 %v74, %v83
  %v146 = vmul.f32 %v75, %v83
  %v147 = vmul.f32 %v76, %v83
  %v148 = vmul.f32 %v77, %v83
  %v149 = vld [vmem:[%s2] sm:$0x1]
  %v151 = vlaneseq
  %v152 = vshrl.u32 %v151, 7
  %v153 = vsub.s32 0, %v152
  %v154 = vrot.slane %v149, %v153
  %v156 = vadd.f32 %v85, %v154
  %v157 = vadd.f32 %v86, %v154
  %v158 = vadd.f32 %v87, %v154
  %v159 = vadd.f32 %v88, %v154
  %v160 = vadd.f32 %v89, %v154
  %v161 = vadd.f32 %v90, %v154
  %v162 = vadd.f32 %v91, %v154
  %v163 = vadd.f32 %v92, %v154
  %v164 = vadd.f32 %v93, %v154
  %v165 = vadd.f32 %v94, %v154
  %v166 = vadd.f32 %v95, %v154
  %v167 = vadd.f32 %v96, %v154
  %v168 = vadd.f32 %v97, %v154
  %v169 = vadd.f32 %v98, %v154
  %v170 = vadd.f32 %v99, %v154
  %v171 = vadd.f32 %v100, %v154
  %v172 = vadd.f32 %v101, %v154
  %v173 = vadd.f32 %v102, %v154
  %v174 = vadd.f32 %v103, %v154
  %v175 = vadd.f32 %v104, %v154
  %v176 = vadd.f32 %v105, %v154
  %v177 = vadd.f32 %v106, %v154
  %v178 = vadd.f32 %v107, %v154
  %v179 = vadd.f32 %v108, %v154
  %v180 = vadd.f32 %v109, %v154
  %v181 = vadd.f32 %v110, %v154
  %v182 = vadd.f32 %v111, %v154
  %v183 = vadd.f32 %v112, %v154
  %v184 = vadd.f32 %v113, %v154
  %v185 = vadd.f32 %v114, %v154
  %v186 = vadd.f32 %v115, %v154
  %v187 = vadd.f32 %v116, %v154
  %v188 = vadd.f32 %v117, %v154
  %v189 = vadd.f32 %v118, %v154
  %v190 = vadd.f32 %v119, %v154
  %v191 = vadd.f32 %v120, %v154
  %v192 = vadd.f32 %v121, %v154
  %v193 = vadd.f32 %v122, %v154
  %v194 = vadd.f32 %v123, %v154
  %v195 = vadd.f32 %v124, %v154
  %v196 = vadd.f32 %v125, %v154
  %v197 = vadd.f32 %v126, %v154
  %v198 = vadd.f32 %v127, %v154
  %v199 = vadd.f32 %v128, %v154
  %v200 = vadd.f32 %v129, %v154
  %v201 = vadd.f32 %v130, %v154
  %v202 = vadd.f32 %v131, %v154
  %v203 = vadd.f32 %v132, %v154
  %v204 = vadd.f32 %v133, %v154
  %v205 = vadd.f32 %v134, %v154
  %v206 = vadd.f32 %v135, %v154
  %v207 = vadd.f32 %v136, %v154
  %v208 = vadd.f32 %v137, %v154
  %v209 = vadd.f32 %v138, %v154
  %v210 = vadd.f32 %v139, %v154
  %v211 = vadd.f32 %v140, %v154
  %v212 = vadd.f32 %v141, %v154
  %v213 = vadd.f32 %v142, %v154
  %v214 = vadd.f32 %v143, %v154
  %v215 = vadd.f32 %v144, %v154
  %v216 = vadd.f32 %v145, %v154
  %v217 = vadd.f32 %v146, %v154
  %v218 = vadd.f32 %v147, %v154
  %v219 = vadd.f32 %v148, %v154
  %v220 = vmax.f32 %v156, 0.0
  %v221 = vmax.f32 %v157, 0.0
  %v222 = vmax.f32 %v158, 0.0
  %v223 = vmax.f32 %v159, 0.0
  %v224 = vmax.f32 %v160, 0.0
  %v225 = vmax.f32 %v161, 0.0
  %v226 = vmax.f32 %v162, 0.0
  %v227 = vmax.f32 %v163, 0.0
  %v228 = vmax.f32 %v164, 0.0
  %v229 = vmax.f32 %v165, 0.0
  %v230 = vmax.f32 %v166, 0.0
  %v231 = vmax.f32 %v167, 0.0
  %v232 = vmax.f32 %v168, 0.0
  %v233 = vmax.f32 %v169, 0.0
  %v234 = vmax.f32 %v170, 0.0
  %v235 = vmax.f32 %v171, 0.0
  %v236 = vmax.f32 %v172, 0.0
  %v237 = vmax.f32 %v173, 0.0
  %v238 = vmax.f32 %v174, 0.0
  %v239 = vmax.f32 %v175, 0.0
  %v240 = vmax.f32 %v176, 0.0
  %v241 = vmax.f32 %v177, 0.0
  %v242 = vmax.f32 %v178, 0.0
  %v243 = vmax.f32 %v179, 0.0
  %v244 = vmax.f32 %v180, 0.0
  %v245 = vmax.f32 %v181, 0.0
  %v246 = vmax.f32 %v182, 0.0
  %v247 = vmax.f32 %v183, 0.0
  %v248 = vmax.f32 %v184, 0.0
  %v249 = vmax.f32 %v185, 0.0
  %v250 = vmax.f32 %v186, 0.0
  %v251 = vmax.f32 %v187, 0.0
  %v252 = vmax.f32 %v188, 0.0
  %v253 = vmax.f32 %v189, 0.0
  %v254 = vmax.f32 %v190, 0.0
  %v255 = vmax.f32 %v191, 0.0
  %v256 = vmax.f32 %v192, 0.0
  %v257 = vmax.f32 %v193, 0.0
  %v258 = vmax.f32 %v194, 0.0
  %v259 = vmax.f32 %v195, 0.0
  %v260 = vmax.f32 %v196, 0.0
  %v261 = vmax.f32 %v197, 0.0
  %v262 = vmax.f32 %v198, 0.0
  %v263 = vmax.f32 %v199, 0.0
  %v264 = vmax.f32 %v200, 0.0
  %v265 = vmax.f32 %v201, 0.0
  %v266 = vmax.f32 %v202, 0.0
  %v267 = vmax.f32 %v203, 0.0
  %v268 = vmax.f32 %v204, 0.0
  %v269 = vmax.f32 %v205, 0.0
  %v270 = vmax.f32 %v206, 0.0
  %v271 = vmax.f32 %v207, 0.0
  %v272 = vmax.f32 %v208, 0.0
  %v273 = vmax.f32 %v209, 0.0
  %v274 = vmax.f32 %v210, 0.0
  %v275 = vmax.f32 %v211, 0.0
  %v276 = vmax.f32 %v212, 0.0
  %v277 = vmax.f32 %v213, 0.0
  %v278 = vmax.f32 %v214, 0.0
  %v279 = vmax.f32 %v215, 0.0
  %v280 = vmax.f32 %v216, 0.0
  %v281 = vmax.f32 %v217, 0.0
  %v282 = vmax.f32 %v218, 0.0
  %v283 = vmax.f32 %v219, 0.0
  %v284 = vpack.c.bf16 %v221, %v220
  %v285 = vpack.c.bf16 %v223, %v222
  %v286 = vpack.c.bf16 %v225, %v224
  %v287 = vpack.c.bf16 %v227, %v226
  %v288 = vpack.c.bf16 %v229, %v228
  %v289 = vpack.c.bf16 %v231, %v230
  %v290 = vpack.c.bf16 %v233, %v232
  %v291 = vpack.c.bf16 %v235, %v234
  %v292 = vpack.c.bf16 %v237, %v236
  %v293 = vpack.c.bf16 %v239, %v238
  %v294 = vpack.c.bf16 %v241, %v240
  %v295 = vpack.c.bf16 %v243, %v242
  %v296 = vpack.c.bf16 %v245, %v244
  %v297 = vpack.c.bf16 %v247, %v246
  %v298 = vpack.c.bf16 %v249, %v248
  %v299 = vpack.c.bf16 %v251, %v250
  %v300 = vpack.c.bf16 %v253, %v252
  %v301 = vpack.c.bf16 %v255, %v254
  %v302 = vpack.c.bf16 %v257, %v256
  %v303 = vpack.c.bf16 %v259, %v258
  %v304 = vpack.c.bf16 %v261, %v260
  %v305 = vpack.c.bf16 %v263, %v262
  %v306 = vpack.c.bf16 %v265, %v264
  %v307 = vpack.c.bf16 %v267, %v266
  %v308 = vpack.c.bf16 %v269, %v268
  %v309 = vpack.c.bf16 %v271, %v270
  %v310 = vpack.c.bf16 %v273, %v272
  %v311 = vpack.c.bf16 %v275, %v274
  %v312 = vpack.c.bf16 %v277, %v276
  %v313 = vpack.c.bf16 %v279, %v278
  %v314 = vpack.c.bf16 %v281, %v280
  %v315 = vpack.c.bf16 %v283, %v282
  %v348 = vunpack.c.l.b16 %v284
  %v349 = vunpack.c.h.b16 %v284
  %v350 = vunpack.c.l.b16 %v285
  %v351 = vunpack.c.h.b16 %v285
  %v352 = vunpack.c.l.b16 %v286
  %v353 = vunpack.c.h.b16 %v286
  %v354 = vunpack.c.l.b16 %v287
  %v355 = vunpack.c.h.b16 %v287
  %v356 = vunpack.c.l.b16 %v288
  %v357 = vunpack.c.h.b16 %v288
  %v358 = vunpack.c.l.b16 %v289
  %v359 = vunpack.c.h.b16 %v289
  %v360 = vunpack.c.l.b16 %v290
  %v361 = vunpack.c.h.b16 %v290
  %v362 = vunpack.c.l.b16 %v291
  %v363 = vunpack.c.h.b16 %v291
  %v364 = vunpack.c.l.b16 %v292
  %v365 = vunpack.c.h.b16 %v292
  %v366 = vunpack.c.l.b16 %v293
  %v367 = vunpack.c.h.b16 %v293
  %v368 = vunpack.c.l.b16 %v294
  %v369 = vunpack.c.h.b16 %v294
  %v370 = vunpack.c.l.b16 %v295
  %v371 = vunpack.c.h.b16 %v295
  %v372 = vunpack.c.l.b16 %v296
  %v373 = vunpack.c.h.b16 %v296
  %v374 = vunpack.c.l.b16 %v297
  %v375 = vunpack.c.h.b16 %v297
  %v376 = vunpack.c.l.b16 %v298
  %v377 = vunpack.c.h.b16 %v298
  %v378 = vunpack.c.l.b16 %v299
  %v379 = vunpack.c.h.b16 %v299
  %v380 = vunpack.c.l.b16 %v300
  %v381 = vunpack.c.h.b16 %v300
  %v382 = vunpack.c.l.b16 %v301
  %v383 = vunpack.c.h.b16 %v301
  %v384 = vunpack.c.l.b16 %v302
  %v385 = vunpack.c.h.b16 %v302
  %v386 = vunpack.c.l.b16 %v303
  %v387 = vunpack.c.h.b16 %v303
  %v388 = vunpack.c.l.b16 %v304
  %v389 = vunpack.c.h.b16 %v304
  %v390 = vunpack.c.l.b16 %v305
  %v391 = vunpack.c.h.b16 %v305
  %v392 = vunpack.c.l.b16 %v306
  %v393 = vunpack.c.h.b16 %v306
  %v394 = vunpack.c.l.b16 %v307
  %v395 = vunpack.c.h.b16 %v307
  %v396 = vunpack.c.l.b16 %v308
  %v397 = vunpack.c.h.b16 %v308
  %v398 = vunpack.c.l.b16 %v309
  %v399 = vunpack.c.h.b16 %v309
  %v400 = vunpack.c.l.b16 %v310
  %v401 = vunpack.c.h.b16 %v310
  %v402 = vunpack.c.l.b16 %v311
  %v403 = vunpack.c.h.b16 %v311
  %v404 = vunpack.c.l.b16 %v312
  %v405 = vunpack.c.h.b16 %v312
  %v406 = vunpack.c.l.b16 %v313
  %v407 = vunpack.c.h.b16 %v313
  %v408 = vunpack.c.l.b16 %v314
  %v409 = vunpack.c.h.b16 %v314
  %v410 = vunpack.c.l.b16 %v315
  %v411 = vunpack.c.h.b16 %v315
  %v412 = vpack.c.b16 %v348, %v348
  %v413 = vpack.c.b16 %v349, %v349
  %v414 = vpack.c.b16 %v350, %v350
  %v415 = vpack.c.b16 %v351, %v351
  %v416 = vpack.c.b16 %v352, %v352
  %v417 = vpack.c.b16 %v353, %v353
  %v418 = vpack.c.b16 %v354, %v354
  %v419 = vpack.c.b16 %v355, %v355
  %v420 = vpack.c.b16 %v356, %v356
  %v421 = vpack.c.b16 %v357, %v357
  %v422 = vpack.c.b16 %v358, %v358
  %v423 = vpack.c.b16 %v359, %v359
  %v424 = vpack.c.b16 %v360, %v360
  %v425 = vpack.c.b16 %v361, %v361
  %v426 = vpack.c.b16 %v362, %v362
  %v427 = vpack.c.b16 %v363, %v363
  %v428 = vpack.c.b16 %v364, %v364
  %v429 = vpack.c.b16 %v365, %v365
  %v430 = vpack.c.b16 %v366, %v366
  %v431 = vpack.c.b16 %v367, %v367
  %v432 = vpack.c.b16 %v368, %v368
  %v433 = vpack.c.b16 %v369, %v369
  %v434 = vpack.c.b16 %v370, %v370
  %v435 = vpack.c.b16 %v371, %v371
  %v436 = vpack.c.b16 %v372, %v372
  %v437 = vpack.c.b16 %v373, %v373
  %v438 = vpack.c.b16 %v374, %v374
  %v439 = vpack.c.b16 %v375, %v375
  %v440 = vpack.c.b16 %v376, %v376
  %v441 = vpack.c.b16 %v377, %v377
  %v442 = vpack.c.b16 %v378, %v378
  %v443 = vpack.c.b16 %v379, %v379
  %v444 = vpack.c.b16 %v380, %v380
  %v445 = vpack.c.b16 %v381, %v381
  %v446 = vpack.c.b16 %v382, %v382
  %v447 = vpack.c.b16 %v383, %v383
  %v448 = vpack.c.b16 %v384, %v384
  %v449 = vpack.c.b16 %v385, %v385
  %v450 = vpack.c.b16 %v386, %v386
  %v451 = vpack.c.b16 %v387, %v387
  %v452 = vpack.c.b16 %v388, %v388
  %v453 = vpack.c.b16 %v389, %v389
  %v454 = vpack.c.b16 %v390, %v390
  %v455 = vpack.c.b16 %v391, %v391
  %v456 = vpack.c.b16 %v392, %v392
  %v457 = vpack.c.b16 %v393, %v393
  %v458 = vpack.c.b16 %v394, %v394
  %v459 = vpack.c.b16 %v395, %v395
  %v460 = vpack.c.b16 %v396, %v396
  %v461 = vpack.c.b16 %v397, %v397
  %v462 = vpack.c.b16 %v398, %v398
  %v463 = vpack.c.b16 %v399, %v399
  %v464 = vpack.c.b16 %v400, %v400
  %v465 = vpack.c.b16 %v401, %v401
  %v466 = vpack.c.b16 %v402, %v402
  %v467 = vpack.c.b16 %v403, %v403
  %v468 = vpack.c.b16 %v404, %v404
  %v469 = vpack.c.b16 %v405, %v405
  %v470 = vpack.c.b16 %v406, %v406
  %v471 = vpack.c.b16 %v407, %v407
  %v472 = vpack.c.b16 %v408, %v408
  %v473 = vpack.c.b16 %v409, %v409
  %v474 = vpack.c.b16 %v410, %v410
  %v475 = vpack.c.b16 %v411, %v411
  %vm540 = vcmask 519168
  %541 = vst.msk [vmem:[%s3] sm:$0xf] %vm540, %v412
  %542 = vst.msk [vmem:[%s3 + $0x4] sm:$0xf] %vm540, %v413
  %543 = vst.msk [vmem:[%s3 + $0x8] sm:$0xf] %vm540, %v414
  %544 = vst.msk [vmem:[%s3 + $0xc] sm:$0xf] %vm540, %v415
  %545 = vst.msk [vmem:[%s3 + $0x10] sm:$0xf] %vm540, %v416
  %546 = vst.msk [vmem:[%s3 + $0x14] sm:$0xf] %vm540, %v417
  %547 = vst.msk [vmem:[%s3 + $0x18] sm:$0xf] %vm540, %v418
  %548 = vst.msk [vmem:[%s3 + $0x1c] sm:$0xf] %vm540, %v419
  %549 = vst.msk [vmem:[%s3 + $0x20] sm:$0xf] %vm540, %v420
  %550 = vst.msk [vmem:[%s3 + $0x24] sm:$0xf] %vm540, %v421
  %551 = vst.msk [vmem:[%s3 + $0x28] sm:$0xf] %vm540, %v422
  %552 = vst.msk [vmem:[%s3 + $0x2c] sm:$0xf] %vm540, %v423
  %553 = vst.msk [vmem:[%s3 + $0x30] sm:$0xf] %vm540, %v424
  %554 = vst.msk [vmem:[%s3 + $0x34] sm:$0xf] %vm540, %v425
  %555 = vst.msk [vmem:[%s3 + $0x38] sm:$0xf] %vm540, %v426
  %556 = vst.msk [vmem:[%s3 + $0x3c] sm:$0xf] %vm540, %v427
  %557 = vst.msk [vmem:[%s3 + $0x40] sm:$0xf] %vm540, %v428
  %558 = vst.msk [vmem:[%s3 + $0x44] sm:$0xf] %vm540, %v429
  %559 = vst.msk [vmem:[%s3 + $0x48] sm:$0xf] %vm540, %v430
  %560 = vst.msk [vmem:[%s3 + $0x4c] sm:$0xf] %vm540, %v431
  %561 = vst.msk [vmem:[%s3 + $0x50] sm:$0xf] %vm540, %v432
  %562 = vst.msk [vmem:[%s3 + $0x54] sm:$0xf] %vm540, %v433
  %563 = vst.msk [vmem:[%s3 + $0x58] sm:$0xf] %vm540, %v434
  %564 = vst.msk [vmem:[%s3 + $0x5c] sm:$0xf] %vm540, %v435
  %565 = vst.msk [vmem:[%s3 + $0x60] sm:$0xf] %vm540, %v436
  %566 = vst.msk [vmem:[%s3 + $0x64] sm:$0xf] %vm540, %v437
  %567 = vst.msk [vmem:[%s3 + $0x68] sm:$0xf] %vm540, %v438
  %568 = vst.msk [vmem:[%s3 + $0x6c] sm:$0xf] %vm540, %v439
  %569 = vst.msk [vmem:[%s3 + $0x70] sm:$0xf] %vm540, %v440
  %570 = vst.msk [vmem:[%s3 + $0x74] sm:$0xf] %vm540, %v441
  %571 = vst.msk [vmem:[%s3 + $0x78] sm:$0xf] %vm540, %v442
  %572 = vst.msk [vmem:[%s3 + $0x7c] sm:$0xf] %vm540, %v443
  %573 = vst.msk [vmem:[%s3 + $0x80] sm:$0xf] %vm540, %v444
  %574 = vst.msk [vmem:[%s3 + $0x84] sm:$0xf] %vm540, %v445
  %575 = vst.msk [vmem:[%s3 + $0x88] sm:$0xf] %vm540, %v446
  %576 = vst.msk [vmem:[%s3 + $0x8c] sm:$0xf] %vm540, %v447
  %577 = vst.msk [vmem:[%s3 + $0x90] sm:$0xf] %vm540, %v448
  %578 = vst.msk [vmem:[%s3 + $0x94] sm:$0xf] %vm540, %v449
  %579 = vst.msk [vmem:[%s3 + $0x98] sm:$0xf] %vm540, %v450
  %580 = vst.msk [vmem:[%s3 + $0x9c] sm:$0xf] %vm540, %v451
  %581 = vst.msk [vmem:[%s3 + $0xa0] sm:$0xf] %vm540, %v452
  %582 = vst.msk [vmem:[%s3 + $0xa4] sm:$0xf] %vm540, %v453
  %583 = vst.msk [vmem:[%s3 + $0xa8] sm:$0xf] %vm540, %v454
  %584 = vst.msk [vmem:[%s3 + $0xac] sm:$0xf] %vm540, %v455
  %585 = vst.msk [vmem:[%s3 + $0xb0] sm:$0xf] %vm540, %v456
  %586 = vst.msk [vmem:[%s3 + $0xb4] sm:$0xf] %vm540, %v457
  %587 = vst.msk [vmem:[%s3 + $0xb8] sm:$0xf] %vm540, %v458
  %588 = vst.msk [vmem:[%s3 + $0xbc] sm:$0xf] %vm540, %v459
  %589 = vst.msk [vmem:[%s3 + $0xc0] sm:$0xf] %vm540, %v460
  %590 = vst.msk [vmem:[%s3 + $0xc4] sm:$0xf] %vm540, %v461
  %591 = vst.msk [vmem:[%s3 + $0xc8] sm:$0xf] %vm540, %v462
  %592 = vst.msk [vmem:[%s3 + $0xcc] sm:$0xf] %vm540, %v463
  %593 = vst.msk [vmem:[%s3 + $0xd0] sm:$0xf] %vm540, %v464
  %594 = vst.msk [vmem:[%s3 + $0xd4] sm:$0xf] %vm540, %v465
  %595 = vst.msk [vmem:[%s3 + $0xd8] sm:$0xf] %vm540, %v466
  %596 = vst.msk [vmem:[%s3 + $0xdc] sm:$0xf] %vm540, %v467
  %597 = vst.msk [vmem:[%s3 + $0xe0] sm:$0xf] %vm540, %v468
  %598 = vst.msk [vmem:[%s3 + $0xe4] sm:$0xf] %vm540, %v469
  %599 = vst.msk [vmem:[%s3 + $0xe8] sm:$0xf] %vm540, %v470
  %600 = vst.msk [vmem:[%s3 + $0xec] sm:$0xf] %vm540, %v471
  %601 = vst.msk [vmem:[%s3 + $0xf0] sm:$0xf] %vm540, %v472
  %602 = vst.msk [vmem:[%s3 + $0xf4] sm:$0xf] %vm540, %v473
  %603 = vst.msk [vmem:[%s3 + $0xf8] sm:$0xf] %vm540, %v474
  %604 = vst.msk [vmem:[%s3 + $0xfc] sm:$0xf] %vm540, %v475
  // Predicated region
  $region14: #{spatial_path.9} parent=0 // pred_check
    _
  $region15: #{spatial_path.9} parent=0 // pred_check_branch
    %606 = sbr.rel (0) target = $region17
  $region16: #{spatial_path.9} parent=0 // pred_region
    _
  $region17: #{spatial_path.9} parent=0 // pred_fallthru
    _
  // Predicated region
  $region18: #{spatial_path.9} parent=0 // pred_check
    _
  $region19: #{spatial_path.9} parent=0 // pred_check_branch
    %608 = sbr.rel (0) target = $region21
  $region20: #{spatial_path.9} parent=0 // pred_region
    _
  $region21: #{spatial_path.9} parent=0 // pred_fallthru
    _

// kernel: spatial_path.8
$region0: #{spatial_path.8}
  #allocation0 [shape = 'u32[]', space=smem, size = 0x4, offset = 0x4, fixed_abs, tag = 'smem constant byte address 0x4 - core index']
  #allocation1 [shape = 'u32[144,128]{1,0:T(1,128)}', space=vmem, size = 0x12000, scoped, tag = 'internal scratch']
  %s0 = inlined_call_operand.vmem [shape: bf16[512,256], index: 0, kind: input, shape index: {}]
  %s1 = inlined_call_operand.vmem [shape: bf16[256,64], index: 1, kind: input, shape index: {}]
  %s2 = inlined_call_operand.vmem [shape: f32[512,64], index: 2, kind: output, shape index: {0}]
  %s3 = inlined_call_operand.vmem [shape: f32[1,2,64], index: 3, kind: output, shape index: {1}]
  %4 = xla_tuple %s2, %s3
  %s5 = sld [smem:[#allocation0]]
  $region26: #{spatial_path.8} parent=0
    _
  %s7 = ssub.s32 1, %s5
  %s8 = scalar_select 0, %s7, %s5
  // Predicated region
  $region2: #{spatial_path.8} parent=0 // pred_check
    _
  $region3: #{spatial_path.8} parent=0 // pred_check_branch
    %10 = sbr.rel (0) target = $region5
  $region4: #{spatial_path.8} parent=0 // pred_region
    _
  $region5: #{spatial_path.8} parent=0 // pred_fallthru
    _
  // Predicated region
  $region6: #{spatial_path.8} parent=0 // pred_check
    _
  $region7: #{spatial_path.8} parent=0 // pred_check_branch
    %12 = sbr.rel (0) target = $region9
  $region8: #{spatial_path.8} parent=0 // pred_region
    _
  $region9: #{spatial_path.8} parent=0 // pred_fallthru
    _
  %v14 = vld [vmem:[%s0] sm:$0xff]
  %v15 = vld [vmem:[%s0 + $0x8] sm:$0xff]
  %v16 = vld [vmem:[%s0 + $0x10] sm:$0xff]
  %v17 = vld [vmem:[%s0 + $0x18] sm:$0xff]
  %v18 = vld [vmem:[%s0 + $0x20] sm:$0xff]
  %v19 = vld [vmem:[%s0 + $0x28] sm:$0xff]
  %v20 = vld [vmem:[%s0 + $0x30] sm:$0xff]
  %v21 = vld [vmem:[%s0 + $0x38] sm:$0xff]
  %v22 = vld [vmem:[%s0 + $0x40] sm:$0xff]
  %v23 = vld [vmem:[%s0 + $0x48] sm:$0xff]
  %v24 = vld [vmem:[%s0 + $0x50] sm:$0xff]
  %v25 = vld [vmem:[%s0 + $0x58] sm:$0xff]
  %v26 = vld [vmem:[%s0 + $0x60] sm:$0xff]
  %v27 = vld [vmem:[%s0 + $0x68] sm:$0xff]
  %v28 = vld [vmem:[%s0 + $0x70] sm:$0xff]
  %v29 = vld [vmem:[%s0 + $0x78] sm:$0xff]
  %v30 = vld [vmem:[%s0 + $0x80] sm:$0xff]
  %v31 = vld [vmem:[%s0 + $0x88] sm:$0xff]
  %v32 = vld [vmem:[%s0 + $0x90] sm:$0xff]
  %v33 = vld [vmem:[%s0 + $0x98] sm:$0xff]
  %v34 = vld [vmem:[%s0 + $0xa0] sm:$0xff]
  %v35 = vld [vmem:[%s0 + $0xa8] sm:$0xff]
  %v36 = vld [vmem:[%s0 + $0xb0] sm:$0xff]
  %v37 = vld [vmem:[%s0 + $0xb8] sm:$0xff]
  %v38 = vld [vmem:[%s0 + $0xc0] sm:$0xff]
  %v39 = vld [vmem:[%s0 + $0xc8] sm:$0xff]
  %v40 = vld [vmem:[%s0 + $0xd0] sm:$0xff]
  %v41 = vld [vmem:[%s0 + $0xd8] sm:$0xff]
  %v42 = vld [vmem:[%s0 + $0xe0] sm:$0xff]
  %v43 = vld [vmem:[%s0 + $0xe8] sm:$0xff]
  %v44 = vld [vmem:[%s0 + $0xf0] sm:$0xff]
  %v45 = vld [vmem:[%s0 + $0xf8] sm:$0xff]
  %v46 = vld [vmem:[%s0 + $0x100] sm:$0xff]
  %v47 = vld [vmem:[%s0 + $0x108] sm:$0xff]
  %v48 = vld [vmem:[%s0 + $0x110] sm:$0xff]
  %v49 = vld [vmem:[%s0 + $0x118] sm:$0xff]
  %v50 = vld [vmem:[%s0 + $0x120] sm:$0xff]
  %v51 = vld [vmem:[%s0 + $0x128] sm:$0xff]
  %v52 = vld [vmem:[%s0 + $0x130] sm:$0xff]
  %v53 = vld [vmem:[%s0 + $0x138] sm:$0xff]
  %v54 = vld [vmem:[%s0 + $0x140] sm:$0xff]
  %v55 = vld [vmem:[%s0 + $0x148] sm:$0xff]
  %v56 = vld [vmem:[%s0 + $0x150] sm:$0xff]
  %v57 = vld [vmem:[%s0 + $0x158] sm:$0xff]
  %v58 = vld [vmem:[%s0 + $0x160] sm:$0xff]
  %v59 = vld [vmem:[%s0 + $0x168] sm:$0xff]
  %v60 = vld [vmem:[%s0 + $0x170] sm:$0xff]
  %v61 = vld [vmem:[%s0 + $0x178] sm:$0xff]
  %v62 = vld [vmem:[%s0 + $0x180] sm:$0xff]
  %v63 = vld [vmem:[%s0 + $0x188] sm:$0xff]
  %v64 = vld [vmem:[%s0 + $0x190] sm:$0xff]
  %v65 = vld [vmem:[%s0 + $0x198] sm:$0xff]
  %v66 = vld [vmem:[%s0 + $0x1a0] sm:$0xff]
  %v67 = vld [vmem:[%s0 + $0x1a8] sm:$0xff]
  %v68 = vld [vmem:[%s0 + $0x1b0] sm:$0xff]
  %v69 = vld [vmem:[%s0 + $0x1b8] sm:$0xff]
  %v70 = vld [vmem:[%s0 + $0x1c0] sm:$0xff]
  %v71 = vld [vmem:[%s0 + $0x1c8] sm:$0xff]
  %v72 = vld [vmem:[%s0 + $0x1d0] sm:$0xff]
  %v73 = vld [vmem:[%s0 + $0x1d8] sm:$0xff]
  %v74 = vld [vmem:[%s0 + $0x1e0] sm:$0xff]
  %v75 = vld [vmem:[%s0 + $0x1e8] sm:$0xff]
  %v76 = vld [vmem:[%s0 + $0x1f0] sm:$0xff]
  %v77 = vld [vmem:[%s0 + $0x1f8] sm:$0xff]
  %v78 = vld [vmem:[%s1] sm:$0xf]
  %v79 = vld [vmem:[%s1 + $0x4] sm:$0xf]
  %v80 = vld [vmem:[%s1 + $0x8] sm:$0xf]
  %v81 = vld [vmem:[%s1 + $0xc] sm:$0xf]
  %v82 = vld [vmem:[%s1 + $0x10] sm:$0xf]
  %v83 = vld [vmem:[%s1 + $0x14] sm:$0xf]
  %v84 = vld [vmem:[%s1 + $0x18] sm:$0xf]
  %v85 = vld [vmem:[%s1 + $0x1c] sm:$0xf]
  %v86 = vld [vmem:[%s1 + $0x20] sm:$0xf]
  %v87 = vld [vmem:[%s1 + $0x24] sm:$0xf]
  %v88 = vld [vmem:[%s1 + $0x28] sm:$0xf]
  %v89 = vld [vmem:[%s1 + $0x2c] sm:$0xf]
  %v90 = vld [vmem:[%s1 + $0x30] sm:$0xf]
  %v91 = vld [vmem:[%s1 + $0x34] sm:$0xf]
  %v92 = vld [vmem:[%s1 + $0x38] sm:$0xf]
  %v93 = vld [vmem:[%s1 + $0x3c] sm:$0xf]
  %v94 = vld [vmem:[%s1 + $0x40] sm:$0xf]
  %v95 = vld [vmem:[%s1 + $0x44] sm:$0xf]
  %v96 = vld [vmem:[%s1 + $0x48] sm:$0xf]
  %v97 = vld [vmem:[%s1 + $0x4c] sm:$0xf]
  %v98 = vld [vmem:[%s1 + $0x50] sm:$0xf]
  %v99 = vld [vmem:[%s1 + $0x54] sm:$0xf]
  %v100 = vld [vmem:[%s1 + $0x58] sm:$0xf]
  %v101 = vld [vmem:[%s1 + $0x5c] sm:$0xf]
  %v102 = vld [vmem:[%s1 + $0x60] sm:$0xf]
  %v103 = vld [vmem:[%s1 + $0x64] sm:$0xf]
  %v104 = vld [vmem:[%s1 + $0x68] sm:$0xf]
  %v105 = vld [vmem:[%s1 + $0x6c] sm:$0xf]
  %v106 = vld [vmem:[%s1 + $0x70] sm:$0xf]
  %v107 = vld [vmem:[%s1 + $0x74] sm:$0xf]
  %v108 = vld [vmem:[%s1 + $0x78] sm:$0xf]
  %v109 = vld [vmem:[%s1 + $0x7c] sm:$0xf]
  %v174 = vunpack.c.l.b16 %v14
  %v175 = vunpack.c.h.b16 %v14
  %v176 = vunpack.c.l.b16 %v15
  %v177 = vunpack.c.h.b16 %v15
  %v178 = vunpack.c.l.b16 %v16
  %v179 = vunpack.c.h.b16 %v16
  %v180 = vunpack.c.l.b16 %v17
  %v181 = vunpack.c.h.b16 %v17
  %v182 = vunpack.c.l.b16 %v18
  %v183 = vunpack.c.h.b16 %v18
  %v184 = vunpack.c.l.b16 %v19
  %v185 = vunpack.c.h.b16 %v19
  %v186 = vunpack.c.l.b16 %v20
  %v187 = vunpack.c.h.b16 %v20
  %v188 = vunpack.c.l.b16 %v21
  %v189 = vunpack.c.h.b16 %v21
  %v190 = vunpack.c.l.b16 %v22
  %v191 = vunpack.c.h.b16 %v22
  %v192 = vunpack.c.l.b16 %v23
  %v193 = vunpack.c.h.b16 %v23
  %v194 = vunpack.c.l.b16 %v24
  %v195 = vunpack.c.h.b16 %v24
  %v196 = vunpack.c.l.b16 %v25
  %v197 = vunpack.c.h.b16 %v25
  %v198 = vunpack.c.l.b16 %v26
  %v199 = vunpack.c.h.b16 %v26
  %v200 = vunpack.c.l.b16 %v27
  %v201 = vunpack.c.h.b16 %v27
  %v202 = vunpack.c.l.b16 %v28
  %v203 = vunpack.c.h.b16 %v28
  %v204 = vunpack.c.l.b16 %v29
  %v205 = vunpack.c.h.b16 %v29
  %v206 = vunpack.c.l.b16 %v30
  %v207 = vunpack.c.h.b16 %v30
  %v208 = vunpack.c.l.b16 %v31
  %v209 = vunpack.c.h.b16 %v31
  %v210 = vunpack.c.l.b16 %v32
  %v211 = vunpack.c.h.b16 %v32
  %v212 = vunpack.c.l.b16 %v33
  %v213 = vunpack.c.h.b16 %v33
  %v214 = vunpack.c.l.b16 %v34
  %v215 = vunpack.c.h.b16 %v34
  %v216 = vunpack.c.l.b16 %v35
  %v217 = vunpack.c.h.b16 %v35
  %v218 = vunpack.c.l.b16 %v36
  %v219 = vunpack.c.h.b16 %v36
  %v220 = vunpack.c.l.b16 %v37
  %v221 = vunpack.c.h.b16 %v37
  %v222 = vunpack.c.l.b16 %v38
  %v223 = vunpack.c.h.b16 %v38
  %v224 = vunpack.c.l.b16 %v39
  %v225 = vunpack.c.h.b16 %v39
  %v226 = vunpack.c.l.b16 %v40
  %v227 = vunpack.c.h.b16 %v40
  %v228 = vunpack.c.l.b16 %v41
  %v229 = vunpack.c.h.b16 %v41
  %v230 = vunpack.c.l.b16 %v42
  %v231 = vunpack.c.h.b16 %v42
  %v232 = vunpack.c.l.b16 %v43
  %v233 = vunpack.c.h.b16 %v43
  %v234 = vunpack.c.l.b16 %v44
  %v235 = vunpack.c.h.b16 %v44
  %v236 = vunpack.c.l.b16 %v45
  %v237 = vunpack.c.h.b16 %v45
  %v238 = vunpack.c.l.b16 %v46
  %v239 = vunpack.c.h.b16 %v46
  %v240 = vunpack.c.l.b16 %v47
  %v241 = vunpack.c.h.b16 %v47
  %v242 = vunpack.c.l.b16 %v48
  %v243 = vunpack.c.h.b16 %v48
  %v244 = vunpack.c.l.b16 %v49
  %v245 = vunpack.c.h.b16 %v49
  %v246 = vunpack.c.l.b16 %v50
  %v247 = vunpack.c.h.b16 %v50
  %v248 = vunpack.c.l.b16 %v51
  %v249 = vunpack.c.h.b16 %v51
  %v250 = vunpack.c.l.b16 %v52
  %v251 = vunpack.c.h.b16 %v52
  %v252 = vunpack.c.l.b16 %v53
  %v253 = vunpack.c.h.b16 %v53
  %v254 = vunpack.c.l.b16 %v54
  %v255 = vunpack.c.h.b16 %v54
  %v256 = vunpack.c.l.b16 %v55
  %v257 = vunpack.c.h.b16 %v55
  %v258 = vunpack.c.l.b16 %v56
  %v259 = vunpack.c.h.b16 %v56
  %v260 = vunpack.c.l.b16 %v57
  %v261 = vunpack.c.h.b16 %v57
  %v262 = vunpack.c.l.b16 %v58
  %v263 = vunpack.c.h.b16 %v58
  %v264 = vunpack.c.l.b16 %v59
  %v265 = vunpack.c.h.b16 %v59
  %v266 = vunpack.c.l.b16 %v60
  %v267 = vunpack.c.h.b16 %v60
  %v268 = vunpack.c.l.b16 %v61
  %v269 = vunpack.c.h.b16 %v61
  %v270 = vunpack.c.l.b16 %v62
  %v271 = vunpack.c.h.b16 %v62
  %v272 = vunpack.c.l.b16 %v63
  %v273 = vunpack.c.h.b16 %v63
  %v274 = vunpack.c.l.b16 %v64
  %v275 = vunpack.c.h.b16 %v64
  %v276 = vunpack.c.l.b16 %v65
  %v277 = vunpack.c.h.b16 %v65
  %v278 = vunpack.c.l.b16 %v66
  %v279 = vunpack.c.h.b16 %v66
  %v280 = vunpack.c.l.b16 %v67
  %v281 = vunpack.c.h.b16 %v67
  %v282 = vunpack.c.l.b16 %v68
  %v283 = vunpack.c.h.b16 %v68
  %v284 = vunpack.c.l.b16 %v69
  %v285 = vunpack.c.h.b16 %v69
  %v286 = vunpack.c.l.b16 %v70
  %v287 = vunpack.c.h.b16 %v70
  %v288 = vunpack.c.l.b16 %v71
  %v289 = vunpack.c.h.b16 %v71
  %v290 = vunpack.c.l.b16 %v72
  %v291 = vunpack.c.h.b16 %v72
  %v292 = vunpack.c.l.b16 %v73
  %v293 = vunpack.c.h.b16 %v73
  %v294 = vunpack.c.l.b16 %v74
  %v295 = vunpack.c.h.b16 %v74
  %v296 = vunpack.c.l.b16 %v75
  %v297 = vunpack.c.h.b16 %v75
  %v298 = vunpack.c.l.b16 %v76
  %v299 = vunpack.c.h.b16 %v76
  %v300 = vunpack.c.l.b16 %v77
  %v301 = vunpack.c.h.b16 %v77
  %v302 = vpack.c.b16 %v176, %v174
  %v303 = vpack.c.b16 %v177, %v175
  %v304 = vpack.c.b16 %v180, %v178
  %v305 = vpack.c.b16 %v181, %v179
  %v306 = vpack.c.b16 %v184, %v182
  %v307 = vpack.c.b16 %v185, %v183
  %v308 = vpack.c.b16 %v188, %v186
  %v309 = vpack.c.b16 %v189, %v187
  %v310 = vpack.c.b16 %v192, %v190
  %v311 = vpack.c.b16 %v193, %v191
  %v312 = vpack.c.b16 %v196, %v194
  %v313 = vpack.c.b16 %v197, %v195
  %v314 = vpack.c.b16 %v200, %v198
  %v315 = vpack.c.b16 %v201, %v199
  %v316 = vpack.c.b16 %v204, %v202
  %v317 = vpack.c.b16 %v205, %v203
  %v318 = vpack.c.b16 %v208, %v206
  %v319 = vpack.c.b16 %v209, %v207
  %v320 = vpack.c.b16 %v212, %v210
  %v321 = vpack.c.b16 %v213, %v211
  %v322 = vpack.c.b16 %v216, %v214
  %v323 = vpack.c.b16 %v217, %v215
  %v324 = vpack.c.b16 %v220, %v218
  %v325 = vpack.c.b16 %v221, %v219
  %v326 = vpack.c.b16 %v224, %v222
  %v327 = vpack.c.b16 %v225, %v223
  %v328 = vpack.c.b16 %v228, %v226
  %v329 = vpack.c.b16 %v229, %v227
  %v330 = vpack.c.b16 %v232, %v230
  %v331 = vpack.c.b16 %v233, %v231
  %v332 = vpack.c.b16 %v236, %v234
  %v333 = vpack.c.b16 %v237, %v235
  %v334 = vpack.c.b16 %v240, %v238
  %v335 = vpack.c.b16 %v241, %v239
  %v336 = vpack.c.b16 %v244, %v242
  %v337 = vpack.c.b16 %v245, %v243
  %v338 = vpack.c.b16 %v248, %v246
  %v339 = vpack.c.b16 %v249, %v247
  %v340 = vpack.c.b16 %v252, %v250
  %v341 = vpack.c.b16 %v253, %v251
  %v342 = vpack.c.b16 %v256, %v254
  %v343 = vpack.c.b16 %v257, %v255
  %v344 = vpack.c.b16 %v260, %v258
  %v345 = vpack.c.b16 %v261, %v259
  %v346 = vpack.c.b16 %v264, %v262
  %v347 = vpack.c.b16 %v265, %v263
  %v348 = vpack.c.b16 %v268, %v266
  %v349 = vpack.c.b16 %v269, %v267
  %v350 = vpack.c.b16 %v272, %v270
  %v351 = vpack.c.b16 %v273, %v271
  %v352 = vpack.c.b16 %v276, %v274
  %v353 = vpack.c.b16 %v277, %v275
  %v354 = vpack.c.b16 %v280, %v278
  %v355 = vpack.c.b16 %v281, %v279
  %v356 = vpack.c.b16 %v284, %v282
  %v357 = vpack.c.b16 %v285, %v283
  %v358 = vpack.c.b16 %v288, %v286
  %v359 = vpack.c.b16 %v289, %v287
  %v360 = vpack.c.b16 %v292, %v290
  %v361 = vpack.c.b16 %v293, %v291
  %v362 = vpack.c.b16 %v296, %v294
  %v363 = vpack.c.b16 %v297, %v295
  %v364 = vpack.c.b16 %v300, %v298
  %v365 = vpack.c.b16 %v301, %v299
  %v462 = vunpack.c.l.b16 %v78
  %v463 = vunpack.c.l.b16 %v79
  %v464 = vunpack.c.l.b16 %v80
  %v465 = vunpack.c.l.b16 %v81
  %v466 = vunpack.c.l.b16 %v82
  %v467 = vunpack.c.l.b16 %v83
  %v468 = vunpack.c.l.b16 %v84
  %v469 = vunpack.c.l.b16 %v85
  %v470 = vunpack.c.l.b16 %v86
  %v471 = vunpack.c.l.b16 %v87
  %v472 = vunpack.c.l.b16 %v88
  %v473 = vunpack.c.l.b16 %v89
  %v474 = vunpack.c.l.b16 %v90
  %v475 = vunpack.c.l.b16 %v91
  %v476 = vunpack.c.l.b16 %v92
  %v477 = vunpack.c.l.b16 %v93
  %v478 = vunpack.c.l.b16 %v94
  %v479 = vunpack.c.l.b16 %v95
  %v480 = vunpack.c.l.b16 %v96
  %v481 = vunpack.c.l.b16 %v97
  %v482 = vunpack.c.l.b16 %v98
  %v483 = vunpack.c.l.b16 %v99
  %v484 = vunpack.c.l.b16 %v100
  %v485 = vunpack.c.l.b16 %v101
  %v486 = vunpack.c.l.b16 %v102
  %v487 = vunpack.c.l.b16 %v103
  %v488 = vunpack.c.l.b16 %v104
  %v489 = vunpack.c.l.b16 %v105
  %v490 = vunpack.c.l.b16 %v106
  %v491 = vunpack.c.l.b16 %v107
  %v492 = vunpack.c.l.b16 %v108
  %v493 = vunpack.c.l.b16 %v109
  %v494 = vpack.c.b16 %v463, %v462
  %v495 = vpack.c.b16 %v465, %v464
  %v496 = vpack.c.b16 %v467, %v466
  %v497 = vpack.c.b16 %v469, %v468
  %v498 = vpack.c.b16 %v471, %v470
  %v499 = vpack.c.b16 %v473, %v472
  %v500 = vpack.c.b16 %v475, %v474
  %v501 = vpack.c.b16 %v477, %v476
  %v502 = vpack.c.b16 %v479, %v478
  %v503 = vpack.c.b16 %v481, %v480
  %v504 = vpack.c.b16 %v483, %v482
  %v505 = vpack.c.b16 %v485, %v484
  %v506 = vpack.c.b16 %v487, %v486
  %v507 = vpack.c.b16 %v489, %v488
  %v508 = vpack.c.b16 %v491, %v490
  %v509 = vpack.c.b16 %v493, %v492
  %526 = vmatprep.subr.bf16.mxu0 0
  %527 = vmatpush1.bf16.msra.mxu0 %v501
  %528 = vmatprep.subr.bf16.mxu0 0
  %529 = vmatpush1.bf16.msra.mxu0 %v500
  %530 = vmatprep.subr.bf16.mxu0 0
  %531 = vmatpush1.bf16.msra.mxu0 %v499
  %532 = vmatprep.subr.bf16.mxu0 0
  %533 = vmatpush1.bf16.msra.mxu0 %v498
  %534 = vmatprep.subr.bf16.mxu0 0
  %535 = vmatpush1.bf16.msra.mxu0 %v497
  %536 = vmatprep.subr.bf16.mxu0 0
  %537 = vmatpush1.bf16.msra.mxu0 %v496
  %538 = vmatprep.subr.bf16.mxu0 0
  %539 = vmatpush1.bf16.msra.mxu0 %v495
  %540 = vmatprep.subr.bf16.mxu0 0
  %541 = vmatpush1.bf16.msra.mxu0 %v494
  %542 = vmatprep.subr.bf16.mxu0 0
  %543 = vmatpush2.bf16.msra.mxu0 %v509
  %544 = vmatprep.subr.bf16.mxu0 0
  %545 = vmatpush2.bf16.msra.mxu0 %v508
  %546 = vmatprep.subr.bf16.mxu0 0
  %547 = vmatpush2.bf16.msra.mxu0 %v507
  %548 = vmatprep.subr.bf16.mxu0 0
  %549 = vmatpush2.bf16.msra.mxu0 %v506
  %550 = vmatprep.subr.bf16.mxu0 0
  %551 = vmatpush2.bf16.msra.mxu0 %v505
  %552 = vmatprep.subr.bf16.mxu0 0
  %553 = vmatpush2.bf16.msra.mxu0 %v504
  %554 = vmatprep.subr.bf16.mxu0 0
  %555 = vmatpush2.bf16.msra.mxu0 %v503
  %556 = vmatprep.subr.bf16.mxu0 0
  %557 = vmatpush2.bf16.msra.mxu0 %v502
  %558 = vmatprep.mubr.bf16.mxu0 %v303
  %559 = vmatmul.mubr.bf16.gmra.mxu0 %v302
  %v560 = vpop.f32.mrf.mxu0
  %v561 = vadd.f32 0.0, %v560
  %v562 = vpop.f32.mrf.mxu0
  %v563 = vpop.f32.mrf.mxu0
  %v564 = vadd.f32 0.0, %v563
  %v565 = vpop.f32.mrf.mxu0
  %566 = vmatprep.mubr.bf16.mxu0 %v305
  %567 = vmatmul.mubr.bf16.gmra.mxu0 %v304
  %v568 = vpop.f32.mrf.mxu0
  %v569 = vadd.f32 0.0, %v568
  %v570 = vpop.f32.mrf.mxu0
  %v571 = vpop.f32.mrf.mxu0
  %v572 = vadd.f32 0.0, %v571
  %v573 = vpop.f32.mrf.mxu0
  %574 = vmatprep.mubr.bf16.mxu0 %v307
  %575 = vmatmul.mubr.bf16.gmra.mxu0 %v306
  %v576 = vpop.f32.mrf.mxu0
  %v577 = vadd.f32 0.0, %v576
  %v578 = vpop.f32.mrf.mxu0
  %v579 = vpop.f32.mrf.mxu0
  %v580 = vadd.f32 0.0, %v579
  %v581 = vpop.f32.mrf.mxu0
  %582 = vmatprep.mubr.bf16.mxu0 %v309
  %583 = vmatmul.mubr.bf16.gmra.mxu0 %v308
  %v584 = vpop.f32.mrf.mxu0
  %v585 = vadd.f32 0.0, %v584
  %v586 = vpop.f32.mrf.mxu0
  %v587 = vpop.f32.mrf.mxu0
  %v588 = vadd.f32 0.0, %v587
  %v589 = vpop.f32.mrf.mxu0
  %590 = vmatprep.mubr.bf16.mxu0 %v311
  %591 = vmatmul.mubr.bf16.gmra.mxu0 %v310
  %v592 = vpop.f32.mrf.mxu0
  %v593 = vadd.f32 0.0, %v592
  %v594 = vpop.f32.mrf.mxu0
  %v595 = vpop.f32.mrf.mxu0
  %v596 = vadd.f32 0.0, %v595
  %v597 = vpop.f32.mrf.mxu0
  %598 = vmatprep.mubr.bf16.mxu0 %v313
  %599 = vmatmul.mubr.bf16.gmra.mxu0 %v312
  %v600 = vpop.f32.mrf.mxu0
  %v601 = vadd.f32 0.0, %v600
  %v602 = vpop.f32.mrf.mxu0
  %v603 = vpop.f32.mrf.mxu0
  %v604 = vadd.f32 0.0, %v603
  %v605 = vpop.f32.mrf.mxu0
  %606 = vmatprep.mubr.bf16.mxu0 %v315
  %607 = vmatmul.mubr.bf16.gmra.mxu0 %v314
  %v608 = vpop.f32.mrf.mxu0
  %v609 = vadd.f32 0.0, %v608
  %v610 = vpop.f32.mrf.mxu0
  %v611 = vpop.f32.mrf.mxu0
  %v612 = vadd.f32 0.0, %v611
  %v613 = vpop.f32.mrf.mxu0
  %614 = vmatprep.mubr.bf16.mxu0 %v317
  %615 = vmatmul.mubr.bf16.gmra.mxu0 %v316
  %v616 = vpop.f32.mrf.mxu0
  %v617 = vadd.f32 0.0, %v616
  %v618 = vpop.f32.mrf.mxu0
  %v619 = vpop.f32.mrf.mxu0
  %v620 = vadd.f32 0.0, %v619
  %v621 = vpop.f32.mrf.mxu0
  %622 = vmatprep.mubr.bf16.mxu0 %v319
  %623 = vmatmul.mubr.bf16.gmra.mxu0 %v318
  %v624 = vpop.f32.mrf.mxu0
  %v625 = vadd.f32 0.0, %v624
  %v626 = vpop.f32.mrf.mxu0
  %v627 = vpop.f32.mrf.mxu0
  %v628 = vadd.f32 0.0, %v627
  %v629 = vpop.f32.mrf.mxu0
  %630 = vmatprep.mubr.bf16.mxu0 %v321
  %631 = vmatmul.mubr.bf16.gmra.mxu0 %v320
  %v632 = vpop.f32.mrf.mxu0
  %v633 = vadd.f32 0.0, %v632
  %v634 = vpop.f32.mrf.mxu0
  %v635 = vpop.f32.mrf.mxu0
  %v636 = vadd.f32 0.0, %v635
  %v637 = vpop.f32.mrf.mxu0
  %638 = vmatprep.mubr.bf16.mxu0 %v323
  %639 = vmatmul.mubr.bf16.gmra.mxu0 %v322
  %v640 = vpop.f32.mrf.mxu0
  %v641 = vadd.f32 0.0, %v640
  %v642 = vpop.f32.mrf.mxu0
  %v643 = vpop.f32.mrf.mxu0
  %v644 = vadd.f32 0.0, %v643
  %v645 = vpop.f32.mrf.mxu0
  %646 = vmatprep.mubr.bf16.mxu0 %v325
  %647 = vmatmul.mubr.bf16.gmra.mxu0 %v324
  %v648 = vpop.f32.mrf.mxu0
  %v649 = vadd.f32 0.0, %v648
  %v650 = vpop.f32.mrf.mxu0
  %v651 = vpop.f32.mrf.mxu0
  %v652 = vadd.f32 0.0, %v651
  %v653 = vpop.f32.mrf.mxu0
  %654 = vmatprep.mubr.bf16.mxu0 %v327
  %655 = vmatmul.mubr.bf16.gmra.mxu0 %v326
  %v656 = vpop.f32.mrf.mxu0
  %v657 = vadd.f32 0.0, %v656
  %v658 = vpop.f32.mrf.mxu0
  %v659 = vpop.f32.mrf.mxu0
  %v660 = vadd.f32 0.0, %v659
  %v661 = vpop.f32.mrf.mxu0
  %662 = vmatprep.mubr.bf16.mxu0 %v329
  %663 = vmatmul.mubr.bf16.gmra.mxu0 %v328
  %v664 = vpop.f32.mrf.mxu0
  %v665 = vadd.f32 0.0, %v664
  %v666 = vpop.f32.mrf.mxu0
  %v667 = vpop.f32.mrf.mxu0
  %v668 = vadd.f32 0.0, %v667
  %v669 = vpop.f32.mrf.mxu0
  %670 = vmatprep.mubr.bf16.mxu0 %v331
  %671 = vmatmul.mubr.bf16.gmra.mxu0 %v330
  %v672 = vpop.f32.mrf.mxu0
  %v673 = vadd.f32 0.0, %v672
  %v674 = vpop.f32.mrf.mxu0
  %v675 = vpop.f32.mrf.mxu0
  %v676 = vadd.f32 0.0, %v675
  %v677 = vpop.f32.mrf.mxu0
  %678 = vmatprep.mubr.bf16.mxu0 %v333
  %679 = vmatmul.mubr.bf16.gmra.mxu0 %v332
  %v680 = vpop.f32.mrf.mxu0
  %v681 = vadd.f32 0.0, %v680
  %v682 = vpop.f32.mrf.mxu0
  %v683 = vpop.f32.mrf.mxu0
  %v684 = vadd.f32 0.0, %v683
  %v685 = vpop.f32.mrf.mxu0
  %686 = vmatprep.mubr.bf16.mxu0 %v335
  %687 = vmatmul.mubr.bf16.gmra.mxu0 %v334
  %v688 = vpop.f32.mrf.mxu0
  %v689 = vadd.f32 0.0, %v688
  %v690 = vpop.f32.mrf.mxu0
  %v691 = vpop.f32.mrf.mxu0
  %v692 = vadd.f32 0.0, %v691
  %v693 = vpop.f32.mrf.mxu0
  %694 = vmatprep.mubr.bf16.mxu0 %v337
  %695 = vmatmul.mubr.bf16.gmra.mxu0 %v336
  %v696 = vpop.f32.mrf.mxu0
  %v697 = vadd.f32 0.0, %v696
  %v698 = vpop.f32.mrf.mxu0
  %v699 = vpop.f32.mrf.mxu0
  %v700 = vadd.f32 0.0, %v699
  %v701 = vpop.f32.mrf.mxu0
  %702 = vmatprep.mubr.bf16.mxu0 %v339
  %703 = vmatmul.mubr.bf16.gmra.mxu0 %v338
  %v704 = vpop.f32.mrf.mxu0
  %v705 = vadd.f32 0.0, %v704
  %v706 = vpop.f32.mrf.mxu0
  %v707 = vpop.f32.mrf.mxu0
  %v708 = vadd.f32 0.0, %v707
  %v709 = vpop.f32.mrf.mxu0
  %710 = vmatprep.mubr.bf16.mxu0 %v341
  %711 = vmatmul.mubr.bf16.gmra.mxu0 %v340
  %v712 = vpop.f32.mrf.mxu0
  %v713 = vadd.f32 0.0, %v712
  %v714 = vpop.f32.mrf.mxu0
  %v715 = vpop.f32.mrf.mxu0
  %v716 = vadd.f32 0.0, %v715
  %v717 = vpop.f32.mrf.mxu0
  %718 = vmatprep.mubr.bf16.mxu0 %v343
  %719 = vmatmul.mubr.bf16.gmra.mxu0 %v342
  %v720 = vpop.f32.mrf.mxu0
  %v721 = vadd.f32 0.0, %v720
  %v722 = vpop.f32.mrf.mxu0
  %v723 = vpop.f32.mrf.mxu0
  %v724 = vadd.f32 0.0, %v723
  %v725 = vpop.f32.mrf.mxu0
  %726 = vmatprep.mubr.bf16.mxu0 %v345
  %727 = vmatmul.mubr.bf16.gmra.mxu0 %v344
  %v728 = vpop.f32.mrf.mxu0
  %v729 = vadd.f32 0.0, %v728
  %v730 = vpop.f32.mrf.mxu0
  %v731 = vpop.f32.mrf.mxu0
  %v732 = vadd.f32 0.0, %v731
  %v733 = vpop.f32.mrf.mxu0
  %734 = vmatprep.mubr.bf16.mxu0 %v347
  %735 = vmatmul.mubr.bf16.gmra.mxu0 %v346
  %v736 = vpop.f32.mrf.mxu0
  %v737 = vadd.f32 0.0, %v736
  %v738 = vpop.f32.mrf.mxu0
  %v739 = vpop.f32.mrf.mxu0
  %v740 = vadd.f32 0.0, %v739
  %v741 = vpop.f32.mrf.mxu0
  %742 = vmatprep.mubr.bf16.mxu0 %v349
  %743 = vmatmul.mubr.bf16.gmra.mxu0 %v348
  %v744 = vpop.f32.mrf.mxu0
  %v745 = vadd.f32 0.0, %v744
  %v746 = vpop.f32.mrf.mxu0
  %v747 = vpop.f32.mrf.mxu0
  %v748 = vadd.f32 0.0, %v747
  %v749 = vpop.f32.mrf.mxu0
  %750 = vmatprep.mubr.bf16.mxu0 %v351
  %751 = vmatmul.mubr.bf16.gmra.mxu0 %v350
  %v752 = vpop.f32.mrf.mxu0
  %v753 = vadd.f32 0.0, %v752
  %v754 = vpop.f32.mrf.mxu0
  %v755 = vpop.f32.mrf.mxu0
  %v756 = vadd.f32 0.0, %v755
  %v757 = vpop.f32.mrf.mxu0
  %758 = vmatprep.mubr.bf16.mxu0 %v353
  %759 = vmatmul.mubr.bf16.gmra.mxu0 %v352
  %v760 = vpop.f32.mrf.mxu0
  %v761 = vadd.f32 0.0, %v760
  %v762 = vpop.f32.mrf.mxu0
  %v763 = vpop.f32.mrf.mxu0
  %v764 = vadd.f32 0.0, %v763
  %v765 = vpop.f32.mrf.mxu0
  %766 = vmatprep.mubr.bf16.mxu0 %v355
  %767 = vmatmul.mubr.bf16.gmra.mxu0 %v354
  %v768 = vpop.f32.mrf.mxu0
  %v769 = vadd.f32 0.0, %v768
  %v770 = vpop.f32.mrf.mxu0
  %v771 = vpop.f32.mrf.mxu0
  %v772 = vadd.f32 0.0, %v771
  %v773 = vpop.f32.mrf.mxu0
  %774 = vmatprep.mubr.bf16.mxu0 %v357
  %775 = vmatmul.mubr.bf16.gmra.mxu0 %v356
  %v776 = vpop.f32.mrf.mxu0
  %v777 = vadd.f32 0.0, %v776
  %v778 = vpop.f32.mrf.mxu0
  %v779 = vpop.f32.mrf.mxu0
  %v780 = vadd.f32 0.0, %v779
  %v781 = vpop.f32.mrf.mxu0
  %782 = vmatprep.mubr.bf16.mxu0 %v359
  %783 = vmatmul.mubr.bf16.gmra.mxu0 %v358
  %v784 = vpop.f32.mrf.mxu0
  %v785 = vadd.f32 0.0, %v784
  %v786 = vpop.f32.mrf.mxu0
  %v787 = vpop.f32.mrf.mxu0
  %v788 = vadd.f32 0.0, %v787
  %v789 = vpop.f32.mrf.mxu0
  %790 = vmatprep.mubr.bf16.mxu0 %v361
  %791 = vmatmul.mubr.bf16.gmra.mxu0 %v360
  %v792 = vpop.f32.mrf.mxu0
  %v793 = vadd.f32 0.0, %v792
  %v794 = vpop.f32.mrf.mxu0
  %v795 = vpop.f32.mrf.mxu0
  %v796 = vadd.f32 0.0, %v795
  %v797 = vpop.f32.mrf.mxu0
  %798 = vmatprep.mubr.bf16.mxu0 %v363
  %799 = vmatmul.mubr.bf16.gmra.mxu0 %v362
  %v800 = vpop.f32.mrf.mxu0
  %v801 = vadd.f32 0.0, %v800
  %v802 = vpop.f32.mrf.mxu0
  %v803 = vpop.f32.mrf.mxu0
  %v804 = vadd.f32 0.0, %v803
  %v805 = vpop.f32.mrf.mxu0
  %806 = vmatprep.mubr.bf16.mxu0 %v365
  %807 = vmatmul.mubr.bf16.gmra.mxu0 %v364
  %v808 = vpop.f32.mrf.mxu0
  %v809 = vadd.f32 0.0, %v808
  %v810 = vpop.f32.mrf.mxu0
  %v811 = vpop.f32.mrf.mxu0
  %v812 = vadd.f32 0.0, %v811
  %v813 = vpop.f32.mrf.mxu0
  %814 = vdwg.mxu0
  %vm815 = vcmask 523264
  %816 = vst.msk [vmem:[%s2] sm:$0xff] %vm815, %v561
  %817 = vst.msk [vmem:[%s2 + $0x8] sm:$0xff] %vm815, %v564
  %818 = vst.msk [vmem:[%s2 + $0x10] sm:$0xff] %vm815, %v569
  %819 = vst.msk [vmem:[%s2 + $0x18] sm:$0xff] %vm815, %v572
  %820 = vst.msk [vmem:[%s2 + $0x20] sm:$0xff] %vm815, %v577
  %821 = vst.msk [vmem:[%s2 + $0x28] sm:$0xff] %vm815, %v580
  %822 = vst.msk [vmem:[%s2 + $0x30] sm:$0xff] %vm815, %v585
  %823 = vst.msk [vmem:[%s2 + $0x38] sm:$0xff] %vm815, %v588
  %824 = vst.msk [vmem:[%s2 + $0x40] sm:$0xff] %vm815, %v593
  %825 = vst.msk [vmem:[%s2 + $0x48] sm:$0xff] %vm815, %v596
  %826 = vst.msk [vmem:[%s2 + $0x50] sm:$0xff] %vm815, %v601
  %827 = vst.msk [vmem:[%s2 + $0x58] sm:$0xff] %vm815, %v604
  %828 = vst.msk [vmem:[%s2 + $0x60] sm:$0xff] %vm815, %v609
  %829 = vst.msk [vmem:[%s2 + $0x68] sm:$0xff] %vm815, %v612
  %830 = vst.msk [vmem:[%s2 + $0x70] sm:$0xff] %vm815, %v617
  %831 = vst.msk [vmem:[%s2 + $0x78] sm:$0xff] %vm815, %v620
  %832 = vst.msk [vmem:[%s2 + $0x80] sm:$0xff] %vm815, %v625
  %833 = vst.msk [vmem:[%s2 + $0x88] sm:$0xff] %vm815, %v628
  %834 = vst.msk [vmem:[%s2 + $0x90] sm:$0xff] %vm815, %v633
  %835 = vst.msk [vmem:[%s2 + $0x98] sm:$0xff] %vm815, %v636
  %836 = vst.msk [vmem:[%s2 + $0xa0] sm:$0xff] %vm815, %v641
  %837 = vst.msk [vmem:[%s2 + $0xa8] sm:$0xff] %vm815, %v644
  %838 = vst.msk [vmem:[%s2 + $0xb0] sm:$0xff] %vm815, %v649
  %839 = vst.msk [vmem:[%s2 + $0xb8] sm:$0xff] %vm815, %v652
  %840 = vst.msk [vmem:[%s2 + $0xc0] sm:$0xff] %vm815, %v657
  %841 = vst.msk [vmem:[%s2 + $0xc8] sm:$0xff] %vm815, %v660
  %842 = vst.msk [vmem:[%s2 + $0xd0] sm:$0xff] %vm815, %v665
  %843 = vst.msk [vmem:[%s2 + $0xd8] sm:$0xff] %vm815, %v668
  %844 = vst.msk [vmem:[%s2 + $0xe0] sm:$0xff] %vm815, %v673
  %845 = vst.msk [vmem:[%s2 + $0xe8] sm:$0xff] %vm815, %v676
  %846 = vst.msk [vmem:[%s2 + $0xf0] sm:$0xff] %vm815, %v681
  %847 = vst.msk [vmem:[%s2 + $0xf8] sm:$0xff] %vm815, %v684
  %848 = vst.msk [vmem:[%s2 + $0x100] sm:$0xff] %vm815, %v689
  %849 = vst.msk [vmem:[%s2 + $0x108] sm:$0xff] %vm815, %v692
  %850 = vst.msk [vmem:[%s2 + $0x110] sm:$0xff] %vm815, %v697
  %851 = vst.msk [vmem:[%s2 + $0x118] sm:$0xff] %vm815, %v700
  %852 = vst.msk [vmem:[%s2 + $0x120] sm:$0xff] %vm815, %v705
  %853 = vst.msk [vmem:[%s2 + $0x128] sm:$0xff] %vm815, %v708
  %854 = vst.msk [vmem:[%s2 + $0x130] sm:$0xff] %vm815, %v713
  %855 = vst.msk [vmem:[%s2 + $0x138] sm:$0xff] %vm815, %v716
  %856 = vst.msk [vmem:[%s2 + $0x140] sm:$0xff] %vm815, %v721
  %857 = vst.msk [vmem:[%s2 + $0x148] sm:$0xff] %vm815, %v724
  %858 = vst.msk [vmem:[%s2 + $0x150] sm:$0xff] %vm815, %v729
  %859 = vst.msk [vmem:[%s2 + $0x158] sm:$0xff] %vm815, %v732
  %860 = vst.msk [vmem:[%s2 + $0x160] sm:$0xff] %vm815, %v737
  %861 = vst.msk [vmem:[%s2 + $0x168] sm:$0xff] %vm815, %v740
  %862 = vst.msk [vmem:[%s2 + $0x170] sm:$0xff] %vm815, %v745
  %863 = vst.msk [vmem:[%s2 + $0x178] sm:$0xff] %vm815, %v748
  %864 = vst.msk [vmem:[%s2 + $0x180] sm:$0xff] %vm815, %v753
  %865 = vst.msk [vmem:[%s2 + $0x188] sm:$0xff] %vm815, %v756
  %866 = vst.msk [vmem:[%s2 + $0x190] sm:$0xff] %vm815, %v761
  %867 = vst.msk [vmem:[%s2 + $0x198] sm:$0xff] %vm815, %v764
  %868 = vst.msk [vmem:[%s2 + $0x1a0] sm:$0xff] %vm815, %v769
  %869 = vst.msk [vmem:[%s2 + $0x1a8] sm:$0xff] %vm815, %v772
  %870 = vst.msk [vmem:[%s2 + $0x1b0] sm:$0xff] %vm815, %v777
  %871 = vst.msk [vmem:[%s2 + $0x1b8] sm:$0xff] %vm815, %v780
  %872 = vst.msk [vmem:[%s2 + $0x1c0] sm:$0xff] %vm815, %v785
  %873 = vst.msk [vmem:[%s2 + $0x1c8] sm:$0xff] %vm815, %v788
  %874 = vst.msk [vmem:[%s2 + $0x1d0] sm:$0xff] %vm815, %v793
  %875 = vst.msk [vmem:[%s2 + $0x1d8] sm:$0xff] %vm815, %v796
  %876 = vst.msk [vmem:[%s2 + $0x1e0] sm:$0xff] %vm815, %v801
  %877 = vst.msk [vmem:[%s2 + $0x1e8] sm:$0xff] %vm815, %v804
  %878 = vst.msk [vmem:[%s2 + $0x1f0] sm:$0xff] %vm815, %v809
  %879 = vst.msk [vmem:[%s2 + $0x1f8] sm:$0xff] %vm815, %v812
  %v880 = vsel %vm815, %v561, 0.0
  %v881 = vsel %vm815, %v564, 0.0
  %v882 = vadd.f32 %v880, %v881
  %v883 = vsel %vm815, %v569, 0.0
  %v884 = vadd.f32 %v882, %v883
  %v885 = vsel %vm815, %v572, 0.0
  %v886 = vadd.f32 %v884, %v885
  %v887 = vsel %vm815, %v577, 0.0
  %v888 = vadd.f32 %v886, %v887
  %v889 = vsel %vm815, %v580, 0.0
  %v890 = vadd.f32 %v888, %v889
  %v891 = vsel %vm815, %v585, 0.0
  %v892 = vadd.f32 %v890, %v891
  %v893 = vsel %vm815, %v588, 0.0
  %v894 = vadd.f32 %v892, %v893
  %v895 = vsel %vm815, %v593, 0.0
  %v896 = vadd.f32 %v894, %v895
  %v897 = vsel %vm815, %v596, 0.0
  %v898 = vadd.f32 %v896, %v897
  %v899 = vsel %vm815, %v601, 0.0
  %v900 = vadd.f32 %v898, %v899
  %v901 = vsel %vm815, %v604, 0.0
  %v902 = vadd.f32 %v900, %v901
  %v903 = vsel %vm815, %v609, 0.0
  %v904 = vadd.f32 %v902, %v903
  %v905 = vsel %vm815, %v612, 0.0
  %v906 = vadd.f32 %v904, %v905
  %v907 = vsel %vm815, %v617, 0.0
  %v908 = vadd.f32 %v906, %v907
  %v909 = vsel %vm815, %v620, 0.0
  %v910 = vadd.f32 %v908, %v909
  %v911 = vsel %vm815, %v625, 0.0
  %v912 = vadd.f32 %v910, %v911
  %v913 = vsel %vm815, %v628, 0.0
  %v914 = vadd.f32 %v912, %v913
  %v915 = vsel %vm815, %v633, 0.0
  %v916 = vadd.f32 %v914, %v915
  %v917 = vsel %vm815, %v636, 0.0
  %v918 = vadd.f32 %v916, %v917
  %v919 = vsel %vm815, %v641, 0.0
  %v920 = vadd.f32 %v918, %v919
  %v921 = vsel %vm815, %v644, 0.0
  %v922 = vadd.f32 %v920, %v921
  %v923 = vsel %vm815, %v649, 0.0
  %v924 = vadd.f32 %v922, %v923
  %v925 = vsel %vm815, %v652, 0.0
  %v926 = vadd.f32 %v924, %v925
  %v927 = vsel %vm815, %v657, 0.0
  %v928 = vadd.f32 %v926, %v927
  %v929 = vsel %vm815, %v660, 0.0
  %v930 = vadd.f32 %v928, %v929
  %v931 = vsel %vm815, %v665, 0.0
  %v932 = vadd.f32 %v930, %v931
  %v933 = vsel %vm815, %v668, 0.0
  %v934 = vadd.f32 %v932, %v933
  %v935 = vsel %vm815, %v673, 0.0
  %v936 = vadd.f32 %v934, %v935
  %v937 = vsel %vm815, %v676, 0.0
  %v938 = vadd.f32 %v936, %v937
  %v939 = vsel %vm815, %v681, 0.0
  %v940 = vadd.f32 %v938, %v939
  %v941 = vsel %vm815, %v684, 0.0
  %v942 = vadd.f32 %v940, %v941
  %v943 = vsel %vm815, %v689, 0.0
  %v944 = vadd.f32 %v942, %v943
  %v945 = vsel %vm815, %v692, 0.0
  %v946 = vadd.f32 %v944, %v945
  %v947 = vsel %vm815, %v697, 0.0
  %v948 = vadd.f32 %v946, %v947
  %v949 = vsel %vm815, %v700, 0.0
  %v950 = vadd.f32 %v948, %v949
  %v951 = vsel %vm815, %v705, 0.0
  %v952 = vadd.f32 %v950, %v951
  %v953 = vsel %vm815, %v708, 0.0
  %v954 = vadd.f32 %v952, %v953
  %v955 = vsel %vm815, %v713, 0.0
  %v956 = vadd.f32 %v954, %v955
  %v957 = vsel %vm815, %v716, 0.0
  %v958 = vadd.f32 %v956, %v957
  %v959 = vsel %vm815, %v721, 0.0
  %v960 = vadd.f32 %v958, %v959
  %v961 = vsel %vm815, %v724, 0.0
  %v962 = vadd.f32 %v960, %v961
  %v963 = vsel %vm815, %v729, 0.0
  %v964 = vadd.f32 %v962, %v963
  %v965 = vsel %vm815, %v732, 0.0
  %v966 = vadd.f32 %v964, %v965
  %v967 = vsel %vm815, %v737, 0.0
  %v968 = vadd.f32 %v966, %v967
  %v969 = vsel %vm815, %v740, 0.0
  %v970 = vadd.f32 %v968, %v969
  %v971 = vsel %vm815, %v745, 0.0
  %v972 = vadd.f32 %v970, %v971
  %v973 = vsel %vm815, %v748, 0.0
  %v974 = vadd.f32 %v972, %v973
  %v975 = vsel %vm815, %v753, 0.0
  %v976 = vadd.f32 %v974, %v975
  %v977 = vsel %vm815, %v756, 0.0
  %v978 = vadd.f32 %v976, %v977
  %v979 = vsel %vm815, %v761, 0.0
  %v980 = vadd.f32 %v978, %v979
  %v981 = vsel %vm815, %v764, 0.0
  %v982 = vadd.f32 %v980, %v981
  %v983 = vsel %vm815, %v769, 0.0
  %v984 = vadd.f32 %v982, %v983
  %v985 = vsel %vm815, %v772, 0.0
  %v986 = vadd.f32 %v984, %v985
  %v987 = vsel %vm815, %v777, 0.0
  %v988 = vadd.f32 %v986, %v987
  %v989 = vsel %vm815, %v780, 0.0
  %v990 = vadd.f32 %v988, %v989
  %v991 = vsel %vm815, %v785, 0.0
  %v992 = vadd.f32 %v990, %v991
  %v993 = vsel %vm815, %v788, 0.0
  %v994 = vadd.f32 %v992, %v993
  %v995 = vsel %vm815, %v793, 0.0
  %v996 = vadd.f32 %v994, %v995
  %v997 = vsel %vm815, %v796, 0.0
  %v998 = vadd.f32 %v996, %v997
  %v999 = vsel %vm815, %v801, 0.0
  %v1000 = vadd.f32 %v998, %v999
  %v1001 = vsel %vm815, %v804, 0.0
  %v1002 = vadd.f32 %v1000, %v1001
  %v1003 = vsel %vm815, %v809, 0.0
  %v1004 = vadd.f32 %v1002, %v1003
  %v1005 = vsel %vm815, %v812, 0.0
  %v1006 = vadd.f32 %v1004, %v1005
  %v1007 = vrot.slane %v1006, 4
  %v1008 = vadd.f32 %v1006, %v1007
  %v1009 = vrot.slane %v1008, 2
  %v1010 = vadd.f32 %v1008, %v1009
  %v1011 = vrot.slane %v1010, 1
  %v1012 = vadd.f32 %v1010, %v1011
  %vm1013 = vcmask 516096
  %1014 = vst.msk [vmem:[%s3] sm:$0x1] %vm1013, %v1012
  %v1015 = vmul.f32 %v561, %v561
  %v1016 = vmul.f32 %v564, %v564
  %v1017 = vmul.f32 %v569, %v569
  %v1018 = vmul.f32 %v572, %v572
  %v1019 = vmul.f32 %v577, %v577
  %v1020 = vmul.f32 %v580, %v580
  %v1021 = vmul.f32 %v585, %v585
  %v1022 = vmul.f32 %v588, %v588
  %v1023 = vmul.f32 %v593, %v593
  %v1024 = vmul.f32 %v596, %v596
  %v1025 = vmul.f32 %v601, %v601
  %v1026 = vmul.f32 %v604, %v604
  %v1027 = vmul.f32 %v609, %v609
  %v1028 = vmul.f32 %v612, %v612
  %v1029 = vmul.f32 %v617, %v617
  %v1030 = vmul.f32 %v620, %v620
  %v1031 = vmul.f32 %v625, %v625
  %v1032 = vmul.f32 %v628, %v628
  %v1033 = vmul.f32 %v633, %v633
  %v1034 = vmul.f32 %v636, %v636
  %v1035 = vmul.f32 %v641, %v641
  %v1036 = vmul.f32 %v644, %v644
  %v1037 = vmul.f32 %v649, %v649
  %v1038 = vmul.f32 %v652, %v652
  %v1039 = vmul.f32 %v657, %v657
  %v1040 = vmul.f32 %v660, %v660
  %v1041 = vmul.f32 %v665, %v665
  %v1042 = vmul.f32 %v668, %v668
  %v1043 = vmul.f32 %v673, %v673
  %v1044 = vmul.f32 %v676, %v676
  %v1045 = vmul.f32 %v681, %v681
  %v1046 = vmul.f32 %v684, %v684
  %v1047 = vmul.f32 %v689, %v689
  %v1048 = vmul.f32 %v692, %v692
  %v1049 = vmul.f32 %v697, %v697
  %v1050 = vmul.f32 %v700, %v700
  %v1051 = vmul.f32 %v705, %v705
  %v1052 = vmul.f32 %v708, %v708
  %v1053 = vmul.f32 %v713, %v713
  %v1054 = vmul.f32 %v716, %v716
  %v1055 = vmul.f32 %v721, %v721
  %v1056 = vmul.f32 %v724, %v724
  %v1057 = vmul.f32 %v729, %v729
  %v1058 = vmul.f32 %v732, %v732
  %v1059 = vmul.f32 %v737, %v737
  %v1060 = vmul.f32 %v740, %v740
  %v1061 = vmul.f32 %v745, %v745
  %v1062 = vmul.f32 %v748, %v748
  %v1063 = vmul.f32 %v753, %v753
  %v1064 = vmul.f32 %v756, %v756
  %v1065 = vmul.f32 %v761, %v761
  %v1066 = vmul.f32 %v764, %v764
  %v1067 = vmul.f32 %v769, %v769
  %v1068 = vmul.f32 %v772, %v772
  %v1069 = vmul.f32 %v777, %v777
  %v1070 = vmul.f32 %v780, %v780
  %v1071 = vmul.f32 %v785, %v785
  %v1072 = vmul.f32 %v788, %v788
  %v1073 = vmul.f32 %v793, %v793
  %v1074 = vmul.f32 %v796, %v796
  %v1075 = vmul.f32 %v801, %v801
  %v1076 = vmul.f32 %v804, %v804
  %v1077 = vmul.f32 %v809, %v809
  %v1078 = vmul.f32 %v812, %v812
  %v1079 = vsel %vm815, %v1015, 0.0
  %v1080 = vsel %vm815, %v1016, 0.0
  %v1081 = vadd.f32 %v1079, %v1080
  %v1082 = vsel %vm815, %v1017, 0.0
  %v1083 = vadd.f32 %v1081, %v1082
  %v1084 = vsel %vm815, %v1018, 0.0
  %v1085 = vadd.f32 %v1083, %v1084
  %v1086 = vsel %vm815, %v1019, 0.0
  %v1087 = vadd.f32 %v1085, %v1086
  %v1088 = vsel %vm815, %v1020, 0.0
  %v1089 = vadd.f32 %v1087, %v1088
  %v1090 = vsel %vm815, %v1021, 0.0
  %v1091 = vadd.f32 %v1089, %v1090
  %v1092 = vsel %vm815, %v1022, 0.0
  %v1093 = vadd.f32 %v1091, %v1092
  %v1094 = vsel %vm815, %v1023, 0.0
  %v1095 = vadd.f32 %v1093, %v1094
  %v1096 = vsel %vm815, %v1024, 0.0
  %v1097 = vadd.f32 %v1095, %v1096
  %v1098 = vsel %vm815, %v1025, 0.0
  %v1099 = vadd.f32 %v1097, %v1098
  %v1100 = vsel %vm815, %v1026, 0.0
  %v1101 = vadd.f32 %v1099, %v1100
  %v1102 = vsel %vm815, %v1027, 0.0
  %v1103 = vadd.f32 %v1101, %v1102
  %v1104 = vsel %vm815, %v1028, 0.0
  %v1105 = vadd.f32 %v1103, %v1104
  %v1106 = vsel %vm815, %v1029, 0.0
  %v1107 = vadd.f32 %v1105, %v1106
  %v1108 = vsel %vm815, %v1030, 0.0
  %v1109 = vadd.f32 %v1107, %v1108
  %v1110 = vsel %vm815, %v1031, 0.0
  %v1111 = vadd.f32 %v1109, %v1110
  %v1112 = vsel %vm815, %v1032, 0.0
  %v1113 = vadd.f32 %v1111, %v1112
  %v1114 = vsel %vm815, %v1033, 0.0
  %v1115 = vadd.f32 %v1113, %v1114
  %v1116 = vsel %vm815, %v1034, 0.0
  %v1117 = vadd.f32 %v1115, %v1116
  %v1118 = vsel %vm815, %v1035, 0.0
  %v1119 = vadd.f32 %v1117, %v1118
  %v1120 = vsel %vm815, %v1036, 0.0
  %v1121 = vadd.f32 %v1119, %v1120
  %v1122 = vsel %vm815, %v1037, 0.0
  %v1123 = vadd.f32 %v1121, %v1122
  %v1124 = vsel %vm815, %v1038, 0.0
  %v1125 = vadd.f32 %v1123, %v1124
  %v1126 = vsel %vm815, %v1039, 0.0
  %v1127 = vadd.f32 %v1125, %v1126
  %v1128 = vsel %vm815, %v1040, 0.0
  %v1129 = vadd.f32 %v1127, %v1128
  %v1130 = vsel %vm815, %v1041, 0.0
  %v1131 = vadd.f32 %v1129, %v1130
  %v1132 = vsel %vm815, %v1042, 0.0
  %v1133 = vadd.f32 %v1131, %v1132
  %v1134 = vsel %vm815, %v1043, 0.0
  %v1135 = vadd.f32 %v1133, %v1134
  %v1136 = vsel %vm815, %v1044, 0.0
  %v1137 = vadd.f32 %v1135, %v1136
  %v1138 = vsel %vm815, %v1045, 0.0
  %v1139 = vadd.f32 %v1137, %v1138
  %v1140 = vsel %vm815, %v1046, 0.0
  %v1141 = vadd.f32 %v1139, %v1140
  %v1142 = vsel %vm815, %v1047, 0.0
  %v1143 = vadd.f32 %v1141, %v1142
  %v1144 = vsel %vm815, %v1048, 0.0
  %v1145 = vadd.f32 %v1143, %v1144
  %v1146 = vsel %vm815, %v1049, 0.0
  %v1147 = vadd.f32 %v1145, %v1146
  %v1148 = vsel %vm815, %v1050, 0.0
  %v1149 = vadd.f32 %v1147, %v1148
  %v1150 = vsel %vm815, %v1051, 0.0
  %v1151 = vadd.f32 %v1149, %v1150
  %v1152 = vsel %vm815, %v1052, 0.0
  %v1153 = vadd.f32 %v1151, %v1152
  %v1154 = vsel %vm815, %v1053, 0.0
  %v1155 = vadd.f32 %v1153, %v1154
  %v1156 = vsel %vm815, %v1054, 0.0
  %v1157 = vadd.f32 %v1155, %v1156
  %v1158 = vsel %vm815, %v1055, 0.0
  %v1159 = vadd.f32 %v1157, %v1158
  %v1160 = vsel %vm815, %v1056, 0.0
  %v1161 = vadd.f32 %v1159, %v1160
  %v1162 = vsel %vm815, %v1057, 0.0
  %v1163 = vadd.f32 %v1161, %v1162
  %v1164 = vsel %vm815, %v1058, 0.0
  %v1165 = vadd.f32 %v1163, %v1164
  %v1166 = vsel %vm815, %v1059, 0.0
  %v1167 = vadd.f32 %v1165, %v1166
  %v1168 = vsel %vm815, %v1060, 0.0
  %v1169 = vadd.f32 %v1167, %v1168
  %v1170 = vsel %vm815, %v1061, 0.0
  %v1171 = vadd.f32 %v1169, %v1170
  %v1172 = vsel %vm815, %v1062, 0.0
  %v1173 = vadd.f32 %v1171, %v1172
  %v1174 = vsel %vm815, %v1063, 0.0
  %v1175 = vadd.f32 %v1173, %v1174
  %v1176 = vsel %vm815, %v1064, 0.0
  %v1177 = vadd.f32 %v1175, %v1176
  %v1178 = vsel %vm815, %v1065, 0.0
  %v1179 = vadd.f32 %v1177, %v1178
  %v1180 = vsel %vm815, %v1066, 0.0
  %v1181 = vadd.f32 %v1179, %v1180
  %v1182 = vsel %vm815, %v1067, 0.0
  %v1183 = vadd.f32 %v1181, %v1182
  %v1184 = vsel %vm815, %v1068, 0.0
  %v1185 = vadd.f32 %v1183, %v1184
  %v1186 = vsel %vm815, %v1069, 0.0
  %v1187 = vadd.f32 %v1185, %v1186
  %v1188 = vsel %vm815, %v1070, 0.0
  %v1189 = vadd.f32 %v1187, %v1188
  %v1190 = vsel %vm815, %v1071, 0.0
  %v1191 = vadd.f32 %v1189, %v1190
  %v1192 = vsel %vm815, %v1072, 0.0
  %v1193 = vadd.f32 %v1191, %v1192
  %v1194 = vsel %vm815, %v1073, 0.0
  %v1195 = vadd.f32 %v1193, %v1194
  %v1196 = vsel %vm815, %v1074, 0.0
  %v1197 = vadd.f32 %v1195, %v1196
  %v1198 = vsel %vm815, %v1075, 0.0
  %v1199 = vadd.f32 %v1197, %v1198
  %v1200 = vsel %vm815, %v1076, 0.0
  %v1201 = vadd.f32 %v1199, %v1200
  %v1202 = vsel %vm815, %v1077, 0.0
  %v1203 = vadd.f32 %v1201, %v1202
  %v1204 = vsel %vm815, %v1078, 0.0
  %v1205 = vadd.f32 %v1203, %v1204
  %v1206 = vrot.slane %v1205, 4
  %v1207 = vadd.f32 %v1205, %v1206
  %v1208 = vrot.slane %v1207, 2
  %v1209 = vadd.f32 %v1207, %v1208
  %v1210 = vrot.slane %v1209, 1
  %v1211 = vadd.f32 %v1209, %v1210
  %1212 = vst.msk [vmem:[%s3 + $0x1] sm:$0x1] %vm1013, %v1211
  // Predicated region
  $region10: #{spatial_path.8} parent=0 // pred_check
    _
  $region11: #{spatial_path.8} parent=0 // pred_check_branch
    %1214 = sbr.rel (0) target = $region13
  $region12: #{spatial_path.8} parent=0 // pred_region
    _
  $region13: #{spatial_path.8} parent=0 // pred_fallthru
    _
  // Predicated region
  $region14: #{spatial_path.8} parent=0 // pred_check
    _
  $region15: #{spatial_path.8} parent=0 // pred_check_branch
    %1216 = sbr.rel (0) target = $region17
  $region16: #{spatial_path.8} parent=0 // pred_region
    _
  $region17: #{spatial_path.8} parent=0 // pred_fallthru
    _
  // Predicated region
  $region18: #{spatial_path.8} parent=0 // pred_check
    _
  $region19: #{spatial_path.8} parent=0 // pred_check_branch
    %1218 = sbr.rel (0) target = $region21
  $region20: #{spatial_path.8} parent=0 // pred_region
    _
  $region21: #{spatial_path.8} parent=0 // pred_fallthru
    _
  // Predicated region
  $region22: #{spatial_path.8} parent=0 // pred_check
    _
  $region23: #{spatial_path.8} parent=0 // pred_check_branch
    %1220 = sbr.rel (0) target = $region25
  $region24: #{spatial_path.8} parent=0 // pred_region
    _
  $region25: #{spatial_path.8} parent=0 // pred_fallthru
    _

// kernel: spatial_path.10
$region0: #{spatial_path.10}
  #allocation0 [shape = 'u32[]', space=smem, size = 0x4, offset = 0x4, fixed_abs, tag = 'smem constant byte address 0x4 - core index']
  #allocation1 [shape = 'u32[144,128]{1,0:T(1,128)}', space=vmem, size = 0x12000, scoped, tag = 'internal scratch']
  %s0 = inlined_call_operand.vmem [shape: bf16[128,640], index: 0, kind: input, shape index: {}]
  %s1 = inlined_call_operand.vmem [shape: bf16[640,64], index: 1, kind: input, shape index: {}]
  %s2 = inlined_call_operand.vmem [shape: f32[128,64], index: 2, kind: output, shape index: {0}]
  %s3 = inlined_call_operand.vmem [shape: f32[1,2,64], index: 3, kind: output, shape index: {1}]
  %4 = xla_tuple %s2, %s3
  %s5 = sld [smem:[#allocation0]]
  $region26: #{spatial_path.10} parent=0
    _
  %s7 = ssub.s32 1, %s5
  %s8 = scalar_select 0, %s7, %s5
  // Predicated region
  $region2: #{spatial_path.10} parent=0 // pred_check
    _
  $region3: #{spatial_path.10} parent=0 // pred_check_branch
    %10 = sbr.rel (0) target = $region5
  $region4: #{spatial_path.10} parent=0 // pred_region
    _
  $region5: #{spatial_path.10} parent=0 // pred_fallthru
    _
  // Predicated region
  $region6: #{spatial_path.10} parent=0 // pred_check
    _
  $region7: #{spatial_path.10} parent=0 // pred_check_branch
    %12 = sbr.rel (0) target = $region9
  $region8: #{spatial_path.10} parent=0 // pred_region
    _
  $region9: #{spatial_path.10} parent=0 // pred_fallthru
    _
  %v14 = vld [vmem:[%s0] sm:$0xff]
  %v15 = vld [vmem:[%s0 + $0x8] sm:$0xff]
  %v16 = vld [vmem:[%s0 + $0x10] sm:$0xf]
  %v17 = vld [vmem:[%s0 + $0x14] sm:$0xff]
  %v18 = vld [vmem:[%s0 + $0x1c] sm:$0xff]
  %v19 = vld [vmem:[%s0 + $0x24] sm:$0xf]
  %v20 = vld [vmem:[%s0 + $0x28] sm:$0xff]
  %v21 = vld [vmem:[%s0 + $0x30] sm:$0xff]
  %v22 = vld [vmem:[%s0 + $0x38] sm:$0xf]
  %v23 = vld [vmem:[%s0 + $0x3c] sm:$0xff]
  %v24 = vld [vmem:[%s0 + $0x44] sm:$0xff]
  %v25 = vld [vmem:[%s0 + $0x4c] sm:$0xf]
  %v26 = vld [vmem:[%s0 + $0x50] sm:$0xff]
  %v27 = vld [vmem:[%s0 + $0x58] sm:$0xff]
  %v28 = vld [vmem:[%s0 + $0x60] sm:$0xf]
  %v29 = vld [vmem:[%s0 + $0x64] sm:$0xff]
  %v30 = vld [vmem:[%s0 + $0x6c] sm:$0xff]
  %v31 = vld [vmem:[%s0 + $0x74] sm:$0xf]
  %v32 = vld [vmem:[%s0 + $0x78] sm:$0xff]
  %v33 = vld [vmem:[%s0 + $0x80] sm:$0xff]
  %v34 = vld [vmem:[%s0 + $0x88] sm:$0xf]
  %v35 = vld [vmem:[%s0 + $0x8c] sm:$0xff]
  %v36 = vld [vmem:[%s0 + $0x94] sm:$0xff]
  %v37 = vld [vmem:[%s0 + $0x9c] sm:$0xf]
  %v38 = vld [vmem:[%s0 + $0xa0] sm:$0xff]
  %v39 = vld [vmem:[%s0 + $0xa8] sm:$0xff]
  %v40 = vld [vmem:[%s0 + $0xb0] sm:$0xf]
  %v41 = vld [vmem:[%s0 + $0xb4] sm:$0xff]
  %v42 = vld [vmem:[%s0 + $0xbc] sm:$0xff]
  %v43 = vld [vmem:[%s0 + $0xc4] sm:$0xf]
  %v44 = vld [vmem:[%s0 + $0xc8] sm:$0xff]
  %v45 = vld [vmem:[%s0 + $0xd0] sm:$0xff]
  %v46 = vld [vmem:[%s0 + $0xd8] sm:$0xf]
  %v47 = vld [vmem:[%s0 + $0xdc] sm:$0xff]
  %v48 = vld [vmem:[%s0 + $0xe4] sm:$0xff]
  %v49 = vld [vmem:[%s0 + $0xec] sm:$0xf]
  %v50 = vld [vmem:[%s0 + $0xf0] sm:$0xff]
  %v51 = vld [vmem:[%s0 + $0xf8] sm:$0xff]
  %v52 = vld [vmem:[%s0 + $0x100] sm:$0xf]
  %v53 = vld [vmem:[%s0 + $0x104] sm:$0xff]
  %v54 = vld [vmem:[%s0 + $0x10c] sm:$0xff]
  %v55 = vld [vmem:[%s0 + $0x114] sm:$0xf]
  %v56 = vld [vmem:[%s0 + $0x118] sm:$0xff]
  %v57 = vld [vmem:[%s0 + $0x120] sm:$0xff]
  %v58 = vld [vmem:[%s0 + $0x128] sm:$0xf]
  %v59 = vld [vmem:[%s0 + $0x12c] sm:$0xff]
  %v60 = vld [vmem:[%s0 + $0x134] sm:$0xff]
  %v61 = vld [vmem:[%s0 + $0x13c] sm:$0xf]
  %v62 = vld [vmem:[%s1] sm:$0xf]
  %v63 = vld [vmem:[%s1 + $0x4] sm:$0xf]
  %v64 = vld [vmem:[%s1 + $0x8] sm:$0xf]
  %v65 = vld [vmem:[%s1 + $0xc] sm:$0xf]
  %v66 = vld [vmem:[%s1 + $0x10] sm:$0xf]
  %v67 = vld [vmem:[%s1 + $0x14] sm:$0xf]
  %v68 = vld [vmem:[%s1 + $0x18] sm:$0xf]
  %v69 = vld [vmem:[%s1 + $0x1c] sm:$0xf]
  %v70 = vld [vmem:[%s1 + $0x20] sm:$0xf]
  %v71 = vld [vmem:[%s1 + $0x24] sm:$0xf]
  %v72 = vld [vmem:[%s1 + $0x28] sm:$0xf]
  %v73 = vld [vmem:[%s1 + $0x2c] sm:$0xf]
  %v74 = vld [vmem:[%s1 + $0x30] sm:$0xf]
  %v75 = vld [vmem:[%s1 + $0x34] sm:$0xf]
  %v76 = vld [vmem:[%s1 + $0x38] sm:$0xf]
  %v77 = vld [vmem:[%s1 + $0x3c] sm:$0xf]
  %v78 = vld [vmem:[%s1 + $0x40] sm:$0xf]
  %v79 = vld [vmem:[%s1 + $0x44] sm:$0xf]
  %v80 = vld [vmem:[%s1 + $0x48] sm:$0xf]
  %v81 = vld [vmem:[%s1 + $0x4c] sm:$0xf]
  %v82 = vld [vmem:[%s1 + $0x50] sm:$0xf]
  %v83 = vld [vmem:[%s1 + $0x54] sm:$0xf]
  %v84 = vld [vmem:[%s1 + $0x58] sm:$0xf]
  %v85 = vld [vmem:[%s1 + $0x5c] sm:$0xf]
  %v86 = vld [vmem:[%s1 + $0x60] sm:$0xf]
  %v87 = vld [vmem:[%s1 + $0x64] sm:$0xf]
  %v88 = vld [vmem:[%s1 + $0x68] sm:$0xf]
  %v89 = vld [vmem:[%s1 + $0x6c] sm:$0xf]
  %v90 = vld [vmem:[%s1 + $0x70] sm:$0xf]
  %v91 = vld [vmem:[%s1 + $0x74] sm:$0xf]
  %v92 = vld [vmem:[%s1 + $0x78] sm:$0xf]
  %v93 = vld [vmem:[%s1 + $0x7c] sm:$0xf]
  %v94 = vld [vmem:[%s1 + $0x80] sm:$0xf]
  %v95 = vld [vmem:[%s1 + $0x84] sm:$0xf]
  %v96 = vld [vmem:[%s1 + $0x88] sm:$0xf]
  %v97 = vld [vmem:[%s1 + $0x8c] sm:$0xf]
  %v98 = vld [vmem:[%s1 + $0x90] sm:$0xf]
  %v99 = vld [vmem:[%s1 + $0x94] sm:$0xf]
  %v100 = vld [vmem:[%s1 + $0x98] sm:$0xf]
  %v101 = vld [vmem:[%s1 + $0x9c] sm:$0xf]
  %v102 = vld [vmem:[%s1 + $0xa0] sm:$0xf]
  %v103 = vld [vmem:[%s1 + $0xa4] sm:$0xf]
  %v104 = vld [vmem:[%s1 + $0xa8] sm:$0xf]
  %v105 = vld [vmem:[%s1 + $0xac] sm:$0xf]
  %v106 = vld [vmem:[%s1 + $0xb0] sm:$0xf]
  %v107 = vld [vmem:[%s1 + $0xb4] sm:$0xf]
  %v108 = vld [vmem:[%s1 + $0xb8] sm:$0xf]
  %v109 = vld [vmem:[%s1 + $0xbc] sm:$0xf]
  %v110 = vld [vmem:[%s1 + $0xc0] sm:$0xf]
  %v111 = vld [vmem:[%s1 + $0xc4] sm:$0xf]
  %v112 = vld [vmem:[%s1 + $0xc8] sm:$0xf]
  %v113 = vld [vmem:[%s1 + $0xcc] sm:$0xf]
  %v114 = vld [vmem:[%s1 + $0xd0] sm:$0xf]
  %v115 = vld [vmem:[%s1 + $0xd4] sm:$0xf]
  %v116 = vld [vmem:[%s1 + $0xd8] sm:$0xf]
  %v117 = vld [vmem:[%s1 + $0xdc] sm:$0xf]
  %v118 = vld [vmem:[%s1 + $0xe0] sm:$0xf]
  %v119 = vld [vmem:[%s1 + $0xe4] sm:$0xf]
  %v120 = vld [vmem:[%s1 + $0xe8] sm:$0xf]
  %v121 = vld [vmem:[%s1 + $0xec] sm:$0xf]
  %v122 = vld [vmem:[%s1 + $0xf0] sm:$0xf]
  %v123 = vld [vmem:[%s1 + $0xf4] sm:$0xf]
  %v124 = vld [vmem:[%s1 + $0xf8] sm:$0xf]
  %v125 = vld [vmem:[%s1 + $0xfc] sm:$0xf]
  %v126 = vld [vmem:[%s1 + $0x100] sm:$0xf]
  %v127 = vld [vmem:[%s1 + $0x104] sm:$0xf]
  %v128 = vld [vmem:[%s1 + $0x108] sm:$0xf]
  %v129 = vld [vmem:[%s1 + $0x10c] sm:$0xf]
  %v130 = vld [vmem:[%s1 + $0x110] sm:$0xf]
  %v131 = vld [vmem:[%s1 + $0x114] sm:$0xf]
  %v132 = vld [vmem:[%s1 + $0x118] sm:$0xf]
  %v133 = vld [vmem:[%s1 + $0x11c] sm:$0xf]
  %v134 = vld [vmem:[%s1 + $0x120] sm:$0xf]
  %v135 = vld [vmem:[%s1 + $0x124] sm:$0xf]
  %v136 = vld [vmem:[%s1 + $0x128] sm:$0xf]
  %v137 = vld [vmem:[%s1 + $0x12c] sm:$0xf]
  %v138 = vld [vmem:[%s1 + $0x130] sm:$0xf]
  %v139 = vld [vmem:[%s1 + $0x134] sm:$0xf]
  %v140 = vld [vmem:[%s1 + $0x138] sm:$0xf]
  %v141 = vld [vmem:[%s1 + $0x13c] sm:$0xf]
  %v190 = vunpack.c.l.b16 %v14
  %v191 = vunpack.c.h.b16 %v14
  %v192 = vunpack.c.l.b16 %v15
  %v193 = vunpack.c.h.b16 %v15
  %v194 = vunpack.c.l.b16 %v16
  %v195 = vunpack.c.l.b16 %v17
  %v196 = vunpack.c.h.b16 %v17
  %v197 = vunpack.c.l.b16 %v18
  %v198 = vunpack.c.h.b16 %v18
  %v199 = vunpack.c.l.b16 %v19
  %v200 = vunpack.c.l.b16 %v20
  %v201 = vunpack.c.h.b16 %v20
  %v202 = vunpack.c.l.b16 %v21
  %v203 = vunpack.c.h.b16 %v21
  %v204 = vunpack.c.l.b16 %v22
  %v205 = vunpack.c.l.b16 %v23
  %v206 = vunpack.c.h.b16 %v23
  %v207 = vunpack.c.l.b16 %v24
  %v208 = vunpack.c.h.b16 %v24
  %v209 = vunpack.c.l.b16 %v25
  %v210 = vunpack.c.l.b16 %v26
  %v211 = vunpack.c.h.b16 %v26
  %v212 = vunpack.c.l.b16 %v27
  %v213 = vunpack.c.h.b16 %v27
  %v214 = vunpack.c.l.b16 %v28
  %v215 = vunpack.c.l.b16 %v29
  %v216 = vunpack.c.h.b16 %v29
  %v217 = vunpack.c.l.b16 %v30
  %v218 = vunpack.c.h.b16 %v30
  %v219 = vunpack.c.l.b16 %v31
  %v220 = vunpack.c.l.b16 %v32
  %v221 = vunpack.c.h.b16 %v32
  %v222 = vunpack.c.l.b16 %v33
  %v223 = vunpack.c.h.b16 %v33
  %v224 = vunpack.c.l.b16 %v34
  %v225 = vunpack.c.l.b16 %v35
  %v226 = vunpack.c.h.b16 %v35
  %v227 = vunpack.c.l.b16 %v36
  %v228 = vunpack.c.h.b16 %v36
  %v229 = vunpack.c.l.b16 %v37
  %v230 = vunpack.c.l.b16 %v38
  %v231 = vunpack.c.h.b16 %v38
  %v232 = vunpack.c.l.b16 %v39
  %v233 = vunpack.c.h.b16 %v39
  %v234 = vunpack.c.l.b16 %v40
  %v235 = vunpack.c.l.b16 %v41
  %v236 = vunpack.c.h.b16 %v41
  %v237 = vunpack.c.l.b16 %v42
  %v238 = vunpack.c.h.b16 %v42
  %v239 = vunpack.c.l.b16 %v43
  %v240 = vunpack.c.l.b16 %v44
  %v241 = vunpack.c.h.b16 %v44
  %v242 = vunpack.c.l.b16 %v45
  %v243 = vunpack.c.h.b16 %v45
  %v244 = vunpack.c.l.b16 %v46
  %v245 = vunpack.c.l.b16 %v47
  %v246 = vunpack.c.h.b16 %v47
  %v247 = vunpack.c.l.b16 %v48
  %v248 = vunpack.c.h.b16 %v48
  %v249 = vunpack.c.l.b16 %v49
  %v250 = vunpack.c.l.b16 %v50
  %v251 = vunpack.c.h.b16 %v50
  %v252 = vunpack.c.l.b16 %v51
  %v253 = vunpack.c.h.b16 %v51
  %v254 = vunpack.c.l.b16 %v52
  %v255 = vunpack.c.l.b16 %v53
  %v256 = vunpack.c.h.b16 %v53
  %v257 = vunpack.c.l.b16 %v54
  %v258 = vunpack.c.h.b16 %v54
  %v259 = vunpack.c.l.b16 %v55
  %v260 = vunpack.c.l.b16 %v56
  %v261 = vunpack.c.h.b16 %v56
  %v262 = vunpack.c.l.b16 %v57
  %v263 = vunpack.c.h.b16 %v57
  %v264 = vunpack.c.l.b16 %v58
  %v265 = vunpack.c.l.b16 %v59
  %v266 = vunpack.c.h.b16 %v59
  %v267 = vunpack.c.l.b16 %v60
  %v268 = vunpack.c.h.b16 %v60
  %v269 = vunpack.c.l.b16 %v61
  %v270 = vpack.c.b16 %v195, %v190
  %v271 = vpack.c.b16 %v196, %v191
  %v272 = vpack.c.b16 %v197, %v192
  %v273 = vpack.c.b16 %v198, %v193
  %v274 = vpack.c.b16 %v199, %v194
  %v275 = vpack.c.b16 %v205, %v200
  %v276 = vpack.c.b16 %v206, %v201
  %v277 = vpack.c.b16 %v207, %v202
  %v278 = vpack.c.b16 %v208, %v203
  %v279 = vpack.c.b16 %v209, %v204
  %v280 = vpack.c.b16 %v215, %v210
  %v281 = vpack.c.b16 %v216, %v211
  %v282 = vpack.c.b16 %v217, %v212
  %v283 = vpack.c.b16 %v218, %v213
  %v284 = vpack.c.b16 %v219, %v214
  %v285 = vpack.c.b16 %v225, %v220
  %v286 = vpack.c.b16 %v226, %v221
  %v287 = vpack.c.b16 %v227, %v222
  %v288 = vpack.c.b16 %v228, %v223
  %v289 = vpack.c.b16 %v229, %v224
  %v290 = vpack.c.b16 %v235, %v230
  %v291 = vpack.c.b16 %v236, %v231
  %v292 = vpack.c.b16 %v237, %v232
  %v293 = vpack.c.b16 %v238, %v233
  %v294 = vpack.c.b16 %v239, %v234
  %v295 = vpack.c.b16 %v245, %v240
  %v296 = vpack.c.b16 %v246, %v241
  %v297 = vpack.c.b16 %v247, %v242
  %v298 = vpack.c.b16 %v248, %v243
  %v299 = vpack.c.b16 %v249, %v244
  %v300 = vpack.c.b16 %v255, %v250
  %v301 = vpack.c.b16 %v256, %v251
  %v302 = vpack.c.b16 %v257, %v252
  %v303 = vpack.c.b16 %v258, %v253
  %v304 = vpack.c.b16 %v259, %v254
  %v305 = vpack.c.b16 %v265, %v260
  %v306 = vpack.c.b16 %v266, %v261
  %v307 = vpack.c.b16 %v267, %v262
  %v308 = vpack.c.b16 %v268, %v263
  %v309 = vpack.c.b16 %v269, %v264
  %v430 = vunpack.c.l.b16 %v62
  %v431 = vunpack.c.l.b16 %v63
  %v432 = vunpack.c.l.b16 %v64
  %v433 = vunpack.c.l.b16 %v65
  %v434 = vunpack.c.l.b16 %v66
  %v435 = vunpack.c.l.b16 %v67
  %v436 = vunpack.c.l.b16 %v68
  %v437 = vunpack.c.l.b16 %v69
  %v438 = vunpack.c.l.b16 %v70
  %v439 = vunpack.c.l.b16 %v71
  %v440 = vunpack.c.l.b16 %v72
  %v441 = vunpack.c.l.b16 %v73
  %v442 = vunpack.c.l.b16 %v74
  %v443 = vunpack.c.l.b16 %v75
  %v444 = vunpack.c.l.b16 %v76
  %v445 = vunpack.c.l.b16 %v77
  %v446 = vunpack.c.l.b16 %v78
  %v447 = vunpack.c.l.b16 %v79
  %v448 = vunpack.c.l.b16 %v80
  %v449 = vunpack.c.l.b16 %v81
  %v450 = vunpack.c.l.b16 %v82
  %v451 = vunpack.c.l.b16 %v83
  %v452 = vunpack.c.l.b16 %v84
  %v453 = vunpack.c.l.b16 %v85
  %v454 = vunpack.c.l.b16 %v86
  %v455 = vunpack.c.l.b16 %v87
  %v456 = vunpack.c.l.b16 %v88
  %v457 = vunpack.c.l.b16 %v89
  %v458 = vunpack.c.l.b16 %v90
  %v459 = vunpack.c.l.b16 %v91
  %v460 = vunpack.c.l.b16 %v92
  %v461 = vunpack.c.l.b16 %v93
  %v462 = vunpack.c.l.b16 %v94
  %v463 = vunpack.c.l.b16 %v95
  %v464 = vunpack.c.l.b16 %v96
  %v465 = vunpack.c.l.b16 %v97
  %v466 = vunpack.c.l.b16 %v98
  %v467 = vunpack.c.l.b16 %v99
  %v468 = vunpack.c.l.b16 %v100
  %v469 = vunpack.c.l.b16 %v101
  %v470 = vunpack.c.l.b16 %v102
  %v471 = vunpack.c.l.b16 %v103
  %v472 = vunpack.c.l.b16 %v104
  %v473 = vunpack.c.l.b16 %v105
  %v474 = vunpack.c.l.b16 %v106
  %v475 = vunpack.c.l.b16 %v107
  %v476 = vunpack.c.l.b16 %v108
  %v477 = vunpack.c.l.b16 %v109
  %v478 = vunpack.c.l.b16 %v110
  %v479 = vunpack.c.l.b16 %v111
  %v480 = vunpack.c.l.b16 %v112
  %v481 = vunpack.c.l.b16 %v113
  %v482 = vunpack.c.l.b16 %v114
  %v483 = vunpack.c.l.b16 %v115
  %v484 = vunpack.c.l.b16 %v116
  %v485 = vunpack.c.l.b16 %v117
  %v486 = vunpack.c.l.b16 %v118
  %v487 = vunpack.c.l.b16 %v119
  %v488 = vunpack.c.l.b16 %v120
  %v489 = vunpack.c.l.b16 %v121
  %v490 = vunpack.c.l.b16 %v122
  %v491 = vunpack.c.l.b16 %v123
  %v492 = vunpack.c.l.b16 %v124
  %v493 = vunpack.c.l.b16 %v125
  %v494 = vunpack.c.l.b16 %v126
  %v495 = vunpack.c.l.b16 %v127
  %v496 = vunpack.c.l.b16 %v128
  %v497 = vunpack.c.l.b16 %v129
  %v498 = vunpack.c.l.b16 %v130
  %v499 = vunpack.c.l.b16 %v131
  %v500 = vunpack.c.l.b16 %v132
  %v501 = vunpack.c.l.b16 %v133
  %v502 = vunpack.c.l.b16 %v134
  %v503 = vunpack.c.l.b16 %v135
  %v504 = vunpack.c.l.b16 %v136
  %v505 = vunpack.c.l.b16 %v137
  %v506 = vunpack.c.l.b16 %v138
  %v507 = vunpack.c.l.b16 %v139
  %v508 = vunpack.c.l.b16 %v140
  %v509 = vunpack.c.l.b16 %v141
  %v510 = vpack.c.b16 %v431, %v430
  %v511 = vpack.c.b16 %v433, %v432
  %v512 = vpack.c.b16 %v435, %v434
  %v513 = vpack.c.b16 %v437, %v436
  %v514 = vpack.c.b16 %v439, %v438
  %v515 = vpack.c.b16 %v441, %v440
  %v516 = vpack.c.b16 %v443, %v442
  %v517 = vpack.c.b16 %v445, %v444
  %v518 = vpack.c.b16 %v447, %v446
  %v519 = vpack.c.b16 %v449, %v448
  %v520 = vpack.c.b16 %v451, %v450
  %v521 = vpack.c.b16 %v453, %v452
  %v522 = vpack.c.b16 %v455, %v454
  %v523 = vpack.c.b16 %v457, %v456
  %v524 = vpack.c.b16 %v459, %v458
  %v525 = vpack.c.b16 %v461, %v460
  %v526 = vpack.c.b16 %v463, %v462
  %v527 = vpack.c.b16 %v465, %v464
  %v528 = vpack.c.b16 %v467, %v466
  %v529 = vpack.c.b16 %v469, %v468
  %v530 = vpack.c.b16 %v471, %v470
  %v531 = vpack.c.b16 %v473, %v472
  %v532 = vpack.c.b16 %v475, %v474
  %v533 = vpack.c.b16 %v477, %v476
  %v534 = vpack.c.b16 %v479, %v478
  %v535 = vpack.c.b16 %v481, %v480
  %v536 = vpack.c.b16 %v483, %v482
  %v537 = vpack.c.b16 %v485, %v484
  %v538 = vpack.c.b16 %v487, %v486
  %v539 = vpack.c.b16 %v489, %v488
  %v540 = vpack.c.b16 %v491, %v490
  %v541 = vpack.c.b16 %v493, %v492
  %v542 = vpack.c.b16 %v495, %v494
  %v543 = vpack.c.b16 %v497, %v496
  %v544 = vpack.c.b16 %v499, %v498
  %v545 = vpack.c.b16 %v501, %v500
  %v546 = vpack.c.b16 %v503, %v502
  %v547 = vpack.c.b16 %v505, %v504
  %v548 = vpack.c.b16 %v507, %v506
  %v549 = vpack.c.b16 %v509, %v508
  %590 = vmatprep.subr.bf16.mxu0 0
  %591 = vmatpush1.bf16.msra.mxu0 %v517
  %592 = vmatprep.subr.bf16.mxu0 0
  %593 = vmatpush1.bf16.msra.mxu0 %v516
  %594 = vmatprep.subr.bf16.mxu0 0
  %595 = vmatpush1.bf16.msra.mxu0 %v515
  %596 = vmatprep.subr.bf16.mxu0 0
  %597 = vmatpush1.bf16.msra.mxu0 %v514
  %598 = vmatprep.subr.bf16.mxu0 0
  %599 = vmatpush1.bf16.msra.mxu0 %v513
  %600 = vmatprep.subr.bf16.mxu0 0
  %601 = vmatpush1.bf16.msra.mxu0 %v512
  %602 = vmatprep.subr.bf16.mxu0 0
  %603 = vmatpush1.bf16.msra.mxu0 %v511
  %604 = vmatprep.subr.bf16.mxu0 0
  %605 = vmatpush1.bf16.msra.mxu0 %v510
  %606 = vmatprep.subr.bf16.mxu0 0
  %607 = vmatpush2.bf16.msra.mxu0 %v525
  %608 = vmatprep.subr.bf16.mxu0 0
  %609 = vmatpush2.bf16.msra.mxu0 %v524
  %610 = vmatprep.subr.bf16.mxu0 0
  %611 = vmatpush2.bf16.msra.mxu0 %v523
  %612 = vmatprep.subr.bf16.mxu0 0
  %613 = vmatpush2.bf16.msra.mxu0 %v522
  %614 = vmatprep.subr.bf16.mxu0 0
  %615 = vmatpush2.bf16.msra.mxu0 %v521
  %616 = vmatprep.subr.bf16.mxu0 0
  %617 = vmatpush2.bf16.msra.mxu0 %v520
  %618 = vmatprep.subr.bf16.mxu0 0
  %619 = vmatpush2.bf16.msra.mxu0 %v519
  %620 = vmatprep.subr.bf16.mxu0 0
  %621 = vmatpush2.bf16.msra.mxu0 %v518
  %622 = vmatprep.mubr.bf16.mxu0 %v271
  %623 = vmatmul.mubr.bf16.gmra.mxu0 %v270
  %v624 = vpop.f32.mrf.mxu0
  %v625 = vadd.f32 0.0, %v624
  %v626 = vpop.f32.mrf.mxu0
  %v627 = vpop.f32.mrf.mxu0
  %v628 = vadd.f32 0.0, %v627
  %v629 = vpop.f32.mrf.mxu0
  %630 = vmatprep.mubr.bf16.mxu0 %v276
  %631 = vmatmul.mubr.bf16.gmra.mxu0 %v275
  %v632 = vpop.f32.mrf.mxu0
  %v633 = vadd.f32 0.0, %v632
  %v634 = vpop.f32.mrf.mxu0
  %v635 = vpop.f32.mrf.mxu0
  %v636 = vadd.f32 0.0, %v635
  %v637 = vpop.f32.mrf.mxu0
  %638 = vmatprep.mubr.bf16.mxu0 %v281
  %639 = vmatmul.mubr.bf16.gmra.mxu0 %v280
  %v640 = vpop.f32.mrf.mxu0
  %v641 = vadd.f32 0.0, %v640
  %v642 = vpop.f32.mrf.mxu0
  %v643 = vpop.f32.mrf.mxu0
  %v644 = vadd.f32 0.0, %v643
  %v645 = vpop.f32.mrf.mxu0
  %646 = vmatprep.mubr.bf16.mxu0 %v286
  %647 = vmatmul.mubr.bf16.gmra.mxu0 %v285
  %v648 = vpop.f32.mrf.mxu0
  %v649 = vadd.f32 0.0, %v648
  %v650 = vpop.f32.mrf.mxu0
  %v651 = vpop.f32.mrf.mxu0
  %v652 = vadd.f32 0.0, %v651
  %v653 = vpop.f32.mrf.mxu0
  %654 = vmatprep.mubr.bf16.mxu0 %v291
  %655 = vmatmul.mubr.bf16.gmra.mxu0 %v290
  %v656 = vpop.f32.mrf.mxu0
  %v657 = vadd.f32 0.0, %v656
  %v658 = vpop.f32.mrf.mxu0
  %v659 = vpop.f32.mrf.mxu0
  %v660 = vadd.f32 0.0, %v659
  %v661 = vpop.f32.mrf.mxu0
  %662 = vmatprep.mubr.bf16.mxu0 %v296
  %663 = vmatmul.mubr.bf16.gmra.mxu0 %v295
  %v664 = vpop.f32.mrf.mxu0
  %v665 = vadd.f32 0.0, %v664
  %v666 = vpop.f32.mrf.mxu0
  %v667 = vpop.f32.mrf.mxu0
  %v668 = vadd.f32 0.0, %v667
  %v669 = vpop.f32.mrf.mxu0
  %670 = vmatprep.mubr.bf16.mxu0 %v301
  %671 = vmatmul.mubr.bf16.gmra.mxu0 %v300
  %v672 = vpop.f32.mrf.mxu0
  %v673 = vadd.f32 0.0, %v672
  %v674 = vpop.f32.mrf.mxu0
  %v675 = vpop.f32.mrf.mxu0
  %v676 = vadd.f32 0.0, %v675
  %v677 = vpop.f32.mrf.mxu0
  %678 = vmatprep.mubr.bf16.mxu0 %v306
  %679 = vmatmul.mubr.bf16.gmra.mxu0 %v305
  %v680 = vpop.f32.mrf.mxu0
  %v681 = vadd.f32 0.0, %v680
  %v682 = vpop.f32.mrf.mxu0
  %v683 = vpop.f32.mrf.mxu0
  %v684 = vadd.f32 0.0, %v683
  %v685 = vpop.f32.mrf.mxu0
  %686 = vdwg.mxu0
  %687 = vmatprep.subr.bf16.mxu0 0
  %688 = vmatpush1.bf16.msra.mxu0 %v533
  %689 = vmatprep.subr.bf16.mxu0 0
  %690 = vmatpush1.bf16.msra.mxu0 %v532
  %691 = vmatprep.subr.bf16.mxu0 0
  %692 = vmatpush1.bf16.msra.mxu0 %v531
  %693 = vmatprep.subr.bf16.mxu0 0
  %694 = vmatpush1.bf16.msra.mxu0 %v530
  %695 = vmatprep.subr.bf16.mxu0 0
  %696 = vmatpush1.bf16.msra.mxu0 %v529
  %697 = vmatprep.subr.bf16.mxu0 0
  %698 = vmatpush1.bf16.msra.mxu0 %v528
  %699 = vmatprep.subr.bf16.mxu0 0
  %700 = vmatpush1.bf16.msra.mxu0 %v527
  %701 = vmatprep.subr.bf16.mxu0 0
  %702 = vmatpush1.bf16.msra.mxu0 %v526
  %703 = vmatprep.subr.bf16.mxu0 0
  %704 = vmatpush2.bf16.msra.mxu0 %v541
  %705 = vmatprep.subr.bf16.mxu0 0
  %706 = vmatpush2.bf16.msra.mxu0 %v540
  %707 = vmatprep.subr.bf16.mxu0 0
  %708 = vmatpush2.bf16.msra.mxu0 %v539
  %709 = vmatprep.subr.bf16.mxu0 0
  %710 = vmatpush2.bf16.msra.mxu0 %v538
  %711 = vmatprep.subr.bf16.mxu0 0
  %712 = vmatpush2.bf16.msra.mxu0 %v537
  %713 = vmatprep.subr.bf16.mxu0 0
  %714 = vmatpush2.bf16.msra.mxu0 %v536
  %715 = vmatprep.subr.bf16.mxu0 0
  %716 = vmatpush2.bf16.msra.mxu0 %v535
  %717 = vmatprep.subr.bf16.mxu0 0
  %718 = vmatpush2.bf16.msra.mxu0 %v534
  %719 = vmatprep.mubr.bf16.mxu0 %v273
  %720 = vmatmul.mubr.bf16.gmra.mxu0 %v272
  %v721 = vpop.f32.mrf.mxu0
  %v722 = vadd.f32 %v625, %v721
  %v723 = vpop.f32.mrf.mxu0
  %v724 = vpop.f32.mrf.mxu0
  %v725 = vadd.f32 %v628, %v724
  %v726 = vpop.f32.mrf.mxu0
  %727 = vmatprep.mubr.bf16.mxu0 %v278
  %728 = vmatmul.mubr.bf16.gmra.mxu0 %v277
  %v729 = vpop.f32.mrf.mxu0
  %v730 = vadd.f32 %v633, %v729
  %v731 = vpop.f32.mrf.mxu0
  %v732 = vpop.f32.mrf.mxu0
  %v733 = vadd.f32 %v636, %v732
  %v734 = vpop.f32.mrf.mxu0
  %735 = vmatprep.mubr.bf16.mxu0 %v283
  %736 = vmatmul.mubr.bf16.gmra.mxu0 %v282
  %v737 = vpop.f32.mrf.mxu0
  %v738 = vadd.f32 %v641, %v737
  %v739 = vpop.f32.mrf.mxu0
  %v740 = vpop.f32.mrf.mxu0
  %v741 = vadd.f32 %v644, %v740
  %v742 = vpop.f32.mrf.mxu0
  %743 = vmatprep.mubr.bf16.mxu0 %v288
  %744 = vmatmul.mubr.bf16.gmra.mxu0 %v287
  %v745 = vpop.f32.mrf.mxu0
  %v746 = vadd.f32 %v649, %v745
  %v747 = vpop.f32.mrf.mxu0
  %v748 = vpop.f32.mrf.mxu0
  %v749 = vadd.f32 %v652, %v748
  %v750 = vpop.f32.mrf.mxu0
  %751 = vmatprep.mubr.bf16.mxu0 %v293
  %752 = vmatmul.mubr.bf16.gmra.mxu0 %v292
  %v753 = vpop.f32.mrf.mxu0
  %v754 = vadd.f32 %v657, %v753
  %v755 = vpop.f32.mrf.mxu0
  %v756 = vpop.f32.mrf.mxu0
  %v757 = vadd.f32 %v660, %v756
  %v758 = vpop.f32.mrf.mxu0
  %759 = vmatprep.mubr.bf16.mxu0 %v298
  %760 = vmatmul.mubr.bf16.gmra.mxu0 %v297
  %v761 = vpop.f32.mrf.mxu0
  %v762 = vadd.f32 %v665, %v761
  %v763 = vpop.f32.mrf.mxu0
  %v764 = vpop.f32.mrf.mxu0
  %v765 = vadd.f32 %v668, %v764
  %v766 = vpop.f32.mrf.mxu0
  %767 = vmatprep.mubr.bf16.mxu0 %v303
  %768 = vmatmul.mubr.bf16.gmra.mxu0 %v302
  %v769 = vpop.f32.mrf.mxu0
  %v770 = vadd.f32 %v673, %v769
  %v771 = vpop.f32.mrf.mxu0
  %v772 = vpop.f32.mrf.mxu0
  %v773 = vadd.f32 %v676, %v772
  %v774 = vpop.f32.mrf.mxu0
  %775 = vmatprep.mubr.bf16.mxu0 %v308
  %776 = vmatmul.mubr.bf16.gmra.mxu0 %v307
  %v777 = vpop.f32.mrf.mxu0
  %v778 = vadd.f32 %v681, %v777
  %v779 = vpop.f32.mrf.mxu0
  %v780 = vpop.f32.mrf.mxu0
  %v781 = vadd.f32 %v684, %v780
  %v782 = vpop.f32.mrf.mxu0
  %783 = vdwg.mxu0
  %784 = vmatprep.subr.bf16.mxu0 0
  %785 = vmatpush1.bf16.msra.mxu0 %v549
  %786 = vmatprep.subr.bf16.mxu0 0
  %787 = vmatpush1.bf16.msra.mxu0 %v548
  %788 = vmatprep.subr.bf16.mxu0 0
  %789 = vmatpush1.bf16.msra.mxu0 %v547
  %790 = vmatprep.subr.bf16.mxu0 0
  %791 = vmatpush1.bf16.msra.mxu0 %v546
  %792 = vmatprep.subr.bf16.mxu0 0
  %793 = vmatpush1.bf16.msra.mxu0 %v545
  %794 = vmatprep.subr.bf16.mxu0 0
  %795 = vmatpush1.bf16.msra.mxu0 %v544
  %796 = vmatprep.subr.bf16.mxu0 0
  %797 = vmatpush1.bf16.msra.mxu0 %v543
  %798 = vmatprep.subr.bf16.mxu0 0
  %799 = vmatpush1.bf16.msra.mxu0 %v542
  %800 = vmatprep.subr.bf16.mxu0 0
  %801 = vmatpush2.bf16.msra.mxu0 0
  %802 = vmatprep.subr.bf16.mxu0 0
  %803 = vmatpush2.bf16.msra.mxu0 0
  %804 = vmatprep.subr.bf16.mxu0 0
  %805 = vmatpush2.bf16.msra.mxu0 0
  %806 = vmatprep.subr.bf16.mxu0 0
  %807 = vmatpush2.bf16.msra.mxu0 0
  %808 = vmatprep.subr.bf16.mxu0 0
  %809 = vmatpush2.bf16.msra.mxu0 0
  %810 = vmatprep.subr.bf16.mxu0 0
  %811 = vmatpush2.bf16.msra.mxu0 0
  %812 = vmatprep.subr.bf16.mxu0 0
  %813 = vmatpush2.bf16.msra.mxu0 0
  %814 = vmatprep.subr.bf16.mxu0 0
  %815 = vmatpush2.bf16.msra.mxu0 0
  %816 = vmatprep.mubr.bf16.mxu0 0
  %817 = vmatmul.mubr.bf16.gmra.mxu0 %v274
  %v818 = vpop.f32.mrf.mxu0
  %v819 = vadd.f32 %v722, %v818
  %v820 = vpop.f32.mrf.mxu0
  %v821 = vpop.f32.mrf.mxu0
  %v822 = vadd.f32 %v725, %v821
  %v823 = vpop.f32.mrf.mxu0
  %824 = vmatprep.mubr.bf16.mxu0 0
  %825 = vmatmul.mubr.bf16.gmra.mxu0 %v279
  %v826 = vpop.f32.mrf.mxu0
  %v827 = vadd.f32 %v730, %v826
  %v828 = vpop.f32.mrf.mxu0
  %v829 = vpop.f32.mrf.mxu0
  %v830 = vadd.f32 %v733, %v829
  %v831 = vpop.f32.mrf.mxu0
  %832 = vmatprep.mubr.bf16.mxu0 0
  %833 = vmatmul.mubr.bf16.gmra.mxu0 %v284
  %v834 = vpop.f32.mrf.mxu0
  %v835 = vadd.f32 %v738, %v834
  %v836 = vpop.f32.mrf.mxu0
  %v837 = vpop.f32.mrf.mxu0
  %v838 = vadd.f32 %v741, %v837
  %v839 = vpop.f32.mrf.mxu0
  %840 = vmatprep.mubr.bf16.mxu0 0
  %841 = vmatmul.mubr.bf16.gmra.mxu0 %v289
  %v842 = vpop.f32.mrf.mxu0
  %v843 = vadd.f32 %v746, %v842
  %v844 = vpop.f32.mrf.mxu0
  %v845 = vpop.f32.mrf.mxu0
  %v846 = vadd.f32 %v749, %v845
  %v847 = vpop.f32.mrf.mxu0
  %848 = vmatprep.mubr.bf16.mxu0 0
  %849 = vmatmul.mubr.bf16.gmra.mxu0 %v294
  %v850 = vpop.f32.mrf.mxu0
  %v851 = vadd.f32 %v754, %v850
  %v852 = vpop.f32.mrf.mxu0
  %v853 = vpop.f32.mrf.mxu0
  %v854 = vadd.f32 %v757, %v853
  %v855 = vpop.f32.mrf.mxu0
  %856 = vmatprep.mubr.bf16.mxu0 0
  %857 = vmatmul.mubr.bf16.gmra.mxu0 %v299
  %v858 = vpop.f32.mrf.mxu0
  %v859 = vadd.f32 %v762, %v858
  %v860 = vpop.f32.mrf.mxu0
  %v861 = vpop.f32.mrf.mxu0
  %v862 = vadd.f32 %v765, %v861
  %v863 = vpop.f32.mrf.mxu0
  %864 = vmatprep.mubr.bf16.mxu0 0
  %865 = vmatmul.mubr.bf16.gmra.mxu0 %v304
  %v866 = vpop.f32.mrf.mxu0
  %v867 = vadd.f32 %v770, %v866
  %v868 = vpop.f32.mrf.mxu0
  %v869 = vpop.f32.mrf.mxu0
  %v870 = vadd.f32 %v773, %v869
  %v871 = vpop.f32.mrf.mxu0
  %872 = vmatprep.mubr.bf16.mxu0 0
  %873 = vmatmul.mubr.bf16.gmra.mxu0 %v309
  %v874 = vpop.f32.mrf.mxu0
  %v875 = vadd.f32 %v778, %v874
  %v876 = vpop.f32.mrf.mxu0
  %v877 = vpop.f32.mrf.mxu0
  %v878 = vadd.f32 %v781, %v877
  %v879 = vpop.f32.mrf.mxu0
  %880 = vdwg.mxu0
  %vm881 = vcmask 523264
  %882 = vst.msk [vmem:[%s2] sm:$0xff] %vm881, %v819
  %883 = vst.msk [vmem:[%s2 + $0x8] sm:$0xff] %vm881, %v822
  %884 = vst.msk [vmem:[%s2 + $0x10] sm:$0xff] %vm881, %v827
  %885 = vst.msk [vmem:[%s2 + $0x18] sm:$0xff] %vm881, %v830
  %886 = vst.msk [vmem:[%s2 + $0x20] sm:$0xff] %vm881, %v835
  %887 = vst.msk [vmem:[%s2 + $0x28] sm:$0xff] %vm881, %v838
  %888 = vst.msk [vmem:[%s2 + $0x30] sm:$0xff] %vm881, %v843
  %889 = vst.msk [vmem:[%s2 + $0x38] sm:$0xff] %vm881, %v846
  %890 = vst.msk [vmem:[%s2 + $0x40] sm:$0xff] %vm881, %v851
  %891 = vst.msk [vmem:[%s2 + $0x48] sm:$0xff] %vm881, %v854
  %892 = vst.msk [vmem:[%s2 + $0x50] sm:$0xff] %vm881, %v859
  %893 = vst.msk [vmem:[%s2 + $0x58] sm:$0xff] %vm881, %v862
  %894 = vst.msk [vmem:[%s2 + $0x60] sm:$0xff] %vm881, %v867
  %895 = vst.msk [vmem:[%s2 + $0x68] sm:$0xff] %vm881, %v870
  %896 = vst.msk [vmem:[%s2 + $0x70] sm:$0xff] %vm881, %v875
  %897 = vst.msk [vmem:[%s2 + $0x78] sm:$0xff] %vm881, %v878
  %v898 = vsel %vm881, %v819, 0.0
  %v899 = vsel %vm881, %v822, 0.0
  %v900 = vadd.f32 %v898, %v899
  %v901 = vsel %vm881, %v827, 0.0
  %v902 = vadd.f32 %v900, %v901
  %v903 = vsel %vm881, %v830, 0.0
  %v904 = vadd.f32 %v902, %v903
  %v905 = vsel %vm881, %v835, 0.0
  %v906 = vadd.f32 %v904, %v905
  %v907 = vsel %vm881, %v838, 0.0
  %v908 = vadd.f32 %v906, %v907
  %v909 = vsel %vm881, %v843, 0.0
  %v910 = vadd.f32 %v908, %v909
  %v911 = vsel %vm881, %v846, 0.0
  %v912 = vadd.f32 %v910, %v911
  %v913 = vsel %vm881, %v851, 0.0
  %v914 = vadd.f32 %v912, %v913
  %v915 = vsel %vm881, %v854, 0.0
  %v916 = vadd.f32 %v914, %v915
  %v917 = vsel %vm881, %v859, 0.0
  %v918 = vadd.f32 %v916, %v917
  %v919 = vsel %vm881, %v862, 0.0
  %v920 = vadd.f32 %v918, %v919
  %v921 = vsel %vm881, %v867, 0.0
  %v922 = vadd.f32 %v920, %v921
  %v923 = vsel %vm881, %v870, 0.0
  %v924 = vadd.f32 %v922, %v923
  %v925 = vsel %vm881, %v875, 0.0
  %v926 = vadd.f32 %v924, %v925
  %v927 = vsel %vm881, %v878, 0.0
  %v928 = vadd.f32 %v926, %v927
  %v929 = vrot.slane %v928, 4
  %v930 = vadd.f32 %v928, %v929
  %v931 = vrot.slane %v930, 2
  %v932 = vadd.f32 %v930, %v931
  %v933 = vrot.slane %v932, 1
  %v934 = vadd.f32 %v932, %v933
  %vm935 = vcmask 516096
  %936 = vst.msk [vmem:[%s3] sm:$0x1] %vm935, %v934
  %v937 = vmul.f32 %v819, %v819
  %v938 = vmul.f32 %v822, %v822
  %v939 = vmul.f32 %v827, %v827
  %v940 = vmul.f32 %v830, %v830
  %v941 = vmul.f32 %v835, %v835
  %v942 = vmul.f32 %v838, %v838
  %v943 = vmul.f32 %v843, %v843
  %v944 = vmul.f32 %v846, %v846
  %v945 = vmul.f32 %v851, %v851
  %v946 = vmul.f32 %v854, %v854
  %v947 = vmul.f32 %v859, %v859
  %v948 = vmul.f32 %v862, %v862
  %v949 = vmul.f32 %v867, %v867
  %v950 = vmul.f32 %v870, %v870
  %v951 = vmul.f32 %v875, %v875
  %v952 = vmul.f32 %v878, %v878
  %v953 = vsel %vm881, %v937, 0.0
  %v954 = vsel %vm881, %v938, 0.0
  %v955 = vadd.f32 %v953, %v954
  %v956 = vsel %vm881, %v939, 0.0
  %v957 = vadd.f32 %v955, %v956
  %v958 = vsel %vm881, %v940, 0.0
  %v959 = vadd.f32 %v957, %v958
  %v960 = vsel %vm881, %v941, 0.0
  %v961 = vadd.f32 %v959, %v960
  %v962 = vsel %vm881, %v942, 0.0
  %v963 = vadd.f32 %v961, %v962
  %v964 = vsel %vm881, %v943, 0.0
  %v965 = vadd.f32 %v963, %v964
  %v966 = vsel %vm881, %v944, 0.0
  %v967 = vadd.f32 %v965, %v966
  %v968 = vsel %vm881, %v945, 0.0
  %v969 = vadd.f32 %v967, %v968
  %v970 = vsel %vm881, %v946, 0.0
  %v971 = vadd.f32 %v969, %v970
  %v972 = vsel %vm881, %v947, 0.0
  %v973 = vadd.f32 %v971, %v972
  %v974 = vsel %vm881, %v948, 0.0
  %v975 = vadd.f32 %v973, %v974
  %v976 = vsel %vm881, %v949, 0.0
  %v977 = vadd.f32 %v975, %v976
  %v978 = vsel %vm881, %v950, 0.0
  %v979 = vadd.f32 %v977, %v978
  %v980 = vsel %vm881, %v951, 0.0
  %v981 = vadd.f32 %v979, %v980
  %v982 = vsel %vm881, %v952, 0.0
  %v983 = vadd.f32 %v981, %v982
  %v984 = vrot.slane %v983, 4
  %v985 = vadd.f32 %v983, %v984
  %v986 = vrot.slane %v985, 2
  %v987 = vadd.f32 %v985, %v986
  %v988 = vrot.slane %v987, 1
  %v989 = vadd.f32 %v987, %v988
  %990 = vst.msk [vmem:[%s3 + $0x1] sm:$0x1] %vm935, %v989
  // Predicated region
  $region10: #{spatial_path.10} parent=0 // pred_check
    _
  $region11: #{spatial_path.10} parent=0 // pred_check_branch
    %992 = sbr.rel (0) target = $region13
  $region12: #{spatial_path.10} parent=0 // pred_region
    _
  $region13: #{spatial_path.10} parent=0 // pred_fallthru
    _
  // Predicated region
  $region14: #{spatial_path.10} parent=0 // pred_check
    _
  $region15: #{spatial_path.10} parent=0 // pred_check_branch
    %994 = sbr.rel (0) target = $region17
  $region16: #{spatial_path.10} parent=0 // pred_region
    _
  $region17: #{spatial_path.10} parent=0 // pred_fallthru
    _
  // Predicated region
  $region18: #{spatial_path.10} parent=0 // pred_check
    _
  $region19: #{spatial_path.10} parent=0 // pred_check_branch
    %996 = sbr.rel (0) target = $region21
  $region20: #{spatial_path.10} parent=0 // pred_region
    _
  $region21: #{spatial_path.10} parent=0 // pred_fallthru
    _
  // Predicated region
  $region22: #{spatial_path.10} parent=0 // pred_check
    _
  $region23: #{spatial_path.10} parent=0 // pred_check_branch
    %998 = sbr.rel (0) target = $region25
  $region24: #{spatial_path.10} parent=0 // pred_region
    _
  $region25: #{spatial_path.10} parent=0 // pred_fallthru
    _

// kernel: spatial_path.11
$region0: #{spatial_path.11}
  #allocation0 [shape = 'u32[]', space=smem, size = 0x4, offset = 0x4, fixed_abs, tag = 'smem constant byte address 0x4 - core index']
  #allocation1 [shape = 'u32[144,128]{1,0:T(1,128)}', space=vmem, size = 0x12000, scoped, tag = 'internal scratch']
  %s0 = inlined_call_operand.vmem [shape: f32[128,64], index: 0, kind: input, shape index: {}]
  %s1 = inlined_call_operand.vmem [shape: f32[1,64], index: 1, kind: input, shape index: {}]
  %s2 = inlined_call_operand.vmem [shape: f32[1,64], index: 2, kind: input, shape index: {}]
  %s3 = inlined_call_operand.vmem [shape: bf16[128,64], index: 3, kind: output, shape index: {}]
  %s4 = sld [smem:[#allocation0]]
  $region22: #{spatial_path.11} parent=0
    _
  %s6 = ssub.s32 1, %s4
  %s7 = scalar_select 0, %s6, %s4
  // Predicated region
  $region2: #{spatial_path.11} parent=0 // pred_check
    _
  $region3: #{spatial_path.11} parent=0 // pred_check_branch
    %9 = sbr.rel (0) target = $region5
  $region4: #{spatial_path.11} parent=0 // pred_region
    _
  $region5: #{spatial_path.11} parent=0 // pred_fallthru
    _
  // Predicated region
  $region6: #{spatial_path.11} parent=0 // pred_check
    _
  $region7: #{spatial_path.11} parent=0 // pred_check_branch
    %11 = sbr.rel (0) target = $region9
  $region8: #{spatial_path.11} parent=0 // pred_region
    _
  $region9: #{spatial_path.11} parent=0 // pred_fallthru
    _
  // Predicated region
  $region10: #{spatial_path.11} parent=0 // pred_check
    _
  $region11: #{spatial_path.11} parent=0 // pred_check_branch
    %13 = sbr.rel (0) target = $region13
  $region12: #{spatial_path.11} parent=0 // pred_region
    _
  $region13: #{spatial_path.11} parent=0 // pred_fallthru
    _
  %v14 = vld [vmem:[%s0] sm:$0xff]
  %v15 = vld [vmem:[%s0 + $0x8] sm:$0xff]
  %v16 = vld [vmem:[%s0 + $0x10] sm:$0xff]
  %v17 = vld [vmem:[%s0 + $0x18] sm:$0xff]
  %v18 = vld [vmem:[%s0 + $0x20] sm:$0xff]
  %v19 = vld [vmem:[%s0 + $0x28] sm:$0xff]
  %v20 = vld [vmem:[%s0 + $0x30] sm:$0xff]
  %v21 = vld [vmem:[%s0 + $0x38] sm:$0xff]
  %v22 = vld [vmem:[%s0 + $0x40] sm:$0xff]
  %v23 = vld [vmem:[%s0 + $0x48] sm:$0xff]
  %v24 = vld [vmem:[%s0 + $0x50] sm:$0xff]
  %v25 = vld [vmem:[%s0 + $0x58] sm:$0xff]
  %v26 = vld [vmem:[%s0 + $0x60] sm:$0xff]
  %v27 = vld [vmem:[%s0 + $0x68] sm:$0xff]
  %v28 = vld [vmem:[%s0 + $0x70] sm:$0xff]
  %v29 = vld [vmem:[%s0 + $0x78] sm:$0xff]
  %v30 = vld [vmem:[%s1] sm:$0x1]
  %v32 = vlaneseq
  %v33 = vshrl.u32 %v32, 7
  %v34 = vsub.s32 0, %v33
  %v35 = vrot.slane %v30, %v34
  %v37 = vmul.f32 %v14, %v35
  %v38 = vmul.f32 %v15, %v35
  %v39 = vmul.f32 %v16, %v35
  %v40 = vmul.f32 %v17, %v35
  %v41 = vmul.f32 %v18, %v35
  %v42 = vmul.f32 %v19, %v35
  %v43 = vmul.f32 %v20, %v35
  %v44 = vmul.f32 %v21, %v35
  %v45 = vmul.f32 %v22, %v35
  %v46 = vmul.f32 %v23, %v35
  %v47 = vmul.f32 %v24, %v35
  %v48 = vmul.f32 %v25, %v35
  %v49 = vmul.f32 %v26, %v35
  %v50 = vmul.f32 %v27, %v35
  %v51 = vmul.f32 %v28, %v35
  %v52 = vmul.f32 %v29, %v35
  %v53 = vld [vmem:[%s2] sm:$0x1]
  %v55 = vlaneseq
  %v56 = vshrl.u32 %v55, 7
  %v57 = vsub.s32 0, %v56
  %v58 = vrot.slane %v53, %v57
  %v60 = vadd.f32 %v37, %v58
  %v61 = vadd.f32 %v38, %v58
  %v62 = vadd.f32 %v39, %v58
  %v63 = vadd.f32 %v40, %v58
  %v64 = vadd.f32 %v41, %v58
  %v65 = vadd.f32 %v42, %v58
  %v66 = vadd.f32 %v43, %v58
  %v67 = vadd.f32 %v44, %v58
  %v68 = vadd.f32 %v45, %v58
  %v69 = vadd.f32 %v46, %v58
  %v70 = vadd.f32 %v47, %v58
  %v71 = vadd.f32 %v48, %v58
  %v72 = vadd.f32 %v49, %v58
  %v73 = vadd.f32 %v50, %v58
  %v74 = vadd.f32 %v51, %v58
  %v75 = vadd.f32 %v52, %v58
  %v76 = vmax.f32 %v60, 0.0
  %v77 = vmax.f32 %v61, 0.0
  %v78 = vmax.f32 %v62, 0.0
  %v79 = vmax.f32 %v63, 0.0
  %v80 = vmax.f32 %v64, 0.0
  %v81 = vmax.f32 %v65, 0.0
  %v82 = vmax.f32 %v66, 0.0
  %v83 = vmax.f32 %v67, 0.0
  %v84 = vmax.f32 %v68, 0.0
  %v85 = vmax.f32 %v69, 0.0
  %v86 = vmax.f32 %v70, 0.0
  %v87 = vmax.f32 %v71, 0.0
  %v88 = vmax.f32 %v72, 0.0
  %v89 = vmax.f32 %v73, 0.0
  %v90 = vmax.f32 %v74, 0.0
  %v91 = vmax.f32 %v75, 0.0
  %v92 = vpack.c.bf16 %v77, %v76
  %v93 = vpack.c.bf16 %v79, %v78
  %v94 = vpack.c.bf16 %v81, %v80
  %v95 = vpack.c.bf16 %v83, %v82
  %v96 = vpack.c.bf16 %v85, %v84
  %v97 = vpack.c.bf16 %v87, %v86
  %v98 = vpack.c.bf16 %v89, %v88
  %v99 = vpack.c.bf16 %v91, %v90
  %v108 = vunpack.c.l.b16 %v92
  %v109 = vunpack.c.h.b16 %v92
  %v110 = vunpack.c.l.b16 %v93
  %v111 = vunpack.c.h.b16 %v93
  %v112 = vunpack.c.l.b16 %v94
  %v113 = vunpack.c.h.b16 %v94
  %v114 = vunpack.c.l.b16 %v95
  %v115 = vunpack.c.h.b16 %v95
  %v116 = vunpack.c.l.b16 %v96
  %v117 = vunpack.c.h.b16 %v96
  %v118 = vunpack.c.l.b16 %v97
  %v119 = vunpack.c.h.b16 %v97
  %v120 = vunpack.c.l.b16 %v98
  %v121 = vunpack.c.h.b16 %v98
  %v122 = vunpack.c.l.b16 %v99
  %v123 = vunpack.c.h.b16 %v99
  %v124 = vpack.c.b16 %v108, %v108
  %v125 = vpack.c.b16 %v109, %v109
  %v126 = vpack.c.b16 %v110, %v110
  %v127 = vpack.c.b16 %v111, %v111
  %v128 = vpack.c.b16 %v112, %v112
  %v129 = vpack.c.b16 %v113, %v113
  %v130 = vpack.c.b16 %v114, %v114
  %v131 = vpack.c.b16 %v115, %v115
  %v132 = vpack.c.b16 %v116, %v116
  %v133 = vpack.c.b16 %v117, %v117
  %v134 = vpack.c.b16 %v118, %v118
  %v135 = vpack.c.b16 %v119, %v119
  %v136 = vpack.c.b16 %v120, %v120
  %v137 = vpack.c.b16 %v121, %v121
  %v138 = vpack.c.b16 %v122, %v122
  %v139 = vpack.c.b16 %v123, %v123
  %vm156 = vcmask 519168
  %157 = vst.msk [vmem:[%s3] sm:$0xf] %vm156, %v124
  %158 = vst.msk [vmem:[%s3 + $0x4] sm:$0xf] %vm156, %v125
  %159 = vst.msk [vmem:[%s3 + $0x8] sm:$0xf] %vm156, %v126
  %160 = vst.msk [vmem:[%s3 + $0xc] sm:$0xf] %vm156, %v127
  %161 = vst.msk [vmem:[%s3 + $0x10] sm:$0xf] %vm156, %v128
  %162 = vst.msk [vmem:[%s3 + $0x14] sm:$0xf] %vm156, %v129
  %163 = vst.msk [vmem:[%s3 + $0x18] sm:$0xf] %vm156, %v130
  %164 = vst.msk [vmem:[%s3 + $0x1c] sm:$0xf] %vm156, %v131
  %165 = vst.msk [vmem:[%s3 + $0x20] sm:$0xf] %vm156, %v132
  %166 = vst.msk [vmem:[%s3 + $0x24] sm:$0xf] %vm156, %v133
  %167 = vst.msk [vmem:[%s3 + $0x28] sm:$0xf] %vm156, %v134
  %168 = vst.msk [vmem:[%s3 + $0x2c] sm:$0xf] %vm156, %v135
  %169 = vst.msk [vmem:[%s3 + $0x30] sm:$0xf] %vm156, %v136
  %170 = vst.msk [vmem:[%s3 + $0x34] sm:$0xf] %vm156, %v137
  %171 = vst.msk [vmem:[%s3 + $0x38] sm:$0xf] %vm156, %v138
  %172 = vst.msk [vmem:[%s3 + $0x3c] sm:$0xf] %vm156, %v139
  // Predicated region
  $region14: #{spatial_path.11} parent=0 // pred_check
    _
  $region15: #{spatial_path.11} parent=0 // pred_check_branch
    %174 = sbr.rel (0) target = $region17
  $region16: #{spatial_path.11} parent=0 // pred_region
    _
  $region17: #{spatial_path.11} parent=0 // pred_fallthru
    _
  // Predicated region
  $region18: #{spatial_path.11} parent=0 // pred_check
    _
  $region19: #{spatial_path.11} parent=0 // pred_check_branch
    %176 = sbr.rel (0) target = $region21
  $region20: #{spatial_path.11} parent=0 // pred_region
    _
  $region21: #{spatial_path.11} parent=0 // pred_fallthru
    _

// kernel: spatial_path.13
$region0: #{spatial_path.13}
  #allocation0 [shape = 'u32[]', space=smem, size = 0x4, offset = 0x4, fixed_abs, tag = 'smem constant byte address 0x4 - core index']
  #allocation1 [shape = 'u32[144,128]{1,0:T(1,128)}', space=vmem, size = 0x12000, scoped, tag = 'internal scratch']
  %s0 = inlined_call_operand.vmem [shape: f32[32,64], index: 0, kind: input, shape index: {}]
  %s1 = inlined_call_operand.vmem [shape: f32[1,64], index: 1, kind: input, shape index: {}]
  %s2 = inlined_call_operand.vmem [shape: f32[1,64], index: 2, kind: input, shape index: {}]
  %s3 = inlined_call_operand.vmem [shape: bf16[32,64], index: 3, kind: output, shape index: {}]
  %s4 = sld [smem:[#allocation0]]
  $region22: #{spatial_path.13} parent=0
    _
  %s6 = ssub.s32 1, %s4
  %s7 = scalar_select 0, %s6, %s4
  // Predicated region
  $region2: #{spatial_path.13} parent=0 // pred_check
    _
  $region3: #{spatial_path.13} parent=0 // pred_check_branch
    %9 = sbr.rel (0) target = $region5
  $region4: #{spatial_path.13} parent=0 // pred_region
    _
  $region5: #{spatial_path.13} parent=0 // pred_fallthru
    _
  // Predicated region
  $region6: #{spatial_path.13} parent=0 // pred_check
    _
  $region7: #{spatial_path.13} parent=0 // pred_check_branch
    %11 = sbr.rel (0) target = $region9
  $region8: #{spatial_path.13} parent=0 // pred_region
    _
  $region9: #{spatial_path.13} parent=0 // pred_fallthru
    _
  // Predicated region
  $region10: #{spatial_path.13} parent=0 // pred_check
    _
  $region11: #{spatial_path.13} parent=0 // pred_check_branch
    %13 = sbr.rel (0) target = $region13
  $region12: #{spatial_path.13} parent=0 // pred_region
    _
  $region13: #{spatial_path.13} parent=0 // pred_fallthru
    _
  %v14 = vld [vmem:[%s0] sm:$0xff]
  %v15 = vld [vmem:[%s0 + $0x8] sm:$0xff]
  %v16 = vld [vmem:[%s0 + $0x10] sm:$0xff]
  %v17 = vld [vmem:[%s0 + $0x18] sm:$0xff]
  %v18 = vld [vmem:[%s1] sm:$0x1]
  %v20 = vlaneseq
  %v21 = vshrl.u32 %v20, 7
  %v22 = vsub.s32 0, %v21
  %v23 = vrot.slane %v18, %v22
  %v25 = vmul.f32 %v14, %v23
  %v26 = vmul.f32 %v15, %v23
  %v27 = vmul.f32 %v16, %v23
  %v28 = vmul.f32 %v17, %v23
  %v29 = vld [vmem:[%s2] sm:$0x1]
  %v31 = vlaneseq
  %v32 = vshrl.u32 %v31, 7
  %v33 = vsub.s32 0, %v32
  %v34 = vrot.slane %v29, %v33
  %v36 = vadd.f32 %v25, %v34
  %v37 = vadd.f32 %v26, %v34
  %v38 = vadd.f32 %v27, %v34
  %v39 = vadd.f32 %v28, %v34
  %v40 = vmax.f32 %v36, 0.0
  %v41 = vmax.f32 %v37, 0.0
  %v42 = vmax.f32 %v38, 0.0
  %v43 = vmax.f32 %v39, 0.0
  %v44 = vpack.c.bf16 %v41, %v40
  %v45 = vpack.c.bf16 %v43, %v42
  %v48 = vunpack.c.l.b16 %v44
  %v49 = vunpack.c.h.b16 %v44
  %v50 = vunpack.c.l.b16 %v45
  %v51 = vunpack.c.h.b16 %v45
  %v52 = vpack.c.b16 %v48, %v48
  %v53 = vpack.c.b16 %v49, %v49
  %v54 = vpack.c.b16 %v50, %v50
  %v55 = vpack.c.b16 %v51, %v51
  %vm60 = vcmask 519168
  %61 = vst.msk [vmem:[%s3] sm:$0xf] %vm60, %v52
  %62 = vst.msk [vmem:[%s3 + $0x4] sm:$0xf] %vm60, %v53
  %63 = vst.msk [vmem:[%s3 + $0x8] sm:$0xf] %vm60, %v54
  %64 = vst.msk [vmem:[%s3 + $0xc] sm:$0xf] %vm60, %v55
  // Predicated region
  $region14: #{spatial_path.13} parent=0 // pred_check
    _
  $region15: #{spatial_path.13} parent=0 // pred_check_branch
    %66 = sbr.rel (0) target = $region17
  $region16: #{spatial_path.13} parent=0 // pred_region
    _
  $region17: #{spatial_path.13} parent=0 // pred_fallthru
    _
  // Predicated region
  $region18: #{spatial_path.13} parent=0 // pred_check
    _
  $region19: #{spatial_path.13} parent=0 // pred_check_branch
    %68 = sbr.rel (0) target = $region21
  $region20: #{spatial_path.13} parent=0 // pred_region
    _
  $region21: #{spatial_path.13} parent=0 // pred_fallthru
    _

// kernel: spatial_path.12
$region0: #{spatial_path.12}
  #allocation0 [shape = 'u32[]', space=smem, size = 0x4, offset = 0x4, fixed_abs, tag = 'smem constant byte address 0x4 - core index']
  #allocation1 [shape = 'u32[144,128]{1,0:T(1,128)}', space=vmem, size = 0x12000, scoped, tag = 'internal scratch']
  %s0 = inlined_call_operand.vmem [shape: bf16[32,640], index: 0, kind: input, shape index: {}]
  %s1 = inlined_call_operand.vmem [shape: bf16[640,64], index: 1, kind: input, shape index: {}]
  %s2 = inlined_call_operand.vmem [shape: f32[32,64], index: 2, kind: output, shape index: {0}]
  %s3 = inlined_call_operand.vmem [shape: f32[1,2,64], index: 3, kind: output, shape index: {1}]
  %4 = xla_tuple %s2, %s3
  %s5 = sld [smem:[#allocation0]]
  $region26: #{spatial_path.12} parent=0
    _
  %s7 = ssub.s32 1, %s5
  %s8 = scalar_select 0, %s7, %s5
  // Predicated region
  $region2: #{spatial_path.12} parent=0 // pred_check
    _
  $region3: #{spatial_path.12} parent=0 // pred_check_branch
    %10 = sbr.rel (0) target = $region5
  $region4: #{spatial_path.12} parent=0 // pred_region
    _
  $region5: #{spatial_path.12} parent=0 // pred_fallthru
    _
  // Predicated region
  $region6: #{spatial_path.12} parent=0 // pred_check
    _
  $region7: #{spatial_path.12} parent=0 // pred_check_branch
    %12 = sbr.rel (0) target = $region9
  $region8: #{spatial_path.12} parent=0 // pred_region
    _
  $region9: #{spatial_path.12} parent=0 // pred_fallthru
    _
  %v14 = vld [vmem:[%s0] sm:$0xff]
  %v15 = vld [vmem:[%s0 + $0x8] sm:$0xff]
  %v16 = vld [vmem:[%s0 + $0x10] sm:$0xf]
  %v17 = vld [vmem:[%s0 + $0x14] sm:$0xff]
  %v18 = vld [vmem:[%s0 + $0x1c] sm:$0xff]
  %v19 = vld [vmem:[%s0 + $0x24] sm:$0xf]
  %v20 = vld [vmem:[%s0 + $0x28] sm:$0xff]
  %v21 = vld [vmem:[%s0 + $0x30] sm:$0xff]
  %v22 = vld [vmem:[%s0 + $0x38] sm:$0xf]
  %v23 = vld [vmem:[%s0 + $0x3c] sm:$0xff]
  %v24 = vld [vmem:[%s0 + $0x44] sm:$0xff]
  %v25 = vld [vmem:[%s0 + $0x4c] sm:$0xf]
  %v26 = vld [vmem:[%s1] sm:$0xf]
  %v27 = vld [vmem:[%s1 + $0x4] sm:$0xf]
  %v28 = vld [vmem:[%s1 + $0x8] sm:$0xf]
  %v29 = vld [vmem:[%s1 + $0xc] sm:$0xf]
  %v30 = vld [vmem:[%s1 + $0x10] sm:$0xf]
  %v31 = vld [vmem:[%s1 + $0x14] sm:$0xf]
  %v32 = vld [vmem:[%s1 + $0x18] sm:$0xf]
  %v33 = vld [vmem:[%s1 + $0x1c] sm:$0xf]
  %v34 = vld [vmem:[%s1 + $0x20] sm:$0xf]
  %v35 = vld [vmem:[%s1 + $0x24] sm:$0xf]
  %v36 = vld [vmem:[%s1 + $0x28] sm:$0xf]
  %v37 = vld [vmem:[%s1 + $0x2c] sm:$0xf]
  %v38 = vld [vmem:[%s1 + $0x30] sm:$0xf]
  %v39 = vld [vmem:[%s1 + $0x34] sm:$0xf]
  %v40 = vld [vmem:[%s1 + $0x38] sm:$0xf]
  %v41 = vld [vmem:[%s1 + $0x3c] sm:$0xf]
  %v42 = vld [vmem:[%s1 + $0x40] sm:$0xf]
  %v43 = vld [vmem:[%s1 + $0x44] sm:$0xf]
  %v44 = vld [vmem:[%s1 + $0x48] sm:$0xf]
  %v45 = vld [vmem:[%s1 + $0x4c] sm:$0xf]
  %v46 = vld [vmem:[%s1 + $0x50] sm:$0xf]
  %v47 = vld [vmem:[%s1 + $0x54] sm:$0xf]
  %v48 = vld [vmem:[%s1 + $0x58] sm:$0xf]
  %v49 = vld [vmem:[%s1 + $0x5c] sm:$0xf]
  %v50 = vld [vmem:[%s1 + $0x60] sm:$0xf]
  %v51 = vld [vmem:[%s1 + $0x64] sm:$0xf]
  %v52 = vld [vmem:[%s1 + $0x68] sm:$0xf]
  %v53 = vld [vmem:[%s1 + $0x6c] sm:$0xf]
  %v54 = vld [vmem:[%s1 + $0x70] sm:$0xf]
  %v55 = vld [vmem:[%s1 + $0x74] sm:$0xf]
  %v56 = vld [vmem:[%s1 + $0x78] sm:$0xf]
  %v57 = vld [vmem:[%s1 + $0x7c] sm:$0xf]
  %v58 = vld [vmem:[%s1 + $0x80] sm:$0xf]
  %v59 = vld [vmem:[%s1 + $0x84] sm:$0xf]
  %v60 = vld [vmem:[%s1 + $0x88] sm:$0xf]
  %v61 = vld [vmem:[%s1 + $0x8c] sm:$0xf]
  %v62 = vld [vmem:[%s1 + $0x90] sm:$0xf]
  %v63 = vld [vmem:[%s1 + $0x94] sm:$0xf]
  %v64 = vld [vmem:[%s1 + $0x98] sm:$0xf]
  %v65 = vld [vmem:[%s1 + $0x9c] sm:$0xf]
  %v66 = vld [vmem:[%s1 + $0xa0] sm:$0xf]
  %v67 = vld [vmem:[%s1 + $0xa4] sm:$0xf]
  %v68 = vld [vmem:[%s1 + $0xa8] sm:$0xf]
  %v69 = vld [vmem:[%s1 + $0xac] sm:$0xf]
  %v70 = vld [vmem:[%s1 + $0xb0] sm:$0xf]
  %v71 = vld [vmem:[%s1 + $0xb4] sm:$0xf]
  %v72 = vld [vmem:[%s1 + $0xb8] sm:$0xf]
  %v73 = vld [vmem:[%s1 + $0xbc] sm:$0xf]
  %v74 = vld [vmem:[%s1 + $0xc0] sm:$0xf]
  %v75 = vld [vmem:[%s1 + $0xc4] sm:$0xf]
  %v76 = vld [vmem:[%s1 + $0xc8] sm:$0xf]
  %v77 = vld [vmem:[%s1 + $0xcc] sm:$0xf]
  %v78 = vld [vmem:[%s1 + $0xd0] sm:$0xf]
  %v79 = vld [vmem:[%s1 + $0xd4] sm:$0xf]
  %v80 = vld [vmem:[%s1 + $0xd8] sm:$0xf]
  %v81 = vld [vmem:[%s1 + $0xdc] sm:$0xf]
  %v82 = vld [vmem:[%s1 + $0xe0] sm:$0xf]
  %v83 = vld [vmem:[%s1 + $0xe4] sm:$0xf]
  %v84 = vld [vmem:[%s1 + $0xe8] sm:$0xf]
  %v85 = vld [vmem:[%s1 + $0xec] sm:$0xf]
  %v86 = vld [vmem:[%s1 + $0xf0] sm:$0xf]
  %v87 = vld [vmem:[%s1 + $0xf4] sm:$0xf]
  %v88 = vld [vmem:[%s1 + $0xf8] sm:$0xf]
  %v89 = vld [vmem:[%s1 + $0xfc] sm:$0xf]
  %v90 = vld [vmem:[%s1 + $0x100] sm:$0xf]
  %v91 = vld [vmem:[%s1 + $0x104] sm:$0xf]
  %v92 = vld [vmem:[%s1 + $0x108] sm:$0xf]
  %v93 = vld [vmem:[%s1 + $0x10c] sm:$0xf]
  %v94 = vld [vmem:[%s1 + $0x110] sm:$0xf]
  %v95 = vld [vmem:[%s1 + $0x114] sm:$0xf]
  %v96 = vld [vmem:[%s1 + $0x118] sm:$0xf]
  %v97 = vld [vmem:[%s1 + $0x11c] sm:$0xf]
  %v98 = vld [vmem:[%s1 + $0x120] sm:$0xf]
  %v99 = vld [vmem:[%s1 + $0x124] sm:$0xf]
  %v100 = vld [vmem:[%s1 + $0x128] sm:$0xf]
  %v101 = vld [vmem:[%s1 + $0x12c] sm:$0xf]
  %v102 = vld [vmem:[%s1 + $0x130] sm:$0xf]
  %v103 = vld [vmem:[%s1 + $0x134] sm:$0xf]
  %v104 = vld [vmem:[%s1 + $0x138] sm:$0xf]
  %v105 = vld [vmem:[%s1 + $0x13c] sm:$0xf]
  %v118 = vunpack.c.l.b16 %v14
  %v119 = vunpack.c.h.b16 %v14
  %v120 = vunpack.c.l.b16 %v15
  %v121 = vunpack.c.h.b16 %v15
  %v122 = vunpack.c.l.b16 %v16
  %v123 = vunpack.c.l.b16 %v17
  %v124 = vunpack.c.h.b16 %v17
  %v125 = vunpack.c.l.b16 %v18
  %v126 = vunpack.c.h.b16 %v18
  %v127 = vunpack.c.l.b16 %v19
  %v128 = vunpack.c.l.b16 %v20
  %v129 = vunpack.c.h.b16 %v20
  %v130 = vunpack.c.l.b16 %v21
  %v131 = vunpack.c.h.b16 %v21
  %v132 = vunpack.c.l.b16 %v22
  %v133 = vunpack.c.l.b16 %v23
  %v134 = vunpack.c.h.b16 %v23
  %v135 = vunpack.c.l.b16 %v24
  %v136 = vunpack.c.h.b16 %v24
  %v137 = vunpack.c.l.b16 %v25
  %v138 = vpack.c.b16 %v123, %v118
  %v139 = vpack.c.b16 %v124, %v119
  %v140 = vpack.c.b16 %v125, %v120
  %v141 = vpack.c.b16 %v126, %v121
  %v142 = vpack.c.b16 %v127, %v122
  %v143 = vpack.c.b16 %v133, %v128
  %v144 = vpack.c.b16 %v134, %v129
  %v145 = vpack.c.b16 %v135, %v130
  %v146 = vpack.c.b16 %v136, %v131
  %v147 = vpack.c.b16 %v137, %v132
  %v238 = vunpack.c.l.b16 %v26
  %v239 = vunpack.c.l.b16 %v27
  %v240 = vunpack.c.l.b16 %v28
  %v241 = vunpack.c.l.b16 %v29
  %v242 = vunpack.c.l.b16 %v30
  %v243 = vunpack.c.l.b16 %v31
  %v244 = vunpack.c.l.b16 %v32
  %v245 = vunpack.c.l.b16 %v33
  %v246 = vunpack.c.l.b16 %v34
  %v247 = vunpack.c.l.b16 %v35
  %v248 = vunpack.c.l.b16 %v36
  %v249 = vunpack.c.l.b16 %v37
  %v250 = vunpack.c.l.b16 %v38
  %v251 = vunpack.c.l.b16 %v39
  %v252 = vunpack.c.l.b16 %v40
  %v253 = vunpack.c.l.b16 %v41
  %v254 = vunpack.c.l.b16 %v42
  %v255 = vunpack.c.l.b16 %v43
  %v256 = vunpack.c.l.b16 %v44
  %v257 = vunpack.c.l.b16 %v45
  %v258 = vunpack.c.l.b16 %v46
  %v259 = vunpack.c.l.b16 %v47
  %v260 = vunpack.c.l.b16 %v48
  %v261 = vunpack.c.l.b16 %v49
  %v262 = vunpack.c.l.b16 %v50
  %v263 = vunpack.c.l.b16 %v51
  %v264 = vunpack.c.l.b16 %v52
  %v265 = vunpack.c.l.b16 %v53
  %v266 = vunpack.c.l.b16 %v54
  %v267 = vunpack.c.l.b16 %v55
  %v268 = vunpack.c.l.b16 %v56
  %v269 = vunpack.c.l.b16 %v57
  %v270 = vunpack.c.l.b16 %v58
  %v271 = vunpack.c.l.b16 %v59
  %v272 = vunpack.c.l.b16 %v60
  %v273 = vunpack.c.l.b16 %v61
  %v274 = vunpack.c.l.b16 %v62
  %v275 = vunpack.c.l.b16 %v63
  %v276 = vunpack.c.l.b16 %v64
  %v277 = vunpack.c.l.b16 %v65
  %v278 = vunpack.c.l.b16 %v66
  %v279 = vunpack.c.l.b16 %v67
  %v280 = vunpack.c.l.b16 %v68
  %v281 = vunpack.c.l.b16 %v69
  %v282 = vunpack.c.l.b16 %v70
  %v283 = vunpack.c.l.b16 %v71
  %v284 = vunpack.c.l.b16 %v72
  %v285 = vunpack.c.l.b16 %v73
  %v286 = vunpack.c.l.b16 %v74
  %v287 = vunpack.c.l.b16 %v75
  %v288 = vunpack.c.l.b16 %v76
  %v289 = vunpack.c.l.b16 %v77
  %v290 = vunpack.c.l.b16 %v78
  %v291 = vunpack.c.l.b16 %v79
  %v292 = vunpack.c.l.b16 %v80
  %v293 = vunpack.c.l.b16 %v81
  %v294 = vunpack.c.l.b16 %v82
  %v295 = vunpack.c.l.b16 %v83
  %v296 = vunpack.c.l.b16 %v84
  %v297 = vunpack.c.l.b16 %v85
  %v298 = vunpack.c.l.b16 %v86
  %v299 = vunpack.c.l.b16 %v87
  %v300 = vunpack.c.l.b16 %v88
  %v301 = vunpack.c.l.b16 %v89
  %v302 = vunpack.c.l.b16 %v90
  %v303 = vunpack.c.l.b16 %v91
  %v304 = vunpack.c.l.b16 %v92
  %v305 = vunpack.c.l.b16 %v93
  %v306 = vunpack.c.l.b16 %v94
  %v307 = vunpack.c.l.b16 %v95
  %v308 = vunpack.c.l.b16 %v96
  %v309 = vunpack.c.l.b16 %v97
  %v310 = vunpack.c.l.b16 %v98
  %v311 = vunpack.c.l.b16 %v99
  %v312 = vunpack.c.l.b16 %v100
  %v313 = vunpack.c.l.b16 %v101
  %v314 = vunpack.c.l.b16 %v102
  %v315 = vunpack.c.l.b16 %v103
  %v316 = vunpack.c.l.b16 %v104
  %v317 = vunpack.c.l.b16 %v105
  %v318 = vpack.c.b16 %v239, %v238
  %v319 = vpack.c.b16 %v241, %v240
  %v320 = vpack.c.b16 %v243, %v242
  %v321 = vpack.c.b16 %v245, %v244
  %v322 = vpack.c.b16 %v247, %v246
  %v323 = vpack.c.b16 %v249, %v248
  %v324 = vpack.c.b16 %v251, %v250
  %v325 = vpack.c.b16 %v253, %v252
  %v326 = vpack.c.b16 %v255, %v254
  %v327 = vpack.c.b16 %v257, %v256
  %v328 = vpack.c.b16 %v259, %v258
  %v329 = vpack.c.b16 %v261, %v260
  %v330 = vpack.c.b16 %v263, %v262
  %v331 = vpack.c.b16 %v265, %v264
  %v332 = vpack.c.b16 %v267, %v266
  %v333 = vpack.c.b16 %v269, %v268
  %v334 = vpack.c.b16 %v271, %v270
  %v335 = vpack.c.b16 %v273, %v272
  %v336 = vpack.c.b16 %v275, %v274
  %v337 = vpack.c.b16 %v277, %v276
  %v338 = vpack.c.b16 %v279, %v278
  %v339 = vpack.c.b16 %v281, %v280
  %v340 = vpack.c.b16 %v283, %v282
  %v341 = vpack.c.b16 %v285, %v284
  %v342 = vpack.c.b16 %v287, %v286
  %v343 = vpack.c.b16 %v289, %v288
  %v344 = vpack.c.b16 %v291, %v290
  %v345 = vpack.c.b16 %v293, %v292
  %v346 = vpack.c.b16 %v295, %v294
  %v347 = vpack.c.b16 %v297, %v296
  %v348 = vpack.c.b16 %v299, %v298
  %v349 = vpack.c.b16 %v301, %v300
  %v350 = vpack.c.b16 %v303, %v302
  %v351 = vpack.c.b16 %v305, %v304
  %v352 = vpack.c.b16 %v307, %v306
  %v353 = vpack.c.b16 %v309, %v308
  %v354 = vpack.c.b16 %v311, %v310
  %v355 = vpack.c.b16 %v313, %v312
  %v356 = vpack.c.b16 %v315, %v314
  %v357 = vpack.c.b16 %v317, %v316
  %398 = vmatprep.subr.bf16.mxu0 0
  %399 = vmatpush1.bf16.msra.mxu0 %v325
  %400 = vmatprep.subr.bf16.mxu0 0
  %401 = vmatpush1.bf16.msra.mxu0 %v324
  %402 = vmatprep.subr.bf16.mxu0 0
  %403 = vmatpush1.bf16.msra.mxu0 %v323
  %404 = vmatprep.subr.bf16.mxu0 0
  %405 = vmatpush1.bf16.msra.mxu0 %v322
  %406 = vmatprep.subr.bf16.mxu0 0
  %407 = vmatpush1.bf16.msra.mxu0 %v321
  %408 = vmatprep.subr.bf16.mxu0 0
  %409 = vmatpush1.bf16.msra.mxu0 %v320
  %410 = vmatprep.subr.bf16.mxu0 0
  %411 = vmatpush1.bf16.msra.mxu0 %v319
  %412 = vmatprep.subr.bf16.mxu0 0
  %413 = vmatpush1.bf16.msra.mxu0 %v318
  %414 = vmatprep.subr.bf16.mxu0 0
  %415 = vmatpush2.bf16.msra.mxu0 %v333
  %416 = vmatprep.subr.bf16.mxu0 0
  %417 = vmatpush2.bf16.msra.mxu0 %v332
  %418 = vmatprep.subr.bf16.mxu0 0
  %419 = vmatpush2.bf16.msra.mxu0 %v331
  %420 = vmatprep.subr.bf16.mxu0 0
  %421 = vmatpush2.bf16.msra.mxu0 %v330
  %422 = vmatprep.subr.bf16.mxu0 0
  %423 = vmatpush2.bf16.msra.mxu0 %v329
  %424 = vmatprep.subr.bf16.mxu0 0
  %425 = vmatpush2.bf16.msra.mxu0 %v328
  %426 = vmatprep.subr.bf16.mxu0 0
  %427 = vmatpush2.bf16.msra.mxu0 %v327
  %428 = vmatprep.subr.bf16.mxu0 0
  %429 = vmatpush2.bf16.msra.mxu0 %v326
  %430 = vmatprep.mubr.bf16.mxu0 %v139
  %431 = vmatmul.mubr.bf16.gmra.mxu0 %v138
  %v432 = vpop.f32.mrf.mxu0
  %v433 = vadd.f32 0.0, %v432
  %v434 = vpop.f32.mrf.mxu0
  %v435 = vpop.f32.mrf.mxu0
  %v436 = vadd.f32 0.0, %v435
  %v437 = vpop.f32.mrf.mxu0
  %438 = vmatprep.mubr.bf16.mxu0 %v144
  %439 = vmatmul.mubr.bf16.gmra.mxu0 %v143
  %v440 = vpop.f32.mrf.mxu0
  %v441 = vadd.f32 0.0, %v440
  %v442 = vpop.f32.mrf.mxu0
  %v443 = vpop.f32.mrf.mxu0
  %v444 = vadd.f32 0.0, %v443
  %v445 = vpop.f32.mrf.mxu0
  %446 = vdwg.mxu0
  %447 = vmatprep.subr.bf16.mxu0 0
  %448 = vmatpush1.bf16.msra.mxu0 %v341
  %449 = vmatprep.subr.bf16.mxu0 0
  %450 = vmatpush1.bf16.msra.mxu0 %v340
  %451 = vmatprep.subr.bf16.mxu0 0
  %452 = vmatpush1.bf16.msra.mxu0 %v339
  %453 = vmatprep.subr.bf16.mxu0 0
  %454 = vmatpush1.bf16.msra.mxu0 %v338
  %455 = vmatprep.subr.bf16.mxu0 0
  %456 = vmatpush1.bf16.msra.mxu0 %v337
  %457 = vmatprep.subr.bf16.mxu0 0
  %458 = vmatpush1.bf16.msra.mxu0 %v336
  %459 = vmatprep.subr.bf16.mxu0 0
  %460 = vmatpush1.bf16.msra.mxu0 %v335
  %461 = vmatprep.subr.bf16.mxu0 0
  %462 = vmatpush1.bf16.msra.mxu0 %v334
  %463 = vmatprep.subr.bf16.mxu0 0
  %464 = vmatpush2.bf16.msra.mxu0 %v349
  %465 = vmatprep.subr.bf16.mxu0 0
  %466 = vmatpush2.bf16.msra.mxu0 %v348
  %467 = vmatprep.subr.bf16.mxu0 0
  %468 = vmatpush2.bf16.msra.mxu0 %v347
  %469 = vmatprep.subr.bf16.mxu0 0
  %470 = vmatpush2.bf16.msra.mxu0 %v346
  %471 = vmatprep.subr.bf16.mxu0 0
  %472 = vmatpush2.bf16.msra.mxu0 %v345
  %473 = vmatprep.subr.bf16.mxu0 0
  %474 = vmatpush2.bf16.msra.mxu0 %v344
  %475 = vmatprep.subr.bf16.mxu0 0
  %476 = vmatpush2.bf16.msra.mxu0 %v343
  %477 = vmatprep.subr.bf16.mxu0 0
  %478 = vmatpush2.bf16.msra.mxu0 %v342
  %479 = vmatprep.mubr.bf16.mxu0 %v141
  %480 = vmatmul.mubr.bf16.gmra.mxu0 %v140
  %v481 = vpop.f32.mrf.mxu0
  %v482 = vadd.f32 %v433, %v481
  %v483 = vpop.f32.mrf.mxu0
  %v484 = vpop.f32.mrf.mxu0
  %v485 = vadd.f32 %v436, %v484
  %v486 = vpop.f32.mrf.mxu0
  %487 = vmatprep.mubr.bf16.mxu0 %v146
  %488 = vmatmul.mubr.bf16.gmra.mxu0 %v145
  %v489 = vpop.f32.mrf.mxu0
  %v490 = vadd.f32 %v441, %v489
  %v491 = vpop.f32.mrf.mxu0
  %v492 = vpop.f32.mrf.mxu0
  %v493 = vadd.f32 %v444, %v492
  %v494 = vpop.f32.mrf.mxu0
  %495 = vdwg.mxu0
  %496 = vmatprep.subr.bf16.mxu0 0
  %497 = vmatpush1.bf16.msra.mxu0 %v357
  %498 = vmatprep.subr.bf16.mxu0 0
  %499 = vmatpush1.bf16.msra.mxu0 %v356
  %500 = vmatprep.subr.bf16.mxu0 0
  %501 = vmatpush1.bf16.msra.mxu0 %v355
  %502 = vmatprep.subr.bf16.mxu0 0
  %503 = vmatpush1.bf16.msra.mxu0 %v354
  %504 = vmatprep.subr.bf16.mxu0 0
  %505 = vmatpush1.bf16.msra.mxu0 %v353
  %506 = vmatprep.subr.bf16.mxu0 0
  %507 = vmatpush1.bf16.msra.mxu0 %v352
  %508 = vmatprep.subr.bf16.mxu0 0
  %509 = vmatpush1.bf16.msra.mxu0 %v351
  %510 = vmatprep.subr.bf16.mxu0 0
  %511 = vmatpush1.bf16.msra.mxu0 %v350
  %512 = vmatprep.subr.bf16.mxu0 0
  %513 = vmatpush2.bf16.msra.mxu0 0
  %514 = vmatprep.subr.bf16.mxu0 0
  %515 = vmatpush2.bf16.msra.mxu0 0
  %516 = vmatprep.subr.bf16.mxu0 0
  %517 = vmatpush2.bf16.msra.mxu0 0
  %518 = vmatprep.subr.bf16.mxu0 0
  %519 = vmatpush2.bf16.msra.mxu0 0
  %520 = vmatprep.subr.bf16.mxu0 0
  %521 = vmatpush2.bf16.msra.mxu0 0
  %522 = vmatprep.subr.bf16.mxu0 0
  %523 = vmatpush2.bf16.msra.mxu0 0
  %524 = vmatprep.subr.bf16.mxu0 0
  %525 = vmatpush2.bf16.msra.mxu0 0
  %526 = vmatprep.subr.bf16.mxu0 0
  %527 = vmatpush2.bf16.msra.mxu0 0
  %528 = vmatprep.mubr.bf16.mxu0 0
  %529 = vmatmul.mubr.bf16.gmra.mxu0 %v142
  %v530 = vpop.f32.mrf.mxu0
  %v531 = vadd.f32 %v482, %v530
  %v532 = vpop.f32.mrf.mxu0
  %v533 = vpop.f32.mrf.mxu0
  %v534 = vadd.f32 %v485, %v533
  %v535 = vpop.f32.mrf.mxu0
  %536 = vmatprep.mubr.bf16.mxu0 0
  %537 = vmatmul.mubr.bf16.gmra.mxu0 %v147
  %v538 = vpop.f32.mrf.mxu0
  %v539 = vadd.f32 %v490, %v538
  %v540 = vpop.f32.mrf.mxu0
  %v541 = vpop.f32.mrf.mxu0
  %v542 = vadd.f32 %v493, %v541
  %v543 = vpop.f32.mrf.mxu0
  %544 = vdwg.mxu0
  %vm545 = vcmask 523264
  %546 = vst.msk [vmem:[%s2] sm:$0xff] %vm545, %v531
  %547 = vst.msk [vmem:[%s2 + $0x8] sm:$0xff] %vm545, %v534
  %548 = vst.msk [vmem:[%s2 + $0x10] sm:$0xff] %vm545, %v539
  %549 = vst.msk [vmem:[%s2 + $0x18] sm:$0xff] %vm545, %v542
  %v550 = vsel %vm545, %v531, 0.0
  %v551 = vsel %vm545, %v534, 0.0
  %v552 = vadd.f32 %v550, %v551
  %v553 = vsel %vm545, %v539, 0.0
  %v554 = vadd.f32 %v552, %v553
  %v555 = vsel %vm545, %v542, 0.0
  %v556 = vadd.f32 %v554, %v555
  %v557 = vrot.slane %v556, 4
  %v558 = vadd.f32 %v556, %v557
  %v559 = vrot.slane %v558, 2
  %v560 = vadd.f32 %v558, %v559
  %v561 = vrot.slane %v560, 1
  %v562 = vadd.f32 %v560, %v561
  %vm563 = vcmask 516096
  %564 = vst.msk [vmem:[%s3] sm:$0x1] %vm563, %v562
  %v565 = vmul.f32 %v531, %v531
  %v566 = vmul.f32 %v534, %v534
  %v567 = vmul.f32 %v539, %v539
  %v568 = vmul.f32 %v542, %v542
  %v569 = vsel %vm545, %v565, 0.0
  %v570 = vsel %vm545, %v566, 0.0
  %v571 = vadd.f32 %v569, %v570
  %v572 = vsel %vm545, %v567, 0.0
  %v573 = vadd.f32 %v571, %v572
  %v574 = vsel %vm545, %v568, 0.0
  %v575 = vadd.f32 %v573, %v574
  %v576 = vrot.slane %v575, 4
  %v577 = vadd.f32 %v575, %v576
  %v578 = vrot.slane %v577, 2
  %v579 = vadd.f32 %v577, %v578
  %v580 = vrot.slane %v579, 1
  %v581 = vadd.f32 %v579, %v580
  %582 = vst.msk [vmem:[%s3 + $0x1] sm:$0x1] %vm563, %v581
  // Predicated region
  $region10: #{spatial_path.12} parent=0 // pred_check
    _
  $region11: #{spatial_path.12} parent=0 // pred_check_branch
    %584 = sbr.rel (0) target = $region13
  $region12: #{spatial_path.12} parent=0 // pred_region
    _
  $region13: #{spatial_path.12} parent=0 // pred_fallthru
    _
  // Predicated region
  $region14: #{spatial_path.12} parent=0 // pred_check
    _
  $region15: #{spatial_path.12} parent=0 // pred_check_branch
    %586 = sbr.rel (0) target = $region17
  $region16: #{spatial_path.12} parent=0 // pred_region
    _
  $region17: #{spatial_path.12} parent=0 // pred_fallthru
    _
  // Predicated region
  $region18: #{spatial_path.12} parent=0 // pred_check
    _
  $region19: #{spatial_path.12} parent=0 // pred_check_branch
    %588 = sbr.rel (0) target = $region21
  $region20: #{spatial_path.12} parent=0 // pred_region
    _
  $region21: #{spatial_path.12} parent=0 // pred_fallthru
    _
  // Predicated region
  $region22: #{spatial_path.12} parent=0 // pred_check
    _
  $region23: #{spatial_path.12} parent=0 // pred_check_branch
    %590 = sbr.rel (0) target = $region25
  $region24: #{spatial_path.12} parent=0 // pred_region
    _
  $region25: #{spatial_path.12} parent=0 // pred_fallthru
    _

// kernel: spatial_path.15
$region0: #{spatial_path.15}
  #allocation0 [shape = 'u32[]', space=smem, size = 0x4, offset = 0x4, fixed_abs, tag = 'smem constant byte address 0x4 - core index']
  #allocation1 [shape = 'u32[144,128]{1,0:T(1,128)}', space=vmem, size = 0x12000, scoped, tag = 'internal scratch']
  %s0 = inlined_call_operand.vmem [shape: f32[32,128], index: 0, kind: input, shape index: {}]
  %s1 = inlined_call_operand.vmem [shape: f32[1,128], index: 1, kind: input, shape index: {}]
  %s2 = inlined_call_operand.vmem [shape: f32[1,128], index: 2, kind: input, shape index: {}]
  %s3 = inlined_call_operand.hbm [shape: f32[32,128], index: 3, kind: output, shape index: {}]
  %s4 = sld [smem:[#allocation0]]
  $region22: #{spatial_path.15} parent=0
    _
  %s6 = ssub.s32 1, %s4
  %s7 = scalar_select 0, %s6, %s4
  $region1: #{spatial_path.15} parent=0
    #allocation2 [shape = 'u8[16384]{0}', space=vmem, size = 0x4000, scoped, tag = 'output window, operand 0, single buffered']
    #allocation3 [shape = 's32[1]{0}', space=sflag, size = 0x4, scoped, tag = 'scoped memory for spatial_path.15']
    %8 = vsyncpa [#allocation3], 0
    // Predicated region
    $region2: #{spatial_path.15} parent=1 // pred_check
      _
    $region3: #{spatial_path.15} parent=1 // pred_check_branch
      %10 = sbr.rel (0) target = $region5
    $region4: #{spatial_path.15} parent=1 // pred_region
      _
    $region5: #{spatial_path.15} parent=1 // pred_fallthru
      _
    // Predicated region
    $region6: #{spatial_path.15} parent=1 // pred_check
      _
    $region7: #{spatial_path.15} parent=1 // pred_check_branch
      %12 = sbr.rel (0) target = $region9
    $region8: #{spatial_path.15} parent=1 // pred_region
      _
    $region9: #{spatial_path.15} parent=1 // pred_fallthru
      _
    // Predicated region
    $region10: #{spatial_path.15} parent=1 // pred_check
      _
    $region11: #{spatial_path.15} parent=1 // pred_check_branch
      %14 = sbr.rel (0) target = $region13
    $region12: #{spatial_path.15} parent=1 // pred_region
      _
    $region13: #{spatial_path.15} parent=1 // pred_fallthru
      _
    %v15 = vld [vmem:[%s0] sm:$0xff]
    %v16 = vld [vmem:[%s0 + $0x8] sm:$0xff]
    %v17 = vld [vmem:[%s0 + $0x10] sm:$0xff]
    %v18 = vld [vmem:[%s0 + $0x18] sm:$0xff]
    %v19 = vld [vmem:[%s1] sm:$0x1]
    %v21 = vlaneseq
    %v22 = vshrl.u32 %v21, 7
    %v23 = vsub.s32 0, %v22
    %v24 = vrot.slane %v19, %v23
    %v26 = vmul.f32 %v15, %v24
    %v27 = vmul.f32 %v16, %v24
    %v28 = vmul.f32 %v17, %v24
    %v29 = vmul.f32 %v18, %v24
    %v30 = vld [vmem:[%s2] sm:$0x1]
    %v32 = vlaneseq
    %v33 = vshrl.u32 %v32, 7
    %v34 = vsub.s32 0, %v33
    %v35 = vrot.slane %v30, %v34
    %v37 = vadd.f32 %v26, %v35
    %v38 = vadd.f32 %v27, %v35
    %v39 = vadd.f32 %v28, %v35
    %v40 = vadd.f32 %v29, %v35
    %v41 = vmax.f32 %v37, 0.0
    %v42 = vmax.f32 %v38, 0.0
    %v43 = vmax.f32 %v39, 0.0
    %v44 = vmax.f32 %v40, 0.0
    %45 = vst [vmem:[#allocation2] sm:$0xff] %v41
    %46 = vst [vmem:[#allocation2 + $0x8] sm:$0xff] %v42
    %47 = vst [vmem:[#allocation2 + $0x10] sm:$0xff] %v43
    %48 = vst [vmem:[#allocation2 + $0x18] sm:$0xff] %v44
    // Predicated region
    $region14: #{spatial_path.15} parent=1 // pred_check
      _
    $region15: #{spatial_path.15} parent=1 // pred_check_branch
      %50 = sbr.rel (0) target = $region17
    $region16: #{spatial_path.15} parent=1 // pred_region
      %s52 = ssub.s32 512, 512
      %53 = vsyncadd [#allocation3], %s52
      %s54 = sshll.u32 [#allocation2], 4
      %s55 = int_to_ptr.vmem [resolvable:$true] %s54
      %60 = dma.vmem_to_hbm [thread:$0]  %s55, 512, %s3, [#allocation3], 128, 128, 8
    $region17: #{spatial_path.15} parent=1 // pred_fallthru
      _
    // Predicated region
    $region18: #{spatial_path.15} parent=1 // pred_check
      _
    $region19: #{spatial_path.15} parent=1 // pred_check_branch
      %62 = sbr.rel (0) target = $region21
    $region20: #{spatial_path.15} parent=1 // pred_region
      %63 = dma.done [#allocation3], 512
    $region21: #{spatial_path.15} parent=1 // pred_fallthru
      _
    %64 = vsyncpa [#allocation3], 1

// kernel: spatial_path.14
$region0: #{spatial_path.14}
  #allocation0 [shape = 'u32[]', space=smem, size = 0x4, offset = 0x4, fixed_abs, tag = 'smem constant byte address 0x4 - core index']
  #allocation1 [shape = 'u32[144,128]{1,0:T(1,128)}', space=vmem, size = 0x12000, scoped, tag = 'internal scratch']
  %s0 = inlined_call_operand.vmem [shape: bf16[32,128], index: 0, kind: input, shape index: {}]
  %s1 = inlined_call_operand.vmem [shape: bf16[128,128], index: 1, kind: input, shape index: {}]
  %s2 = inlined_call_operand.vmem [shape: f32[32,128], index: 2, kind: output, shape index: {0}]
  %s3 = inlined_call_operand.vmem [shape: f32[1,2,128], index: 3, kind: output, shape index: {1}]
  %4 = xla_tuple %s2, %s3
  %s5 = sld [smem:[#allocation0]]
  $region26: #{spatial_path.14} parent=0
    _
  %s7 = ssub.s32 1, %s5
  %s8 = scalar_select 0, %s7, %s5
  // Predicated region
  $region2: #{spatial_path.14} parent=0 // pred_check
    _
  $region3: #{spatial_path.14} parent=0 // pred_check_branch
    %10 = sbr.rel (0) target = $region5
  $region4: #{spatial_path.14} parent=0 // pred_region
    _
  $region5: #{spatial_path.14} parent=0 // pred_fallthru
    _
  // Predicated region
  $region6: #{spatial_path.14} parent=0 // pred_check
    _
  $region7: #{spatial_path.14} parent=0 // pred_check_branch
    %12 = sbr.rel (0) target = $region9
  $region8: #{spatial_path.14} parent=0 // pred_region
    _
  $region9: #{spatial_path.14} parent=0 // pred_fallthru
    _
  %v14 = vld [vmem:[%s0] sm:$0xf]
  %v15 = vld [vmem:[%s0 + $0x4] sm:$0xf]
  %v16 = vld [vmem:[%s0 + $0x8] sm:$0xf]
  %v17 = vld [vmem:[%s0 + $0xc] sm:$0xf]
  %v18 = vld [vmem:[%s1] sm:$0xf]
  %v19 = vld [vmem:[%s1 + $0x4] sm:$0xf]
  %v20 = vld [vmem:[%s1 + $0x8] sm:$0xf]
  %v21 = vld [vmem:[%s1 + $0xc] sm:$0xf]
  %v22 = vld [vmem:[%s1 + $0x10] sm:$0xf]
  %v23 = vld [vmem:[%s1 + $0x14] sm:$0xf]
  %v24 = vld [vmem:[%s1 + $0x18] sm:$0xf]
  %v25 = vld [vmem:[%s1 + $0x1c] sm:$0xf]
  %v26 = vld [vmem:[%s1 + $0x20] sm:$0xf]
  %v27 = vld [vmem:[%s1 + $0x24] sm:$0xf]
  %v28 = vld [vmem:[%s1 + $0x28] sm:$0xf]
  %v29 = vld [vmem:[%s1 + $0x2c] sm:$0xf]
  %v30 = vld [vmem:[%s1 + $0x30] sm:$0xf]
  %v31 = vld [vmem:[%s1 + $0x34] sm:$0xf]
  %v32 = vld [vmem:[%s1 + $0x38] sm:$0xf]
  %v33 = vld [vmem:[%s1 + $0x3c] sm:$0xf]
  %v38 = vunpack.c.l.b16 %v14
  %v39 = vunpack.c.l.b16 %v15
  %v40 = vunpack.c.l.b16 %v16
  %v41 = vunpack.c.l.b16 %v17
  %v42 = vpack.c.b16 %v39, %v38
  %v43 = vpack.c.b16 %v41, %v40
  %v62 = vunpack.c.l.b16 %v18
  %v63 = vunpack.c.l.b16 %v19
  %v64 = vunpack.c.l.b16 %v20
  %v65 = vunpack.c.l.b16 %v21
  %v66 = vunpack.c.l.b16 %v22
  %v67 = vunpack.c.l.b16 %v23
  %v68 = vunpack.c.l.b16 %v24
  %v69 = vunpack.c.l.b16 %v25
  %v70 = vunpack.c.l.b16 %v26
  %v71 = vunpack.c.l.b16 %v27
  %v72 = vunpack.c.l.b16 %v28
  %v73 = vunpack.c.l.b16 %v29
  %v74 = vunpack.c.l.b16 %v30
  %v75 = vunpack.c.l.b16 %v31
  %v76 = vunpack.c.l.b16 %v32
  %v77 = vunpack.c.l.b16 %v33
  %v78 = vpack.c.b16 %v63, %v62
  %v79 = vpack.c.b16 %v65, %v64
  %v80 = vpack.c.b16 %v67, %v66
  %v81 = vpack.c.b16 %v69, %v68
  %v82 = vpack.c.b16 %v71, %v70
  %v83 = vpack.c.b16 %v73, %v72
  %v84 = vpack.c.b16 %v75, %v74
  %v85 = vpack.c.b16 %v77, %v76
  %94 = vmatprep.subr.bf16.mxu0 0
  %95 = vmatpush1.bf16.msra.mxu0 %v85
  %96 = vmatprep.subr.bf16.mxu0 0
  %97 = vmatpush1.bf16.msra.mxu0 %v84
  %98 = vmatprep.subr.bf16.mxu0 0
  %99 = vmatpush1.bf16.msra.mxu0 %v83
  %100 = vmatprep.subr.bf16.mxu0 0
  %101 = vmatpush1.bf16.msra.mxu0 %v82
  %102 = vmatprep.subr.bf16.mxu0 0
  %103 = vmatpush1.bf16.msra.mxu0 %v81
  %104 = vmatprep.subr.bf16.mxu0 0
  %105 = vmatpush1.bf16.msra.mxu0 %v80
  %106 = vmatprep.subr.bf16.mxu0 0
  %107 = vmatpush1.bf16.msra.mxu0 %v79
  %108 = vmatprep.subr.bf16.mxu0 0
  %109 = vmatpush1.bf16.msra.mxu0 %v78
  %110 = vmatprep.subr.bf16.mxu0 0
  %111 = vmatpush2.bf16.msra.mxu0 0
  %112 = vmatprep.subr.bf16.mxu0 0
  %113 = vmatpush2.bf16.msra.mxu0 0
  %114 = vmatprep.subr.bf16.mxu0 0
  %115 = vmatpush2.bf16.msra.mxu0 0
  %116 = vmatprep.subr.bf16.mxu0 0
  %117 = vmatpush2.bf16.msra.mxu0 0
  %118 = vmatprep.subr.bf16.mxu0 0
  %119 = vmatpush2.bf16.msra.mxu0 0
  %120 = vmatprep.subr.bf16.mxu0 0
  %121 = vmatpush2.bf16.msra.mxu0 0
  %122 = vmatprep.subr.bf16.mxu0 0
  %123 = vmatpush2.bf16.msra.mxu0 0
  %124 = vmatprep.subr.bf16.mxu0 0
  %125 = vmatpush2.bf16.msra.mxu0 0
  %126 = vmatprep.mubr.bf16.mxu0 0
  %127 = vmatmul.mubr.bf16.gmra.mxu0 %v42
  %v128 = vpop.f32.mrf.mxu0
  %v129 = vadd.f32 0.0, %v128
  %v130 = vpop.f32.mrf.mxu0
  %v131 = vpop.f32.mrf.mxu0
  %v132 = vadd.f32 0.0, %v131
  %v133 = vpop.f32.mrf.mxu0
  %134 = vmatprep.mubr.bf16.mxu0 0
  %135 = vmatmul.mubr.bf16.gmra.mxu0 %v43
  %v136 = vpop.f32.mrf.mxu0
  %v137 = vadd.f32 0.0, %v136
  %v138 = vpop.f32.mrf.mxu0
  %v139 = vpop.f32.mrf.mxu0
  %v140 = vadd.f32 0.0, %v139
  %v141 = vpop.f32.mrf.mxu0
  %142 = vdwg.mxu0
  %143 = vst [vmem:[%s2] sm:$0xff] %v129
  %144 = vst [vmem:[%s2 + $0x8] sm:$0xff] %v132
  %145 = vst [vmem:[%s2 + $0x10] sm:$0xff] %v137
  %146 = vst [vmem:[%s2 + $0x18] sm:$0xff] %v140
  %v147 = vadd.f32 %v129, %v132
  %v148 = vadd.f32 %v147, %v137
  %v149 = vadd.f32 %v148, %v140
  %v150 = vrot.slane %v149, 4
  %v151 = vadd.f32 %v149, %v150
  %v152 = vrot.slane %v151, 2
  %v153 = vadd.f32 %v151, %v152
  %v154 = vrot.slane %v153, 1
  %v155 = vadd.f32 %v153, %v154
  %156 = vst [vmem:[%s3] sm:$0x1] %v155
  %v157 = vmul.f32 %v129, %v129
  %v158 = vmul.f32 %v132, %v132
  %v159 = vmul.f32 %v137, %v137
  %v160 = vmul.f32 %v140, %v140
  %v161 = vadd.f32 %v157, %v158
  %v162 = vadd.f32 %v161, %v159
  %v163 = vadd.f32 %v162, %v160
  %v164 = vrot.slane %v163, 4
  %v165 = vadd.f32 %v163, %v164
  %v166 = vrot.slane %v165, 2
  %v167 = vadd.f32 %v165, %v166
  %v168 = vrot.slane %v167, 1
  %v169 = vadd.f32 %v167, %v168
  %170 = vst [vmem:[%s3 + $0x1] sm:$0x1] %v169
  // Predicated region
  $region10: #{spatial_path.14} parent=0 // pred_check
    _
  $region11: #{spatial_path.14} parent=0 // pred_check_branch
    %172 = sbr.rel (0) target = $region13
  $region12: #{spatial_path.14} parent=0 // pred_region
    _
  $region13: #{spatial_path.14} parent=0 // pred_fallthru
    _
  // Predicated region
  $region14: #{spatial_path.14} parent=0 // pred_check
    _
  $region15: #{spatial_path.14} parent=0 // pred_check_branch
    %174 = sbr.rel (0) target = $region17
  $region16: #{spatial_path.14} parent=0 // pred_region
    _
  $region17: #{spatial_path.14} parent=0 // pred_fallthru
    _
  // Predicated region
  $region18: #{spatial_path.14} parent=0 // pred_check
    _
  $region19: #{spatial_path.14} parent=0 // pred_check_branch
    %176 = sbr.rel (0) target = $region21
  $region20: #{spatial_path.14} parent=0 // pred_region
    _
  $region21: #{spatial_path.14} parent=0 // pred_fallthru
    _
  // Predicated region
  $region22: #{spatial_path.14} parent=0 // pred_check
    _
  $region23: #{spatial_path.14} parent=0 // pred_check_branch
    %178 = sbr.rel (0) target = $region25
  $region24: #{spatial_path.14} parent=0 // pred_region
    _
  $region25: #{spatial_path.14} parent=0 // pred_fallthru
    _

</llo_original>
